<compile_context>
chip_gen: v7x
topology: tpu7x:2x2x1
jax: 0.10.0
libtpu: 0.0.40
codegen_flags: <defaults>
</compile_context>

<pallas_src>
import functools
import math

import jax
import jax.numpy as jnp
from jax import lax
from jax.experimental import pallas as pl
from jax.experimental.pallas import tpu as pltpu

EPS = 0.1  # map_pixels / unmap_pixels epsilon


# ---------------- fused Pallas kernel ----------------

def _vae_fused_kernel(x_ref, we_ref, be_ref, w1_ref, w2_ref, out_ref):
    """Per row-tile: patchify-conv matmul (map_pixels folded into we/be) ->
    first-index argmax -> one-hot bf16 MXU matmul (embedding) -> ReLU ->
    up-conv matmul -> sigmoid -> unmap_pixels."""
    # Encoder logits over the codebook (bf16 MXU, f32 accumulation + f32 bias).
    logits = jnp.dot(x_ref[...], we_ref[...],
                     preferred_element_type=jnp.float32) + be_ref[...]      # (tm, V)
    v = logits.shape[-1]
    # First-index argmax (matches torch.argmax tie-breaking).  The iota is
    # reused below for the one-hot, so it is not an extra temporary.
    iota = lax.broadcasted_iota(jnp.int32, logits.shape, 1)
    m = jnp.max(logits, axis=-1, keepdims=True)
    idx = jnp.min(jnp.where(logits == m, iota, v), axis=-1, keepdims=True)  # (tm, 1)
    one_hot = (iota == idx).astype(jnp.bfloat16)                            # (tm, V)
    # Decoder: one_hot @ W1 == embedding-row lookup, done on the MXU.
    h = jnp.dot(one_hot, w1_ref[...], preferred_element_type=jnp.float32)   # (tm, d)
    h = jnp.maximum(h, 0.0).astype(jnp.bfloat16)                            # ReLU
    x_stats = jnp.dot(h, w2_ref[...], preferred_element_type=jnp.float32)   # (tm, 3*f*f)
    x = jax.nn.sigmoid(x_stats)
    # unmap_pixels; only the 3 kept channels are ever computed/stored.
    # (last dim 192 >= 128: the masked-store tail is small -> left as is)
    out_ref[...] = jnp.clip((x - EPS) / (1.0 - 2.0 * EPS), 0.0, 1.0)


# ---------------- wrapper (glue) ----------------

def openai_discrete_vae_forward(img, w_enc, w_dec1, w_dec2, *, f, tm=256):
    """img: (b, 3, H, W) f32 -> reconstructed (b, 3, H, W) f32 in [0, 1]."""
    b, c, H, W = img.shape
    h, w = H // f, W // f
    # Patchify in bf16 (the transpose then moves half the bytes).
    patches = (img.astype(jnp.bfloat16)
                  .reshape(b, c, h, f, w, f)
                  .transpose(0, 2, 4, 1, 3, 5)
                  .reshape(b * h * w, c * f * f))
    N, K = patches.shape
    V = w_enc.shape[1]
    d = w_dec1.shape[1]
    P3 = 3 * f * f                                   # only channels 0..2 kept

    # Fold map_pixels into the encoder: ((1-2e)x + e) @ W == x @ ((1-2e)W) + e*colsum(W).
    we = ((1.0 - 2.0 * EPS) * w_enc).astype(jnp.bfloat16)                   # (K, V)
    be = (EPS * jnp.sum(w_enc, axis=0, keepdims=True)).astype(jnp.float32)  # (1, V)
    w1 = w_dec1.astype(jnp.bfloat16)                                        # (V, d)
    w2 = w_dec2[:, :P3].astype(jnp.bfloat16)                                # (d, 3*f*f)

    n_tiles = pl.cdiv(N, tm)
    N_pad = n_tiles * tm
    if N_pad != N:
        patches = jnp.pad(patches, ((0, N_pad - N), (0, 0)))

    # Grid-invariant operands: single-buffer (constant index map -> DMA'd once).
    def weight_spec(shape):
        return pl.BlockSpec(shape, lambda i: (0, 0), pipeline_mode=pl.Buffered(1))

    out = pl.pallas_call(
        _vae_fused_kernel,
        out_shape=jax.ShapeDtypeStruct((N_pad, P3), jnp.float32),
        grid=(n_tiles,),
        in_specs=[pl.BlockSpec((tm, K), lambda i: (i, 0)),
                  weight_spec((K, V)),
                  weight_spec((1, V)),
                  weight_spec((V, d)),
                  weight_spec((d, P3))],
        out_specs=pl.BlockSpec((tm, P3), lambda i: (i, 0)),
        compiler_params=pltpu.CompilerParams(
            dimension_semantics=("parallel",),
            vmem_limit_bytes=32 * 1024 * 1024),
    )(patches, we, be, w1, w2)

    # Un-patchify back to NCHW.
    x = (out[:N].reshape(b, h, w, 3, f, f)
               .transpose(0, 3, 1, 4, 2, 5)
               .reshape(b, 3, h * f, w * f))
    return x


# ---------------- main ----------------

if __name__ == "__main__":
    # small, self-consistent sizes (real module: image_size=256, num_tokens=8192)
    B, C_IN, IMG = 2, 3, 128
    F_DOWN = 8                    # down/up-sampling factor
    NUM_TOKENS = 512              # codebook size (scaled down from 8192)
    D_DEC = 128                   # decoder hidden width
    C_OUT = 6                     # decoder output channels (only first 3 used)

    key = jax.random.PRNGKey(0)
    k_img, k_we, k_w1, k_w2 = jax.random.split(key, 4)

    img = jax.random.uniform(k_img, (B, C_IN, IMG, IMG), dtype=jnp.float32)

    K = C_IN * F_DOWN * F_DOWN                    # 192
    P = C_OUT * F_DOWN * F_DOWN                   # 384
    w_enc = jax.random.normal(k_we, (K, NUM_TOKENS), jnp.float32) / math.sqrt(K)
    w_dec1 = jax.random.normal(k_w1, (NUM_TOKENS, D_DEC), jnp.float32) / math.sqrt(NUM_TOKENS)
    w_dec2 = jax.random.normal(k_w2, (D_DEC, P), jnp.float32) / math.sqrt(D_DEC)

    # `f` is a static hyper-parameter -> bake it in.
    fwd = jax.jit(functools.partial(openai_discrete_vae_forward, f=F_DOWN))

    x_rec = jax.block_until_ready(fwd(img, w_enc, w_dec1, w_dec2))

    assert x_rec.shape == (B, 3, IMG, IMG), x_rec.shape
    assert x_rec.dtype == jnp.float32
    assert bool(jnp.all(x_rec >= 0.0)) and bool(jnp.all(x_rec <= 1.0))
    print("KERNEL_OK")
</pallas_src>

<mosaic_0001>
module attributes {stable_mosaic.version = 11 : i64} {
  func.func @_vae_fused_kernel(%arg0: i32, %arg1: memref<256x192xbf16, #tpu.memory_space<vmem>>, %arg2: memref<192x512xbf16, #tpu.memory_space<vmem>>, %arg3: memref<1x512xf32, #tpu.memory_space<vmem>>, %arg4: memref<512x128xbf16, #tpu.memory_space<vmem>>, %arg5: memref<128x192xbf16, #tpu.memory_space<vmem>>, %arg6: memref<256x192xf32, #tpu.memory_space<vmem>>) attributes {dimension_semantics = [#tpu.dimension_semantics<parallel>], iteration_bounds = array<i64: 2>, scalar_prefetch = 0 : i64, scratch_operands = 0 : i64, tpu.core_type = #tpu.core_type<tc>, window_params = [{transform_indices = @transform_0, window_bounds = array<i64: 256, 192>}, {pipeline_mode = #tpu.pipeline_mode<synchronous>, transform_indices = @transform_1, window_bounds = array<i64: 192, 512>}, {pipeline_mode = #tpu.pipeline_mode<synchronous>, transform_indices = @transform_2, window_bounds = array<i64: 1, 512>}, {pipeline_mode = #tpu.pipeline_mode<synchronous>, transform_indices = @transform_3, window_bounds = array<i64: 512, 128>}, {pipeline_mode = #tpu.pipeline_mode<synchronous>, transform_indices = @transform_4, window_bounds = array<i64: 128, 192>}, {transform_indices = @transform_5, window_bounds = array<i64: 256, 192>}]} {
    %c0 = arith.constant 0 : index
    %c0_0 = arith.constant 0 : index
    %0 = vector.load %arg1[%c0, %c0_0] : memref<256x192xbf16, #tpu.memory_space<vmem>>, vector<256x192xbf16>
    %c0_1 = arith.constant 0 : index
    %c0_2 = arith.constant 0 : index
    %1 = vector.load %arg2[%c0_1, %c0_2] : memref<192x512xbf16, #tpu.memory_space<vmem>>, vector<192x512xbf16>
    %cst = arith.constant dense<0.000000e+00> : vector<256x512xf32>
    %2 = tpu.matmul %0, %1, %cst {dimension_numbers = #tpu.dot_dimension_numbers<[1], [0], [0], [1], [0, 0, 1, 1], [], []>} : vector<256x192xbf16>, vector<192x512xbf16>, vector<256x512xf32> -> vector<256x512xf32>
    %c0_3 = arith.constant 0 : index
    %c0_4 = arith.constant 0 : index
    %3 = vector.load %arg3[%c0_3, %c0_4] : memref<1x512xf32, #tpu.memory_space<vmem>>, vector<1x512xf32>
    %4 = vector.broadcast %3 : vector<1x512xf32> to vector<256x512xf32>
    %5 = arith.addf %2, %4 : vector<256x512xf32>
    %6 = tpu.iota {dimensions = array<i32: 1>} : vector<256x512xi32>
    %cst_5 = arith.constant dense<0xFF800000> : vector<256xf32>
    %7 = vector.multi_reduction <maximumf>, %5, %cst_5 [1] : vector<256x512xf32> to vector<256xf32>
    %8 = vector.shape_cast %7 : vector<256xf32> to vector<256x1xf32>
    %9 = vector.broadcast %8 : vector<256x1xf32> to vector<256x512xf32>
    %10 = arith.cmpf oeq, %5, %9 : vector<256x512xf32>
    %c512_i32 = arith.constant 512 : i32
    %11 = vector.broadcast %c512_i32 : i32 to vector<256x512xi32>
    %12 = arith.select %10, %6, %11 : vector<256x512xi1>, vector<256x512xi32>
    %cst_6 = arith.constant dense<2147483647> : vector<256xi32>
    %13 = vector.multi_reduction <minsi>, %12, %cst_6 [1] : vector<256x512xi32> to vector<256xi32>
    %14 = vector.shape_cast %13 : vector<256xi32> to vector<256x1xi32>
    %15 = vector.broadcast %14 : vector<256x1xi32> to vector<256x512xi32>
    %16 = arith.cmpi eq, %6, %15 : vector<256x512xi32>
    %17 = arith.extui %16 : vector<256x512xi1> to vector<256x512xi32>
    %18 = arith.sitofp %17 : vector<256x512xi32> to vector<256x512xf32>
    %19 = arith.truncf %18 : vector<256x512xf32> to vector<256x512xbf16>
    %c0_7 = arith.constant 0 : index
    %c0_8 = arith.constant 0 : index
    %20 = vector.load %arg4[%c0_7, %c0_8] : memref<512x128xbf16, #tpu.memory_space<vmem>>, vector<512x128xbf16>
    %cst_9 = arith.constant dense<0.000000e+00> : vector<256x128xf32>
    %21 = tpu.matmul %19, %20, %cst_9 {dimension_numbers = #tpu.dot_dimension_numbers<[1], [0], [0], [1], [0, 0, 1, 1], [], []>} : vector<256x512xbf16>, vector<512x128xbf16>, vector<256x128xf32> -> vector<256x128xf32>
    %cst_10 = arith.constant 0.000000e+00 : f32
    %22 = vector.broadcast %cst_10 : f32 to vector<256x128xf32>
    %23 = arith.maximumf %21, %22 : vector<256x128xf32>
    %24 = arith.truncf %23 : vector<256x128xf32> to vector<256x128xbf16>
    %c0_11 = arith.constant 0 : index
    %c0_12 = arith.constant 0 : index
    %25 = vector.load %arg5[%c0_11, %c0_12] : memref<128x192xbf16, #tpu.memory_space<vmem>>, vector<128x192xbf16>
    %cst_13 = arith.constant dense<0.000000e+00> : vector<256x192xf32>
    %26 = tpu.matmul %24, %25, %cst_13 {dimension_numbers = #tpu.dot_dimension_numbers<[1], [0], [0], [1], [0, 0, 1, 1], [], []>} : vector<256x128xbf16>, vector<128x192xbf16>, vector<256x192xf32> -> vector<256x192xf32>
    %27 = arith.negf %26 : vector<256x192xf32>
    %28 = math.exp %27 : vector<256x192xf32>
    %cst_14 = arith.constant 1.000000e+00 : f32
    %29 = vector.broadcast %cst_14 : f32 to vector<256x192xf32>
    %30 = arith.addf %29, %28 : vector<256x192xf32>
    %31 = arith.divf %29, %30 : vector<256x192xf32>
    %cst_15 = arith.constant 1.000000e-01 : f32
    %32 = vector.broadcast %cst_15 : f32 to vector<256x192xf32>
    %33 = arith.subf %31, %32 : vector<256x192xf32>
    %cst_16 = arith.constant 8.000000e-01 : f32
    %34 = vector.broadcast %cst_16 : f32 to vector<256x192xf32>
    %35 = arith.divf %33, %34 : vector<256x192xf32>
    %cst_17 = arith.constant 0.000000e+00 : f32
    %cst_18 = arith.constant 1.000000e+00 : f32
    %36 = vector.broadcast %cst_17 : f32 to vector<256x192xf32>
    %37 = arith.maximumf %36, %35 : vector<256x192xf32>
    %38 = vector.broadcast %cst_18 : f32 to vector<256x192xf32>
    %39 = arith.minimumf %38, %37 : vector<256x192xf32>
    %c0_19 = arith.constant 0 : index
    %c0_20 = arith.constant 0 : index
    %40 = vector.load %arg6[%c0_19, %c0_20] : memref<256x192xf32, #tpu.memory_space<vmem>>, vector<256x192xf32>
    tpu.vector_store %arg6[%c0_19, %c0_20], %39 {strides = array<i32>} : memref<256x192xf32, #tpu.memory_space<vmem>>, vector<256x192xf32>,
    return
  }
  func.func @transform_0(%arg0: i32) -> (i32, i32) {
    %c0_i32 = arith.constant 0 : i32
    %c0_i32_0 = arith.constant 0 : i32
    return %arg0, %c0_i32 : i32, i32
  }
  func.func @transform_1(%arg0: i32) -> (i32, i32) {
    %c0_i32 = arith.constant 0 : i32
    %c0_i32_0 = arith.constant 0 : i32
    %c0_i32_1 = arith.constant 0 : i32
    return %c0_i32, %c0_i32_0 : i32, i32
  }
  func.func @transform_2(%arg0: i32) -> (i32, i32) {
    %c0_i32 = arith.constant 0 : i32
    %c0_i32_0 = arith.constant 0 : i32
    %c0_i32_1 = arith.constant 0 : i32
    return %c0_i32, %c0_i32_0 : i32, i32
  }
  func.func @transform_3(%arg0: i32) -> (i32, i32) {
    %c0_i32 = arith.constant 0 : i32
    %c0_i32_0 = arith.constant 0 : i32
    %c0_i32_1 = arith.constant 0 : i32
    return %c0_i32, %c0_i32_0 : i32, i32
  }
  func.func @transform_4(%arg0: i32) -> (i32, i32) {
    %c0_i32 = arith.constant 0 : i32
    %c0_i32_0 = arith.constant 0 : i32
    %c0_i32_1 = arith.constant 0 : i32
    return %c0_i32, %c0_i32_0 : i32, i32
  }
  func.func @transform_5(%arg0: i32) -> (i32, i32) {
    %c0_i32 = arith.constant 0 : i32
    %c0_i32_0 = arith.constant 0 : i32
    return %arg0, %c0_i32 : i32, i32
  }
}

</mosaic_0001>

<llo_original>
// kernel: openai_discrete_vae_forward.1
$region0: #{openai_discrete_vae_forward.1}
  #allocation0 [shape = 'u32[]', space=smem, size = 0x4, offset = 0x4, fixed_abs, tag = 'smem constant byte address 0x4 - core index']
  #allocation1 [shape = 'u32[144,128]{1,0:T(1,128)}', space=vmem, size = 0x12000, scoped, tag = 'internal scratch']
  %s0 = inlined_call_operand.vmem [shape: bf16[512,192], index: 0, kind: input, shape index: {}]
  %s1 = inlined_call_operand.vmem [shape: bf16[192,512], index: 1, kind: input, shape index: {}]
  %s2 = inlined_call_operand.vmem [shape: f32[1,512], index: 2, kind: input, shape index: {}]
  %s3 = inlined_call_operand.vmem [shape: bf16[512,128], index: 3, kind: input, shape index: {}]
  %s4 = inlined_call_operand.vmem [shape: bf16[128,192], index: 4, kind: input, shape index: {}]
  %s5 = inlined_call_operand.vmem [shape: f32[512,192], index: 5, kind: output, shape index: {}]
  %s6 = sld [smem:[#allocation0]]
  $region53: #{openai_discrete_vae_forward.1} parent=0
    _
  %s8 = ssub.s32 1, %s6
  %s9 = scalar_select 0, %s8, %s6
  loop: start=0, step=1, limit=4
  $region2: #{openai_discrete_vae_forward.1} parent=0 // loop_pre_header
    _
  $region3: #{openai_discrete_vae_forward.1} parent=0 // loop_header
    %s11 = sphi 0, %s15
    %p12 = scmp.ge.s32.totalorder %s11, 4
    %s21 = sphi 0, %s23
    %s24 = sphi 0, %s21
    %s25 = sphi 0, %s24
    %s41 = sphi 0, %s25
    %s45 = sphi 0, %s45
    %s47 = sphi 0, %s45
    %s48 = sphi 0, %s47
    %s62 = sphi 0, %s48
    %s66 = sphi 0, %s66
    %s68 = sphi 0, %s66
    %s69 = sphi 0, %s68
    %s83 = sphi 0, %s69
    %s87 = sphi 0, %s87
    %s89 = sphi 0, %s87
    %s90 = sphi 0, %s89
    %s104 = sphi 0, %s90
    %s108 = sphi 0, %s108
    %s110 = sphi 0, %s108
    %s111 = sphi 0, %s110
    %s125 = sphi 0, %s111
    %s131 = sphi 0, %s133
    %s134 = sphi 0, %s131
    %s135 = sphi 0, %s134
    %s151 = sphi 0, %s135
  $region4: #{openai_discrete_vae_forward.1} parent=0 // loop_header_branch
    %14 = sbr.rel (%p12) target = $region8
  $region5: #{openai_discrete_vae_forward.1} parent=0 // loop_body
    %s16 = ssub.s32 %s11, 1
    %s17 = ssub.s32 %s11, 2
    %s18 = sadd.s32 %s11, 1
    %s19 = ssub.s32 %s11, %s18
    %p20 = scmp.eq.s32.totalorder %s19, 0
    %s22 = sadd.s32 %s21, 1
    %s23 = scalar_select %p20, %s21, %s22
    %p26 = pneg %p20
    %p27 = scmp.eq.s32.totalorder %s11, 1
    %p28 = por %p26, %p27
    %p29 = scmp.ne.s32.totalorder %s21, %s24
    %p30 = scmp.eq.s32.totalorder %s11, 0
    %p31 = por %p29, %p30
    %p32 = scmp.ne.s32.totalorder %s21, %s24
    %p33 = scmp.eq.s32.totalorder %s16, 1
    %p34 = por %p32, %p33
    %p35 = scmp.ne.s32.totalorder %s24, %s25
    %p36 = scmp.eq.s32.totalorder %s16, 0
    %p37 = por %p35, %p36
    %p38 = scmp.ne.s32.totalorder %s24, %s25
    %p39 = scmp.eq.s32.totalorder %s17, 1
    %p40 = por %p38, %p39
    %p42 = scmp.ne.s32.totalorder %s25, %s41
    %p43 = scmp.eq.s32.totalorder %s17, 0
    %p44 = por %p42, %p43
    %s46 = sadd.s32 %s45, 1
    %p49 = scmp.eq.s32.totalorder %s11, 1
    %p50 = scmp.ne.s32.totalorder %s45, %s47
    %p51 = scmp.eq.s32.totalorder %s11, 0
    %p52 = por %p50, %p51
    %p53 = scmp.ne.s32.totalorder %s45, %s47
    %p54 = scmp.eq.s32.totalorder %s16, 1
    %p55 = por %p53, %p54
    %p56 = scmp.ne.s32.totalorder %s47, %s48
    %p57 = scmp.eq.s32.totalorder %s16, 0
    %p58 = por %p56, %p57
    %p59 = scmp.ne.s32.totalorder %s47, %s48
    %p60 = scmp.eq.s32.totalorder %s17, 1
    %p61 = por %p59, %p60
    %p63 = scmp.ne.s32.totalorder %s48, %s62
    %p64 = scmp.eq.s32.totalorder %s17, 0
    %p65 = por %p63, %p64
    %s67 = sadd.s32 %s66, 1
    %p70 = scmp.eq.s32.totalorder %s11, 1
    %p71 = scmp.ne.s32.totalorder %s66, %s68
    %p72 = scmp.eq.s32.totalorder %s11, 0
    %p73 = por %p71, %p72
    %p74 = scmp.ne.s32.totalorder %s66, %s68
    %p75 = scmp.eq.s32.totalorder %s16, 1
    %p76 = por %p74, %p75
    %p77 = scmp.ne.s32.totalorder %s68, %s69
    %p78 = scmp.eq.s32.totalorder %s16, 0
    %p79 = por %p77, %p78
    %p80 = scmp.ne.s32.totalorder %s68, %s69
    %p81 = scmp.eq.s32.totalorder %s17, 1
    %p82 = por %p80, %p81
    %p84 = scmp.ne.s32.totalorder %s69, %s83
    %p85 = scmp.eq.s32.totalorder %s17, 0
    %p86 = por %p84, %p85
    %s88 = sadd.s32 %s87, 1
    %p91 = scmp.eq.s32.totalorder %s11, 1
    %p92 = scmp.ne.s32.totalorder %s87, %s89
    %p93 = scmp.eq.s32.totalorder %s11, 0
    %p94 = por %p92, %p93
    %p95 = scmp.ne.s32.totalorder %s87, %s89
    %p96 = scmp.eq.s32.totalorder %s16, 1
    %p97 = por %p95, %p96
    %p98 = scmp.ne.s32.totalorder %s89, %s90
    %p99 = scmp.eq.s32.totalorder %s16, 0
    %p100 = por %p98, %p99
    %p101 = scmp.ne.s32.totalorder %s89, %s90
    %p102 = scmp.eq.s32.totalorder %s17, 1
    %p103 = por %p101, %p102
    %p105 = scmp.ne.s32.totalorder %s90, %s104
    %p106 = scmp.eq.s32.totalorder %s17, 0
    %p107 = por %p105, %p106
    %s109 = sadd.s32 %s108, 1
    %p112 = scmp.eq.s32.totalorder %s11, 1
    %p113 = scmp.ne.s32.totalorder %s108, %s110
    %p114 = scmp.eq.s32.totalorder %s11, 0
    %p115 = por %p113, %p114
    %p116 = scmp.ne.s32.totalorder %s108, %s110
    %p117 = scmp.eq.s32.totalorder %s16, 1
    %p118 = por %p116, %p117
    %p119 = scmp.ne.s32.totalorder %s110, %s111
    %p120 = scmp.eq.s32.totalorder %s16, 0
    %p121 = por %p119, %p120
    %p122 = scmp.ne.s32.totalorder %s110, %s111
    %p123 = scmp.eq.s32.totalorder %s17, 1
    %p124 = por %p122, %p123
    %p126 = scmp.ne.s32.totalorder %s111, %s125
    %p127 = scmp.eq.s32.totalorder %s17, 0
    %p128 = por %p126, %p127
    %s129 = ssub.s32 %s11, %s18
    %p130 = scmp.eq.s32.totalorder %s129, 0
    %s132 = sadd.s32 %s131, 1
    %s133 = scalar_select %p130, %s131, %s132
    %p136 = pneg %p130
    %p137 = scmp.eq.s32.totalorder %s11, 1
    %p138 = por %p136, %p137
    %p139 = scmp.ne.s32.totalorder %s131, %s134
    %p140 = scmp.eq.s32.totalorder %s11, 0
    %p141 = por %p139, %p140
    %p142 = scmp.ne.s32.totalorder %s131, %s134
    %p143 = scmp.eq.s32.totalorder %s16, 1
    %p144 = por %p142, %p143
    %p145 = scmp.ne.s32.totalorder %s134, %s135
    %p146 = scmp.eq.s32.totalorder %s16, 0
    %p147 = por %p145, %p146
    %p148 = scmp.ne.s32.totalorder %s134, %s135
    %p149 = scmp.eq.s32.totalorder %s17, 1
    %p150 = por %p148, %p149
    %p152 = scmp.ne.s32.totalorder %s135, %s151
    %p153 = scmp.eq.s32.totalorder %s17, 0
    %p154 = por %p152, %p153
    %p155 = scmp.le.s32.totalorder 1, %s11
    %p156 = scmp.lt.s32.totalorder %s11, 3
    %p157 = pnand %p155, %p156
    %p158 = pneg %p157
    // Predicated region
    $region9: #{openai_discrete_vae_forward.1} parent=5 // pred_check
      _
    $region10: #{openai_discrete_vae_forward.1} parent=5 // pred_check_branch
      %160 = sbr.rel (%p157) target = $region12
    $region11: #{openai_discrete_vae_forward.1} parent=5 // pred_region
      %s161 = ssub.s32 %s11, 1
      // Predicated region
      $region13: #{openai_discrete_vae_forward.1} parent=11 // pred_check
        %p162 = pneg %p58
      $region14: #{openai_discrete_vae_forward.1} parent=11 // pred_check_branch
        %164 = sbr.rel (%p162) target = $region16
      $region15: #{openai_discrete_vae_forward.1} parent=11 // pred_region
        _
      $region16: #{openai_discrete_vae_forward.1} parent=11 // pred_fallthru
        _
      // Predicated region
      $region17: #{openai_discrete_vae_forward.1} parent=11 // pred_check
        %p165 = pneg %p79
      $region18: #{openai_discrete_vae_forward.1} parent=11 // pred_check_branch
        %167 = sbr.rel (%p165) target = $region20
      $region19: #{openai_discrete_vae_forward.1} parent=11 // pred_region
        _
      $region20: #{openai_discrete_vae_forward.1} parent=11 // pred_fallthru
        _
      // Predicated region
      $region21: #{openai_discrete_vae_forward.1} parent=11 // pred_check
        %p168 = pneg %p100
      $region22: #{openai_discrete_vae_forward.1} parent=11 // pred_check_branch
        %170 = sbr.rel (%p168) target = $region24
      $region23: #{openai_discrete_vae_forward.1} parent=11 // pred_region
        _
      $region24: #{openai_discrete_vae_forward.1} parent=11 // pred_fallthru
        _
      // Predicated region
      $region25: #{openai_discrete_vae_forward.1} parent=11 // pred_check
        %p171 = pneg %p121
      $region26: #{openai_discrete_vae_forward.1} parent=11 // pred_check_branch
        %173 = sbr.rel (%p171) target = $region28
      $region27: #{openai_discrete_vae_forward.1} parent=11 // pred_region
        _
      $region28: #{openai_discrete_vae_forward.1} parent=11 // pred_fallthru
        _
    $region12: #{openai_discrete_vae_forward.1} parent=5 // pred_fallthru
      _
    %p174 = scmp.lt.s32.totalorder %s11, 2
    // Predicated region
    $region29: #{openai_discrete_vae_forward.1} parent=5 // pred_check
      %p175 = pneg %p174
    $region30: #{openai_discrete_vae_forward.1} parent=5 // pred_check_branch
      %177 = sbr.rel (%p175) target = $region32
    $region31: #{openai_discrete_vae_forward.1} parent=5 // pred_region
      // Predicated region
      $region33: #{openai_discrete_vae_forward.1} parent=31 // pred_check
        %p178 = pneg %p31
      $region34: #{openai_discrete_vae_forward.1} parent=31 // pred_check_branch
        %180 = sbr.rel (%p178) target = $region36
      $region35: #{openai_discrete_vae_forward.1} parent=31 // pred_region
        %s181 = smul.u32 32, %s11
        %p182 = scmp.lt.s32.totalorder %s181, 63
        %s183 = scalar_select %p182, %s181, 63
        %s184 = smul.addr %s183, 2
        %s185 = smul.addr %s184, 4
        %s186 = scalar_lea.vmem %s0, %s185
        %s187 = smul.u32 32, %s11
      $region36: #{openai_discrete_vae_forward.1} parent=31 // pred_fallthru
        _
    $region32: #{openai_discrete_vae_forward.1} parent=5 // pred_fallthru
      _
    %p188 = scmp.le.s32.totalorder 1, %s11
    %p189 = scmp.lt.s32.totalorder %s11, 3
    %p190 = pnand %p188, %p189
    %p191 = pneg %p190
    // Predicated region
    $region37: #{openai_discrete_vae_forward.1} parent=5 // pred_check
      _
    $region38: #{openai_discrete_vae_forward.1} parent=5 // pred_check_branch
      %193 = sbr.rel (%p190) target = $region40
    $region39: #{openai_discrete_vae_forward.1} parent=5 // pred_region
      %s194 = ssub.s32 %s11, 1
      %s195 = smul.u32 32, %s16
      %p196 = scmp.lt.s32.totalorder %s195, 63
      %s197 = scalar_select %p196, %s195, 63
      %s198 = smul.addr %s197, 2
      %s199 = smul.addr %s198, 4
      %s200 = scalar_lea.vmem %s0, %s199
      %p201 = pneg %p37
      %p202 = pneg %p34
      %p203 = pneg %p58
      %p204 = pneg %p55
      %p205 = pneg %p79
      %p206 = pneg %p76
      %p207 = pneg %p100
      %p208 = pneg %p97
      %p209 = pneg %p121
      %p210 = pneg %p118
      %p211 = pneg %p147
      %p212 = pneg %p144
      %s213 = smul.u32 32, %s16
      %p214 = scmp.lt.s32.totalorder %s213, 63
      %s215 = scalar_select %p214, %s213, 63
      %s216 = smul.addr %s215, 2
      %s217 = smul.addr %s216, 8
      %s218 = scalar_lea.vmem %s5, %s217
      %s219 = smul.u32 32, %s16
      %p220 = scmp.lt.s32.totalorder %s219, 63
      %s221 = scalar_select %p220, %s219, 63
      %s222 = smul.addr %s221, 2
      %s223 = smul.addr %s222, 4
      %s224 = scalar_lea.vmem %s0, %s223
      %s225 = smul.u32 32, %s16
      %s226 = smul.u32 32, %s16
      %p227 = scmp.lt.s32.totalorder %s226, 63
      %s228 = scalar_select %p227, %s226, 63
      %s229 = smul.addr %s228, 2
      %s230 = smul.addr %s229, 8
      %s231 = scalar_lea.vmem %s5, %s230
      %s232 = smul.u32 32, %s16
      %v234 = vld [vmem:[%s224] sm:$0xff]
      %v235 = vld [vmem:[%s224 + $0x8] sm:$0xff]
      %v236 = vld [vmem:[%s224 + $0x10] sm:$0xff]
      %v237 = vld [vmem:[%s224 + $0x18] sm:$0xff]
      %v238 = vld [vmem:[%s224 + $0x20] sm:$0xff]
      %v239 = vld [vmem:[%s224 + $0x28] sm:$0xff]
      %v240 = vld [vmem:[%s224 + $0x30] sm:$0xff]
      %v241 = vld [vmem:[%s224 + $0x38] sm:$0xff]
      %v242 = vld [vmem:[%s224 + $0x40] sm:$0xff]
      %v243 = vld [vmem:[%s224 + $0x48] sm:$0xff]
      %v244 = vld [vmem:[%s224 + $0x50] sm:$0xff]
      %v245 = vld [vmem:[%s224 + $0x58] sm:$0xff]
      %v246 = vld [vmem:[%s224 + $0x60] sm:$0xff]
      %v247 = vld [vmem:[%s224 + $0x68] sm:$0xff]
      %v248 = vld [vmem:[%s224 + $0x70] sm:$0xff]
      %v249 = vld [vmem:[%s224 + $0x78] sm:$0xff]
      %v250 = vld [vmem:[%s224 + $0x80] sm:$0xff]
      %v251 = vld [vmem:[%s224 + $0x88] sm:$0xff]
      %v252 = vld [vmem:[%s224 + $0x90] sm:$0xff]
      %v253 = vld [vmem:[%s224 + $0x98] sm:$0xff]
      %v254 = vld [vmem:[%s224 + $0xa0] sm:$0xff]
      %v255 = vld [vmem:[%s224 + $0xa8] sm:$0xff]
      %v256 = vld [vmem:[%s224 + $0xb0] sm:$0xff]
      %v257 = vld [vmem:[%s224 + $0xb8] sm:$0xff]
      %v258 = vld [vmem:[%s224 + $0xc0] sm:$0xff]
      %v259 = vld [vmem:[%s224 + $0xc8] sm:$0xff]
      %v260 = vld [vmem:[%s224 + $0xd0] sm:$0xff]
      %v261 = vld [vmem:[%s224 + $0xd8] sm:$0xff]
      %v262 = vld [vmem:[%s224 + $0xe0] sm:$0xff]
      %v263 = vld [vmem:[%s224 + $0xe8] sm:$0xff]
      %v264 = vld [vmem:[%s224 + $0xf0] sm:$0xff]
      %v265 = vld [vmem:[%s224 + $0xf8] sm:$0xff]
      %v266 = vld [vmem:[%s1] sm:$0xff]
      %v267 = vld [vmem:[%s1 + $0x8] sm:$0xff]
      %v268 = vld [vmem:[%s1 + $0x10] sm:$0xff]
      %v269 = vld [vmem:[%s1 + $0x18] sm:$0xff]
      %v270 = vld [vmem:[%s1 + $0x20] sm:$0xff]
      %v271 = vld [vmem:[%s1 + $0x28] sm:$0xff]
      %v272 = vld [vmem:[%s1 + $0x30] sm:$0xff]
      %v273 = vld [vmem:[%s1 + $0x38] sm:$0xff]
      %v274 = vld [vmem:[%s1 + $0x40] sm:$0xff]
      %v275 = vld [vmem:[%s1 + $0x48] sm:$0xff]
      %v276 = vld [vmem:[%s1 + $0x50] sm:$0xff]
      %v277 = vld [vmem:[%s1 + $0x58] sm:$0xff]
      %v278 = vld [vmem:[%s1 + $0x60] sm:$0xff]
      %v279 = vld [vmem:[%s1 + $0x68] sm:$0xff]
      %v280 = vld [vmem:[%s1 + $0x70] sm:$0xff]
      %v281 = vld [vmem:[%s1 + $0x78] sm:$0xff]
      %v282 = vld [vmem:[%s1 + $0x80] sm:$0xff]
      %v283 = vld [vmem:[%s1 + $0x88] sm:$0xff]
      %v284 = vld [vmem:[%s1 + $0x90] sm:$0xff]
      %v285 = vld [vmem:[%s1 + $0x98] sm:$0xff]
      %v286 = vld [vmem:[%s1 + $0xa0] sm:$0xff]
      %v287 = vld [vmem:[%s1 + $0xa8] sm:$0xff]
      %v288 = vld [vmem:[%s1 + $0xb0] sm:$0xff]
      %v289 = vld [vmem:[%s1 + $0xb8] sm:$0xff]
      %v290 = vld [vmem:[%s1 + $0xc0] sm:$0xff]
      %v291 = vld [vmem:[%s1 + $0xc8] sm:$0xff]
      %v292 = vld [vmem:[%s1 + $0xd0] sm:$0xff]
      %v293 = vld [vmem:[%s1 + $0xd8] sm:$0xff]
      %v294 = vld [vmem:[%s1 + $0xe0] sm:$0xff]
      %v295 = vld [vmem:[%s1 + $0xe8] sm:$0xff]
      %v296 = vld [vmem:[%s1 + $0xf0] sm:$0xff]
      %v297 = vld [vmem:[%s1 + $0xf8] sm:$0xff]
      %v298 = vld [vmem:[%s1 + $0x100] sm:$0xff]
      %v299 = vld [vmem:[%s1 + $0x108] sm:$0xff]
      %v300 = vld [vmem:[%s1 + $0x110] sm:$0xff]
      %v301 = vld [vmem:[%s1 + $0x118] sm:$0xff]
      %v302 = vld [vmem:[%s1 + $0x120] sm:$0xff]
      %v303 = vld [vmem:[%s1 + $0x128] sm:$0xff]
      %v304 = vld [vmem:[%s1 + $0x130] sm:$0xff]
      %v305 = vld [vmem:[%s1 + $0x138] sm:$0xff]
      %v306 = vld [vmem:[%s1 + $0x140] sm:$0xff]
      %v307 = vld [vmem:[%s1 + $0x148] sm:$0xff]
      %v308 = vld [vmem:[%s1 + $0x150] sm:$0xff]
      %v309 = vld [vmem:[%s1 + $0x158] sm:$0xff]
      %v310 = vld [vmem:[%s1 + $0x160] sm:$0xff]
      %v311 = vld [vmem:[%s1 + $0x168] sm:$0xff]
      %v312 = vld [vmem:[%s1 + $0x170] sm:$0xff]
      %v313 = vld [vmem:[%s1 + $0x178] sm:$0xff]
      %v314 = vld [vmem:[%s2] sm:$0xf]
      %v316 = vlaneseq
      %v317 = vshrl.u32 %v316, 7
      %v318 = vsub.s32 0, %v317
      %v319 = vrot.slane %v314, %v318
      %v320 = vlaneseq
      %v321 = vshrl.u32 %v320, 7
      %v322 = vsub.s32 1, %v321
      %v323 = vrot.slane %v314, %v322
      %v324 = vlaneseq
      %v325 = vshrl.u32 %v324, 7
      %v326 = vsub.s32 2, %v325
      %v327 = vrot.slane %v314, %v326
      %v328 = vlaneseq
      %v329 = vshrl.u32 %v328, 7
      %v330 = vsub.s32 3, %v329
      %v331 = vrot.slane %v314, %v330
      %v368 = vunpack.c.l.b16 %v234
      %v369 = vunpack.c.h.b16 %v234
      %v370 = vunpack.c.l.b16 %v235
      %v371 = vunpack.c.h.b16 %v235
      %v372 = vunpack.c.l.b16 %v236
      %v373 = vunpack.c.h.b16 %v236
      %v374 = vunpack.c.l.b16 %v237
      %v375 = vunpack.c.h.b16 %v237
      %v376 = vunpack.c.l.b16 %v238
      %v377 = vunpack.c.h.b16 %v238
      %v378 = vunpack.c.l.b16 %v239
      %v379 = vunpack.c.h.b16 %v239
      %v380 = vunpack.c.l.b16 %v240
      %v381 = vunpack.c.h.b16 %v240
      %v382 = vunpack.c.l.b16 %v241
      %v383 = vunpack.c.h.b16 %v241
      %v384 = vunpack.c.l.b16 %v242
      %v385 = vunpack.c.h.b16 %v242
      %v386 = vunpack.c.l.b16 %v243
      %v387 = vunpack.c.h.b16 %v243
      %v388 = vunpack.c.l.b16 %v244
      %v389 = vunpack.c.h.b16 %v244
      %v390 = vunpack.c.l.b16 %v245
      %v391 = vunpack.c.h.b16 %v245
      %v392 = vunpack.c.l.b16 %v246
      %v393 = vunpack.c.h.b16 %v246
      %v394 = vunpack.c.l.b16 %v247
      %v395 = vunpack.c.h.b16 %v247
      %v396 = vunpack.c.l.b16 %v248
      %v397 = vunpack.c.h.b16 %v248
      %v398 = vunpack.c.l.b16 %v249
      %v399 = vunpack.c.h.b16 %v249
      %v400 = vunpack.c.l.b16 %v250
      %v401 = vunpack.c.h.b16 %v250
      %v402 = vunpack.c.l.b16 %v251
      %v403 = vunpack.c.h.b16 %v251
      %v404 = vunpack.c.l.b16 %v252
      %v405 = vunpack.c.h.b16 %v252
      %v406 = vunpack.c.l.b16 %v253
      %v407 = vunpack.c.h.b16 %v253
      %v408 = vunpack.c.l.b16 %v254
      %v409 = vunpack.c.h.b16 %v254
      %v410 = vunpack.c.l.b16 %v255
      %v411 = vunpack.c.h.b16 %v255
      %v412 = vunpack.c.l.b16 %v256
      %v413 = vunpack.c.h.b16 %v256
      %v414 = vunpack.c.l.b16 %v257
      %v415 = vunpack.c.h.b16 %v257
      %v416 = vunpack.c.l.b16 %v258
      %v417 = vunpack.c.h.b16 %v258
      %v418 = vunpack.c.l.b16 %v259
      %v419 = vunpack.c.h.b16 %v259
      %v420 = vunpack.c.l.b16 %v260
      %v421 = vunpack.c.h.b16 %v260
      %v422 = vunpack.c.l.b16 %v261
      %v423 = vunpack.c.h.b16 %v261
      %v424 = vunpack.c.l.b16 %v262
      %v425 = vunpack.c.h.b16 %v262
      %v426 = vunpack.c.l.b16 %v263
      %v427 = vunpack.c.h.b16 %v263
      %v428 = vunpack.c.l.b16 %v264
      %v429 = vunpack.c.h.b16 %v264
      %v430 = vunpack.c.l.b16 %v265
      %v431 = vunpack.c.h.b16 %v265
      %v432 = vpack.c.b16 %v370, %v368
      %v433 = vpack.c.b16 %v371, %v369
      %v434 = vpack.c.b16 %v374, %v372
      %v435 = vpack.c.b16 %v375, %v373
      %v436 = vpack.c.b16 %v378, %v376
      %v437 = vpack.c.b16 %v379, %v377
      %v438 = vpack.c.b16 %v382, %v380
      %v439 = vpack.c.b16 %v383, %v381
      %v440 = vpack.c.b16 %v386, %v384
      %v441 = vpack.c.b16 %v387, %v385
      %v442 = vpack.c.b16 %v390, %v388
      %v443 = vpack.c.b16 %v391, %v389
      %v444 = vpack.c.b16 %v394, %v392
      %v445 = vpack.c.b16 %v395, %v393
      %v446 = vpack.c.b16 %v398, %v396
      %v447 = vpack.c.b16 %v399, %v397
      %v448 = vpack.c.b16 %v402, %v400
      %v449 = vpack.c.b16 %v403, %v401
      %v450 = vpack.c.b16 %v406, %v404
      %v451 = vpack.c.b16 %v407, %v405
      %v452 = vpack.c.b16 %v410, %v408
      %v453 = vpack.c.b16 %v411, %v409
      %v454 = vpack.c.b16 %v414, %v412
      %v455 = vpack.c.b16 %v415, %v413
      %v456 = vpack.c.b16 %v418, %v416
      %v457 = vpack.c.b16 %v419, %v417
      %v458 = vpack.c.b16 %v422, %v420
      %v459 = vpack.c.b16 %v423, %v421
      %v460 = vpack.c.b16 %v426, %v424
      %v461 = vpack.c.b16 %v427, %v425
      %v462 = vpack.c.b16 %v430, %v428
      %v463 = vpack.c.b16 %v431, %v429
      %v528 = vunpack.c.l.b16 %v266
      %v529 = vunpack.c.h.b16 %v266
      %v530 = vunpack.c.l.b16 %v267
      %v531 = vunpack.c.h.b16 %v267
      %v532 = vunpack.c.l.b16 %v268
      %v533 = vunpack.c.h.b16 %v268
      %v534 = vunpack.c.l.b16 %v269
      %v535 = vunpack.c.h.b16 %v269
      %v536 = vunpack.c.l.b16 %v270
      %v537 = vunpack.c.h.b16 %v270
      %v538 = vunpack.c.l.b16 %v271
      %v539 = vunpack.c.h.b16 %v271
      %v540 = vunpack.c.l.b16 %v272
      %v541 = vunpack.c.h.b16 %v272
      %v542 = vunpack.c.l.b16 %v273
      %v543 = vunpack.c.h.b16 %v273
      %v544 = vunpack.c.l.b16 %v274
      %v545 = vunpack.c.h.b16 %v274
      %v546 = vunpack.c.l.b16 %v275
      %v547 = vunpack.c.h.b16 %v275
      %v548 = vunpack.c.l.b16 %v276
      %v549 = vunpack.c.h.b16 %v276
      %v550 = vunpack.c.l.b16 %v277
      %v551 = vunpack.c.h.b16 %v277
      %v552 = vunpack.c.l.b16 %v278
      %v553 = vunpack.c.h.b16 %v278
      %v554 = vunpack.c.l.b16 %v279
      %v555 = vunpack.c.h.b16 %v279
      %v556 = vunpack.c.l.b16 %v280
      %v557 = vunpack.c.h.b16 %v280
      %v558 = vunpack.c.l.b16 %v281
      %v559 = vunpack.c.h.b16 %v281
      %v560 = vunpack.c.l.b16 %v282
      %v561 = vunpack.c.h.b16 %v282
      %v562 = vunpack.c.l.b16 %v283
      %v563 = vunpack.c.h.b16 %v283
      %v564 = vunpack.c.l.b16 %v284
      %v565 = vunpack.c.h.b16 %v284
      %v566 = vunpack.c.l.b16 %v285
      %v567 = vunpack.c.h.b16 %v285
      %v568 = vunpack.c.l.b16 %v286
      %v569 = vunpack.c.h.b16 %v286
      %v570 = vunpack.c.l.b16 %v287
      %v571 = vunpack.c.h.b16 %v287
      %v572 = vunpack.c.l.b16 %v288
      %v573 = vunpack.c.h.b16 %v288
      %v574 = vunpack.c.l.b16 %v289
      %v575 = vunpack.c.h.b16 %v289
      %v576 = vunpack.c.l.b16 %v290
      %v577 = vunpack.c.h.b16 %v290
      %v578 = vunpack.c.l.b16 %v291
      %v579 = vunpack.c.h.b16 %v291
      %v580 = vunpack.c.l.b16 %v292
      %v581 = vunpack.c.h.b16 %v292
      %v582 = vunpack.c.l.b16 %v293
      %v583 = vunpack.c.h.b16 %v293
      %v584 = vunpack.c.l.b16 %v294
      %v585 = vunpack.c.h.b16 %v294
      %v586 = vunpack.c.l.b16 %v295
      %v587 = vunpack.c.h.b16 %v295
      %v588 = vunpack.c.l.b16 %v296
      %v589 = vunpack.c.h.b16 %v296
      %v590 = vunpack.c.l.b16 %v297
      %v591 = vunpack.c.h.b16 %v297
      %v592 = vunpack.c.l.b16 %v298
      %v593 = vunpack.c.h.b16 %v298
      %v594 = vunpack.c.l.b16 %v299
      %v595 = vunpack.c.h.b16 %v299
      %v596 = vunpack.c.l.b16 %v300
      %v597 = vunpack.c.h.b16 %v300
      %v598 = vunpack.c.l.b16 %v301
      %v599 = vunpack.c.h.b16 %v301
      %v600 = vunpack.c.l.b16 %v302
      %v601 = vunpack.c.h.b16 %v302
      %v602 = vunpack.c.l.b16 %v303
      %v603 = vunpack.c.h.b16 %v303
      %v604 = vunpack.c.l.b16 %v304
      %v605 = vunpack.c.h.b16 %v304
      %v606 = vunpack.c.l.b16 %v305
      %v607 = vunpack.c.h.b16 %v305
      %v608 = vunpack.c.l.b16 %v306
      %v609 = vunpack.c.h.b16 %v306
      %v610 = vunpack.c.l.b16 %v307
      %v611 = vunpack.c.h.b16 %v307
      %v612 = vunpack.c.l.b16 %v308
      %v613 = vunpack.c.h.b16 %v308
      %v614 = vunpack.c.l.b16 %v309
      %v615 = vunpack.c.h.b16 %v309
      %v616 = vunpack.c.l.b16 %v310
      %v617 = vunpack.c.h.b16 %v310
      %v618 = vunpack.c.l.b16 %v311
      %v619 = vunpack.c.h.b16 %v311
      %v620 = vunpack.c.l.b16 %v312
      %v621 = vunpack.c.h.b16 %v312
      %v622 = vunpack.c.l.b16 %v313
      %v623 = vunpack.c.h.b16 %v313
      %v624 = vpack.c.b16 %v532, %v528
      %v625 = vpack.c.b16 %v533, %v529
      %v626 = vpack.c.b16 %v534, %v530
      %v627 = vpack.c.b16 %v535, %v531
      %v628 = vpack.c.b16 %v540, %v536
      %v629 = vpack.c.b16 %v541, %v537
      %v630 = vpack.c.b16 %v542, %v538
      %v631 = vpack.c.b16 %v543, %v539
      %v632 = vpack.c.b16 %v548, %v544
      %v633 = vpack.c.b16 %v549, %v545
      %v634 = vpack.c.b16 %v550, %v546
      %v635 = vpack.c.b16 %v551, %v547
      %v636 = vpack.c.b16 %v556, %v552
      %v637 = vpack.c.b16 %v557, %v553
      %v638 = vpack.c.b16 %v558, %v554
      %v639 = vpack.c.b16 %v559, %v555
      %v640 = vpack.c.b16 %v564, %v560
      %v641 = vpack.c.b16 %v565, %v561
      %v642 = vpack.c.b16 %v566, %v562
      %v643 = vpack.c.b16 %v567, %v563
      %v644 = vpack.c.b16 %v572, %v568
      %v645 = vpack.c.b16 %v573, %v569
      %v646 = vpack.c.b16 %v574, %v570
      %v647 = vpack.c.b16 %v575, %v571
      %v648 = vpack.c.b16 %v580, %v576
      %v649 = vpack.c.b16 %v581, %v577
      %v650 = vpack.c.b16 %v582, %v578
      %v651 = vpack.c.b16 %v583, %v579
      %v652 = vpack.c.b16 %v588, %v584
      %v653 = vpack.c.b16 %v589, %v585
      %v654 = vpack.c.b16 %v590, %v586
      %v655 = vpack.c.b16 %v591, %v587
      %v656 = vpack.c.b16 %v596, %v592
      %v657 = vpack.c.b16 %v597, %v593
      %v658 = vpack.c.b16 %v598, %v594
      %v659 = vpack.c.b16 %v599, %v595
      %v660 = vpack.c.b16 %v604, %v600
      %v661 = vpack.c.b16 %v605, %v601
      %v662 = vpack.c.b16 %v606, %v602
      %v663 = vpack.c.b16 %v607, %v603
      %v664 = vpack.c.b16 %v612, %v608
      %v665 = vpack.c.b16 %v613, %v609
      %v666 = vpack.c.b16 %v614, %v610
      %v667 = vpack.c.b16 %v615, %v611
      %v668 = vpack.c.b16 %v620, %v616
      %v669 = vpack.c.b16 %v621, %v617
      %v670 = vpack.c.b16 %v622, %v618
      %v671 = vpack.c.b16 %v623, %v619
      %vm720 = vcmask 523264
      %v722 = vsel %vm720, %v433, 0
      %v725 = vsel %vm720, %v435, 0
      %v728 = vsel %vm720, %v437, 0
      %v731 = vsel %vm720, %v439, 0
      %v734 = vsel %vm720, %v441, 0
      %v737 = vsel %vm720, %v443, 0
      %v740 = vsel %vm720, %v445, 0
      %v743 = vsel %vm720, %v447, 0
      %v746 = vsel %vm720, %v449, 0
      %v749 = vsel %vm720, %v451, 0
      %v752 = vsel %vm720, %v453, 0
      %v755 = vsel %vm720, %v455, 0
      %v758 = vsel %vm720, %v457, 0
      %v761 = vsel %vm720, %v459, 0
      %v764 = vsel %vm720, %v461, 0
      %v767 = vsel %vm720, %v463, 0
      %769 = vmatprep.subr.bf16.mxu0 %v625
      %770 = vmatpush1.bf16.msra.mxu0 %v624
      %771 = vmatprep.subr.bf16.mxu0 %v629
      %772 = vmatpush1.bf16.msra.mxu0 %v628
      %773 = vmatprep.subr.bf16.mxu0 %v633
      %774 = vmatpush1.bf16.msra.mxu0 %v632
      %775 = vmatprep.subr.bf16.mxu0 %v637
      %776 = vmatpush1.bf16.msra.mxu0 %v636
      %777 = vmatprep.subr.bf16.mxu0 %v641
      %778 = vmatpush1.bf16.msra.mxu0 %v640
      %779 = vmatprep.subr.bf16.mxu0 %v645
      %780 = vmatpush1.bf16.msra.mxu0 %v644
      %781 = vmatprep.subr.bf16.mxu0 %v649
      %782 = vmatpush1.bf16.msra.mxu0 %v648
      %783 = vmatprep.subr.bf16.mxu0 %v653
      %784 = vmatpush1.bf16.msra.mxu0 %v652
      %785 = vmatprep.subr.bf16.mxu0 %v657
      %786 = vmatpush1.bf16.msra.mxu0 %v656
      %787 = vmatprep.subr.bf16.mxu0 %v661
      %788 = vmatpush1.bf16.msra.mxu0 %v660
      %789 = vmatprep.subr.bf16.mxu0 %v665
      %790 = vmatpush1.bf16.msra.mxu0 %v664
      %791 = vmatprep.subr.bf16.mxu0 %v669
      %792 = vmatpush1.bf16.msra.mxu0 %v668
      %793 = vmatprep.subr.bf16.mxu0 0
      %794 = vmatpush1.bf16.msra.mxu0 0
      %795 = vmatprep.subr.bf16.mxu0 0
      %796 = vmatpush1.bf16.msra.mxu0 0
      %797 = vmatprep.subr.bf16.mxu0 0
      %798 = vmatpush1.bf16.msra.mxu0 0
      %799 = vmatprep.subr.bf16.mxu0 0
      %800 = vmatpush1.bf16.msra.mxu0 0
      %801 = vmatprep.mubr.bf16.mxu0 %v722
      %802 = vmatmul.mubr.bf16.gmra.mrb[0].mxu0 %v432
      %v803 = vpop.f32.mrb[0].mxu0
      %v804 = vadd.f32 %v319, %v803
      %v805 = vpop.f32.mrb[0].mxu0
      %v806 = vadd.f32 %v323, %v805
      %v807 = vpop.f32.mrb[0].mxu0
      %v808 = vadd.f32 %v319, %v807
      %v809 = vpop.f32.mrb[0].mxu0
      %v810 = vadd.f32 %v323, %v809
      %811 = vmatprep.mubr.bf16.mxu0 %v725
      %812 = vmatmul.mubr.bf16.gmra.mrb[0].mxu0 %v434
      %v813 = vpop.f32.mrb[0].mxu0
      %v814 = vadd.f32 %v319, %v813
      %v815 = vpop.f32.mrb[0].mxu0
      %v816 = vadd.f32 %v323, %v815
      %v817 = vpop.f32.mrb[0].mxu0
      %v818 = vadd.f32 %v319, %v817
      %v819 = vpop.f32.mrb[0].mxu0
      %v820 = vadd.f32 %v323, %v819
      %821 = vmatprep.mubr.bf16.mxu0 %v728
      %822 = vmatmul.mubr.bf16.gmra.mrb[0].mxu0 %v436
      %v823 = vpop.f32.mrb[0].mxu0
      %v824 = vadd.f32 %v319, %v823
      %v825 = vpop.f32.mrb[0].mxu0
      %v826 = vadd.f32 %v323, %v825
      %v827 = vpop.f32.mrb[0].mxu0
      %v828 = vadd.f32 %v319, %v827
      %v829 = vpop.f32.mrb[0].mxu0
      %v830 = vadd.f32 %v323, %v829
      %831 = vmatprep.mubr.bf16.mxu0 %v731
      %832 = vmatmul.mubr.bf16.gmra.mrb[0].mxu0 %v438
      %v833 = vpop.f32.mrb[0].mxu0
      %v834 = vadd.f32 %v319, %v833
      %v835 = vpop.f32.mrb[0].mxu0
      %v836 = vadd.f32 %v323, %v835
      %v837 = vpop.f32.mrb[0].mxu0
      %v838 = vadd.f32 %v319, %v837
      %v839 = vpop.f32.mrb[0].mxu0
      %v840 = vadd.f32 %v323, %v839
      %841 = vmatprep.mubr.bf16.mxu0 %v734
      %842 = vmatmul.mubr.bf16.gmra.mrb[0].mxu0 %v440
      %v843 = vpop.f32.mrb[0].mxu0
      %v844 = vadd.f32 %v319, %v843
      %v845 = vpop.f32.mrb[0].mxu0
      %v846 = vadd.f32 %v323, %v845
      %v847 = vpop.f32.mrb[0].mxu0
      %v848 = vadd.f32 %v319, %v847
      %v849 = vpop.f32.mrb[0].mxu0
      %v850 = vadd.f32 %v323, %v849
      %851 = vmatprep.mubr.bf16.mxu0 %v737
      %852 = vmatmul.mubr.bf16.gmra.mrb[0].mxu0 %v442
      %v853 = vpop.f32.mrb[0].mxu0
      %v854 = vadd.f32 %v319, %v853
      %v855 = vpop.f32.mrb[0].mxu0
      %v856 = vadd.f32 %v323, %v855
      %v857 = vpop.f32.mrb[0].mxu0
      %v858 = vadd.f32 %v319, %v857
      %v859 = vpop.f32.mrb[0].mxu0
      %v860 = vadd.f32 %v323, %v859
      %861 = vmatprep.mubr.bf16.mxu0 %v740
      %862 = vmatmul.mubr.bf16.gmra.mrb[0].mxu0 %v444
      %v863 = vpop.f32.mrb[0].mxu0
      %v864 = vadd.f32 %v319, %v863
      %v865 = vpop.f32.mrb[0].mxu0
      %v866 = vadd.f32 %v323, %v865
      %v867 = vpop.f32.mrb[0].mxu0
      %v868 = vadd.f32 %v319, %v867
      %v869 = vpop.f32.mrb[0].mxu0
      %v870 = vadd.f32 %v323, %v869
      %871 = vmatprep.mubr.bf16.mxu0 %v743
      %872 = vmatmul.mubr.bf16.gmra.mrb[0].mxu0 %v446
      %v873 = vpop.f32.mrb[0].mxu0
      %v874 = vadd.f32 %v319, %v873
      %v875 = vpop.f32.mrb[0].mxu0
      %v876 = vadd.f32 %v323, %v875
      %v877 = vpop.f32.mrb[0].mxu0
      %v878 = vadd.f32 %v319, %v877
      %v879 = vpop.f32.mrb[0].mxu0
      %v880 = vadd.f32 %v323, %v879
      %881 = vmatprep.mubr.bf16.mxu0 %v746
      %882 = vmatmul.mubr.bf16.gmra.mrb[0].mxu0 %v448
      %v883 = vpop.f32.mrb[0].mxu0
      %v884 = vadd.f32 %v319, %v883
      %v885 = vpop.f32.mrb[0].mxu0
      %v886 = vadd.f32 %v323, %v885
      %v887 = vpop.f32.mrb[0].mxu0
      %v888 = vadd.f32 %v319, %v887
      %v889 = vpop.f32.mrb[0].mxu0
      %v890 = vadd.f32 %v323, %v889
      %891 = vmatprep.mubr.bf16.mxu0 %v749
      %892 = vmatmul.mubr.bf16.gmra.mrb[0].mxu0 %v450
      %v893 = vpop.f32.mrb[0].mxu0
      %v894 = vadd.f32 %v319, %v893
      %v895 = vpop.f32.mrb[0].mxu0
      %v896 = vadd.f32 %v323, %v895
      %v897 = vpop.f32.mrb[0].mxu0
      %v898 = vadd.f32 %v319, %v897
      %v899 = vpop.f32.mrb[0].mxu0
      %v900 = vadd.f32 %v323, %v899
      %901 = vmatprep.mubr.bf16.mxu0 %v752
      %902 = vmatmul.mubr.bf16.gmra.mrb[0].mxu0 %v452
      %v903 = vpop.f32.mrb[0].mxu0
      %v904 = vadd.f32 %v319, %v903
      %v905 = vpop.f32.mrb[0].mxu0
      %v906 = vadd.f32 %v323, %v905
      %v907 = vpop.f32.mrb[0].mxu0
      %v908 = vadd.f32 %v319, %v907
      %v909 = vpop.f32.mrb[0].mxu0
      %v910 = vadd.f32 %v323, %v909
      %911 = vmatprep.mubr.bf16.mxu0 %v755
      %912 = vmatmul.mubr.bf16.gmra.mrb[0].mxu0 %v454
      %v913 = vpop.f32.mrb[0].mxu0
      %v914 = vadd.f32 %v319, %v913
      %v915 = vpop.f32.mrb[0].mxu0
      %v916 = vadd.f32 %v323, %v915
      %v917 = vpop.f32.mrb[0].mxu0
      %v918 = vadd.f32 %v319, %v917
      %v919 = vpop.f32.mrb[0].mxu0
      %v920 = vadd.f32 %v323, %v919
      %921 = vmatprep.mubr.bf16.mxu0 %v758
      %922 = vmatmul.mubr.bf16.gmra.mrb[0].mxu0 %v456
      %v923 = vpop.f32.mrb[0].mxu0
      %v924 = vadd.f32 %v319, %v923
      %v925 = vpop.f32.mrb[0].mxu0
      %v926 = vadd.f32 %v323, %v925
      %v927 = vpop.f32.mrb[0].mxu0
      %v928 = vadd.f32 %v319, %v927
      %v929 = vpop.f32.mrb[0].mxu0
      %v930 = vadd.f32 %v323, %v929
      %931 = vmatprep.mubr.bf16.mxu0 %v761
      %932 = vmatmul.mubr.bf16.gmra.mrb[0].mxu0 %v458
      %v933 = vpop.f32.mrb[0].mxu0
      %v934 = vadd.f32 %v319, %v933
      %v935 = vpop.f32.mrb[0].mxu0
      %v936 = vadd.f32 %v323, %v935
      %v937 = vpop.f32.mrb[0].mxu0
      %v938 = vadd.f32 %v319, %v937
      %v939 = vpop.f32.mrb[0].mxu0
      %v940 = vadd.f32 %v323, %v939
      %941 = vmatprep.mubr.bf16.mxu0 %v764
      %942 = vmatmul.mubr.bf16.gmra.mrb[0].mxu0 %v460
      %v943 = vpop.f32.mrb[0].mxu0
      %v944 = vadd.f32 %v319, %v943
      %v945 = vpop.f32.mrb[0].mxu0
      %v946 = vadd.f32 %v323, %v945
      %v947 = vpop.f32.mrb[0].mxu0
      %v948 = vadd.f32 %v319, %v947
      %v949 = vpop.f32.mrb[0].mxu0
      %v950 = vadd.f32 %v323, %v949
      %951 = vmatprep.mubr.bf16.mxu0 %v767
      %952 = vmatmul.mubr.bf16.gmra.mrb[0].mxu0 %v462
      %v953 = vpop.f32.mrb[0].mxu0
      %v954 = vadd.f32 %v319, %v953
      %v955 = vpop.f32.mrb[0].mxu0
      %v956 = vadd.f32 %v323, %v955
      %v957 = vpop.f32.mrb[0].mxu0
      %v958 = vadd.f32 %v319, %v957
      %v959 = vpop.f32.mrb[0].mxu0
      %v960 = vadd.f32 %v323, %v959
      %961 = vdwg.mxu0
      %962 = vmatprep.subr.bf16.mxu0 %v627
      %963 = vmatpush1.bf16.msra.mxu0 %v626
      %964 = vmatprep.subr.bf16.mxu0 %v631
      %965 = vmatpush1.bf16.msra.mxu0 %v630
      %966 = vmatprep.subr.bf16.mxu0 %v635
      %967 = vmatpush1.bf16.msra.mxu0 %v634
      %968 = vmatprep.subr.bf16.mxu0 %v639
      %969 = vmatpush1.bf16.msra.mxu0 %v638
      %970 = vmatprep.subr.bf16.mxu0 %v643
      %971 = vmatpush1.bf16.msra.mxu0 %v642
      %972 = vmatprep.subr.bf16.mxu0 %v647
      %973 = vmatpush1.bf16.msra.mxu0 %v646
      %974 = vmatprep.subr.bf16.mxu0 %v651
      %975 = vmatpush1.bf16.msra.mxu0 %v650
      %976 = vmatprep.subr.bf16.mxu0 %v655
      %977 = vmatpush1.bf16.msra.mxu0 %v654
      %978 = vmatprep.subr.bf16.mxu0 %v659
      %979 = vmatpush1.bf16.msra.mxu0 %v658
      %980 = vmatprep.subr.bf16.mxu0 %v663
      %981 = vmatpush1.bf16.msra.mxu0 %v662
      %982 = vmatprep.subr.bf16.mxu0 %v667
      %983 = vmatpush1.bf16.msra.mxu0 %v666
      %984 = vmatprep.subr.bf16.mxu0 %v671
      %985 = vmatpush1.bf16.msra.mxu0 %v670
      %986 = vmatprep.subr.bf16.mxu0 0
      %987 = vmatpush1.bf16.msra.mxu0 0
      %988 = vmatprep.subr.bf16.mxu0 0
      %989 = vmatpush1.bf16.msra.mxu0 0
      %990 = vmatprep.subr.bf16.mxu0 0
      %991 = vmatpush1.bf16.msra.mxu0 0
      %992 = vmatprep.subr.bf16.mxu0 0
      %993 = vmatpush1.bf16.msra.mxu0 0
      %994 = vmatprep.mubr.bf16.mxu0 %v722
      %995 = vmatmul.mubr.bf16.gmra.mrb[0].mxu0 %v432
      %v996 = vpop.f32.mrb[0].mxu0
      %v997 = vadd.f32 %v327, %v996
      %v998 = vpop.f32.mrb[0].mxu0
      %v999 = vadd.f32 %v331, %v998
      %v1000 = vpop.f32.mrb[0].mxu0
      %v1001 = vadd.f32 %v327, %v1000
      %v1002 = vpop.f32.mrb[0].mxu0
      %v1003 = vadd.f32 %v331, %v1002
      %1004 = vmatprep.mubr.bf16.mxu0 %v725
      %1005 = vmatmul.mubr.bf16.gmra.mrb[0].mxu0 %v434
      %v1006 = vpop.f32.mrb[0].mxu0
      %v1007 = vadd.f32 %v327, %v1006
      %v1008 = vpop.f32.mrb[0].mxu0
      %v1009 = vadd.f32 %v331, %v1008
      %v1010 = vpop.f32.mrb[0].mxu0
      %v1011 = vadd.f32 %v327, %v1010
      %v1012 = vpop.f32.mrb[0].mxu0
      %v1013 = vadd.f32 %v331, %v1012
      %1014 = vmatprep.mubr.bf16.mxu0 %v728
      %1015 = vmatmul.mubr.bf16.gmra.mrb[0].mxu0 %v436
      %v1016 = vpop.f32.mrb[0].mxu0
      %v1017 = vadd.f32 %v327, %v1016
      %v1018 = vpop.f32.mrb[0].mxu0
      %v1019 = vadd.f32 %v331, %v1018
      %v1020 = vpop.f32.mrb[0].mxu0
      %v1021 = vadd.f32 %v327, %v1020
      %v1022 = vpop.f32.mrb[0].mxu0
      %v1023 = vadd.f32 %v331, %v1022
      %1024 = vmatprep.mubr.bf16.mxu0 %v731
      %1025 = vmatmul.mubr.bf16.gmra.mrb[0].mxu0 %v438
      %v1026 = vpop.f32.mrb[0].mxu0
      %v1027 = vadd.f32 %v327, %v1026
      %v1028 = vpop.f32.mrb[0].mxu0
      %v1029 = vadd.f32 %v331, %v1028
      %v1030 = vpop.f32.mrb[0].mxu0
      %v1031 = vadd.f32 %v327, %v1030
      %v1032 = vpop.f32.mrb[0].mxu0
      %v1033 = vadd.f32 %v331, %v1032
      %1034 = vmatprep.mubr.bf16.mxu0 %v734
      %1035 = vmatmul.mubr.bf16.gmra.mrb[0].mxu0 %v440
      %v1036 = vpop.f32.mrb[0].mxu0
      %v1037 = vadd.f32 %v327, %v1036
      %v1038 = vpop.f32.mrb[0].mxu0
      %v1039 = vadd.f32 %v331, %v1038
      %v1040 = vpop.f32.mrb[0].mxu0
      %v1041 = vadd.f32 %v327, %v1040
      %v1042 = vpop.f32.mrb[0].mxu0
      %v1043 = vadd.f32 %v331, %v1042
      %1044 = vmatprep.mubr.bf16.mxu0 %v737
      %1045 = vmatmul.mubr.bf16.gmra.mrb[0].mxu0 %v442
      %v1046 = vpop.f32.mrb[0].mxu0
      %v1047 = vadd.f32 %v327, %v1046
      %v1048 = vpop.f32.mrb[0].mxu0
      %v1049 = vadd.f32 %v331, %v1048
      %v1050 = vpop.f32.mrb[0].mxu0
      %v1051 = vadd.f32 %v327, %v1050
      %v1052 = vpop.f32.mrb[0].mxu0
      %v1053 = vadd.f32 %v331, %v1052
      %1054 = vmatprep.mubr.bf16.mxu0 %v740
      %1055 = vmatmul.mubr.bf16.gmra.mrb[0].mxu0 %v444
      %v1056 = vpop.f32.mrb[0].mxu0
      %v1057 = vadd.f32 %v327, %v1056
      %v1058 = vpop.f32.mrb[0].mxu0
      %v1059 = vadd.f32 %v331, %v1058
      %v1060 = vpop.f32.mrb[0].mxu0
      %v1061 = vadd.f32 %v327, %v1060
      %v1062 = vpop.f32.mrb[0].mxu0
      %v1063 = vadd.f32 %v331, %v1062
      %1064 = vmatprep.mubr.bf16.mxu0 %v743
      %1065 = vmatmul.mubr.bf16.gmra.mrb[0].mxu0 %v446
      %v1066 = vpop.f32.mrb[0].mxu0
      %v1067 = vadd.f32 %v327, %v1066
      %v1068 = vpop.f32.mrb[0].mxu0
      %v1069 = vadd.f32 %v331, %v1068
      %v1070 = vpop.f32.mrb[0].mxu0
      %v1071 = vadd.f32 %v327, %v1070
      %v1072 = vpop.f32.mrb[0].mxu0
      %v1073 = vadd.f32 %v331, %v1072
      %1074 = vmatprep.mubr.bf16.mxu0 %v746
      %1075 = vmatmul.mubr.bf16.gmra.mrb[0].mxu0 %v448
      %v1076 = vpop.f32.mrb[0].mxu0
      %v1077 = vadd.f32 %v327, %v1076
      %v1078 = vpop.f32.mrb[0].mxu0
      %v1079 = vadd.f32 %v331, %v1078
      %v1080 = vpop.f32.mrb[0].mxu0
      %v1081 = vadd.f32 %v327, %v1080
      %v1082 = vpop.f32.mrb[0].mxu0
      %v1083 = vadd.f32 %v331, %v1082
      %1084 = vmatprep.mubr.bf16.mxu0 %v749
      %1085 = vmatmul.mubr.bf16.gmra.mrb[0].mxu0 %v450
      %v1086 = vpop.f32.mrb[0].mxu0
      %v1087 = vadd.f32 %v327, %v1086
      %v1088 = vpop.f32.mrb[0].mxu0
      %v1089 = vadd.f32 %v331, %v1088
      %v1090 = vpop.f32.mrb[0].mxu0
      %v1091 = vadd.f32 %v327, %v1090
      %v1092 = vpop.f32.mrb[0].mxu0
      %v1093 = vadd.f32 %v331, %v1092
      %1094 = vmatprep.mubr.bf16.mxu0 %v752
      %1095 = vmatmul.mubr.bf16.gmra.mrb[0].mxu0 %v452
      %v1096 = vpop.f32.mrb[0].mxu0
      %v1097 = vadd.f32 %v327, %v1096
      %v1098 = vpop.f32.mrb[0].mxu0
      %v1099 = vadd.f32 %v331, %v1098
      %v1100 = vpop.f32.mrb[0].mxu0
      %v1101 = vadd.f32 %v327, %v1100
      %v1102 = vpop.f32.mrb[0].mxu0
      %v1103 = vadd.f32 %v331, %v1102
      %1104 = vmatprep.mubr.bf16.mxu0 %v755
      %1105 = vmatmul.mubr.bf16.gmra.mrb[0].mxu0 %v454
      %v1106 = vpop.f32.mrb[0].mxu0
      %v1107 = vadd.f32 %v327, %v1106
      %v1108 = vpop.f32.mrb[0].mxu0
      %v1109 = vadd.f32 %v331, %v1108
      %v1110 = vpop.f32.mrb[0].mxu0
      %v1111 = vadd.f32 %v327, %v1110
      %v1112 = vpop.f32.mrb[0].mxu0
      %v1113 = vadd.f32 %v331, %v1112
      %1114 = vmatprep.mubr.bf16.mxu0 %v758
      %1115 = vmatmul.mubr.bf16.gmra.mrb[0].mxu0 %v456
      %v1116 = vpop.f32.mrb[0].mxu0
      %v1117 = vadd.f32 %v327, %v1116
      %v1118 = vpop.f32.mrb[0].mxu0
      %v1119 = vadd.f32 %v331, %v1118
      %v1120 = vpop.f32.mrb[0].mxu0
      %v1121 = vadd.f32 %v327, %v1120
      %v1122 = vpop.f32.mrb[0].mxu0
      %v1123 = vadd.f32 %v331, %v1122
      %1124 = vmatprep.mubr.bf16.mxu0 %v761
      %1125 = vmatmul.mubr.bf16.gmra.mrb[0].mxu0 %v458
      %v1126 = vpop.f32.mrb[0].mxu0
      %v1127 = vadd.f32 %v327, %v1126
      %v1128 = vpop.f32.mrb[0].mxu0
      %v1129 = vadd.f32 %v331, %v1128
      %v1130 = vpop.f32.mrb[0].mxu0
      %v1131 = vadd.f32 %v327, %v1130
      %v1132 = vpop.f32.mrb[0].mxu0
      %v1133 = vadd.f32 %v331, %v1132
      %1134 = vmatprep.mubr.bf16.mxu0 %v764
      %1135 = vmatmul.mubr.bf16.gmra.mrb[0].mxu0 %v460
      %v1136 = vpop.f32.mrb[0].mxu0
      %v1137 = vadd.f32 %v327, %v1136
      %v1138 = vpop.f32.mrb[0].mxu0
      %v1139 = vadd.f32 %v331, %v1138
      %v1140 = vpop.f32.mrb[0].mxu0
      %v1141 = vadd.f32 %v327, %v1140
      %v1142 = vpop.f32.mrb[0].mxu0
      %v1143 = vadd.f32 %v331, %v1142
      %1144 = vmatprep.mubr.bf16.mxu0 %v767
      %1145 = vmatmul.mubr.bf16.gmra.mrb[0].mxu0 %v462
      %v1146 = vpop.f32.mrb[0].mxu0
      %v1147 = vadd.f32 %v327, %v1146
      %v1148 = vpop.f32.mrb[0].mxu0
      %v1149 = vadd.f32 %v331, %v1148
      %v1150 = vpop.f32.mrb[0].mxu0
      %v1151 = vadd.f32 %v327, %v1150
      %v1152 = vpop.f32.mrb[0].mxu0
      %v1153 = vadd.f32 %v331, %v1152
      %1154 = vdwg.mxu0
      %v1155 = vlaneseq
      %v1156 = vand.u32 %v1155, 127
      %v1157 = vadd.s32 %v1156, 128
      %v1158 = vadd.s32 %v1156, 256
      %v1159 = vadd.s32 %v1156, 384
      %v1160 = vmax.f32 %v804, %v806
      %v1161 = vmax.f32 %v1160, %v997
      %v1162 = vmax.f32 %v1161, %v999
      %1163 = vmax.xlane.f32.xlu0 %v1162
      %v1164 = vpop.xlane.xlu0 %1163
      %v1165 = vmax.f32 %v808, %v810
      %v1166 = vmax.f32 %v1165, %v1001
      %v1167 = vmax.f32 %v1166, %v1003
      %1168 = vmax.xlane.f32.xlu0 %v1167
      %v1169 = vpop.xlane.xlu0 %1168
      %v1170 = vmax.f32 %v814, %v816
      %v1171 = vmax.f32 %v1170, %v1007
      %v1172 = vmax.f32 %v1171, %v1009
      %1173 = vmax.xlane.f32.xlu0 %v1172
      %v1174 = vpop.xlane.xlu0 %1173
      %v1175 = vmax.f32 %v818, %v820
      %v1176 = vmax.f32 %v1175, %v1011
      %v1177 = vmax.f32 %v1176, %v1013
      %1178 = vmax.xlane.f32.xlu0 %v1177
      %v1179 = vpop.xlane.xlu0 %1178
      %v1180 = vmax.f32 %v824, %v826
      %v1181 = vmax.f32 %v1180, %v1017
      %v1182 = vmax.f32 %v1181, %v1019
      %1183 = vmax.xlane.f32.xlu0 %v1182
      %v1184 = vpop.xlane.xlu0 %1183
      %v1185 = vmax.f32 %v828, %v830
      %v1186 = vmax.f32 %v1185, %v1021
      %v1187 = vmax.f32 %v1186, %v1023
      %1188 = vmax.xlane.f32.xlu0 %v1187
      %v1189 = vpop.xlane.xlu0 %1188
      %v1190 = vmax.f32 %v834, %v836
      %v1191 = vmax.f32 %v1190, %v1027
      %v1192 = vmax.f32 %v1191, %v1029
      %1193 = vmax.xlane.f32.xlu0 %v1192
      %v1194 = vpop.xlane.xlu0 %1193
      %v1195 = vmax.f32 %v838, %v840
      %v1196 = vmax.f32 %v1195, %v1031
      %v1197 = vmax.f32 %v1196, %v1033
      %1198 = vmax.xlane.f32.xlu0 %v1197
      %v1199 = vpop.xlane.xlu0 %1198
      %v1200 = vmax.f32 %v844, %v846
      %v1201 = vmax.f32 %v1200, %v1037
      %v1202 = vmax.f32 %v1201, %v1039
      %1203 = vmax.xlane.f32.xlu0 %v1202
      %v1204 = vpop.xlane.xlu0 %1203
      %v1205 = vmax.f32 %v848, %v850
      %v1206 = vmax.f32 %v1205, %v1041
      %v1207 = vmax.f32 %v1206, %v1043
      %1208 = vmax.xlane.f32.xlu0 %v1207
      %v1209 = vpop.xlane.xlu0 %1208
      %v1210 = vmax.f32 %v854, %v856
      %v1211 = vmax.f32 %v1210, %v1047
      %v1212 = vmax.f32 %v1211, %v1049
      %1213 = vmax.xlane.f32.xlu0 %v1212
      %v1214 = vpop.xlane.xlu0 %1213
      %v1215 = vmax.f32 %v858, %v860
      %v1216 = vmax.f32 %v1215, %v1051
      %v1217 = vmax.f32 %v1216, %v1053
      %1218 = vmax.xlane.f32.xlu0 %v1217
      %v1219 = vpop.xlane.xlu0 %1218
      %v1220 = vmax.f32 %v864, %v866
      %v1221 = vmax.f32 %v1220, %v1057
      %v1222 = vmax.f32 %v1221, %v1059
      %1223 = vmax.xlane.f32.xlu0 %v1222
      %v1224 = vpop.xlane.xlu0 %1223
      %v1225 = vmax.f32 %v868, %v870
      %v1226 = vmax.f32 %v1225, %v1061
      %v1227 = vmax.f32 %v1226, %v1063
      %1228 = vmax.xlane.f32.xlu0 %v1227
      %v1229 = vpop.xlane.xlu0 %1228
      %v1230 = vmax.f32 %v874, %v876
      %v1231 = vmax.f32 %v1230, %v1067
      %v1232 = vmax.f32 %v1231, %v1069
      %1233 = vmax.xlane.f32.xlu0 %v1232
      %v1234 = vpop.xlane.xlu0 %1233
      %v1235 = vmax.f32 %v878, %v880
      %v1236 = vmax.f32 %v1235, %v1071
      %v1237 = vmax.f32 %v1236, %v1073
      %1238 = vmax.xlane.f32.xlu0 %v1237
      %v1239 = vpop.xlane.xlu0 %1238
      %v1240 = vmax.f32 %v884, %v886
      %v1241 = vmax.f32 %v1240, %v1077
      %v1242 = vmax.f32 %v1241, %v1079
      %1243 = vmax.xlane.f32.xlu0 %v1242
      %v1244 = vpop.xlane.xlu0 %1243
      %v1245 = vmax.f32 %v888, %v890
      %v1246 = vmax.f32 %v1245, %v1081
      %v1247 = vmax.f32 %v1246, %v1083
      %1248 = vmax.xlane.f32.xlu0 %v1247
      %v1249 = vpop.xlane.xlu0 %1248
      %v1250 = vmax.f32 %v894, %v896
      %v1251 = vmax.f32 %v1250, %v1087
      %v1252 = vmax.f32 %v1251, %v1089
      %1253 = vmax.xlane.f32.xlu0 %v1252
      %v1254 = vpop.xlane.xlu0 %1253
      %v1255 = vmax.f32 %v898, %v900
      %v1256 = vmax.f32 %v1255, %v1091
      %v1257 = vmax.f32 %v1256, %v1093
      %1258 = vmax.xlane.f32.xlu0 %v1257
      %v1259 = vpop.xlane.xlu0 %1258
      %v1260 = vmax.f32 %v904, %v906
      %v1261 = vmax.f32 %v1260, %v1097
      %v1262 = vmax.f32 %v1261, %v1099
      %1263 = vmax.xlane.f32.xlu0 %v1262
      %v1264 = vpop.xlane.xlu0 %1263
      %v1265 = vmax.f32 %v908, %v910
      %v1266 = vmax.f32 %v1265, %v1101
      %v1267 = vmax.f32 %v1266, %v1103
      %1268 = vmax.xlane.f32.xlu0 %v1267
      %v1269 = vpop.xlane.xlu0 %1268
      %v1270 = vmax.f32 %v914, %v916
      %v1271 = vmax.f32 %v1270, %v1107
      %v1272 = vmax.f32 %v1271, %v1109
      %1273 = vmax.xlane.f32.xlu0 %v1272
      %v1274 = vpop.xlane.xlu0 %1273
      %v1275 = vmax.f32 %v918, %v920
      %v1276 = vmax.f32 %v1275, %v1111
      %v1277 = vmax.f32 %v1276, %v1113
      %1278 = vmax.xlane.f32.xlu0 %v1277
      %v1279 = vpop.xlane.xlu0 %1278
      %v1280 = vmax.f32 %v924, %v926
      %v1281 = vmax.f32 %v1280, %v1117
      %v1282 = vmax.f32 %v1281, %v1119
      %1283 = vmax.xlane.f32.xlu0 %v1282
      %v1284 = vpop.xlane.xlu0 %1283
      %v1285 = vmax.f32 %v928, %v930
      %v1286 = vmax.f32 %v1285, %v1121
      %v1287 = vmax.f32 %v1286, %v1123
      %1288 = vmax.xlane.f32.xlu0 %v1287
      %v1289 = vpop.xlane.xlu0 %1288
      %v1290 = vmax.f32 %v934, %v936
      %v1291 = vmax.f32 %v1290, %v1127
      %v1292 = vmax.f32 %v1291, %v1129
      %1293 = vmax.xlane.f32.xlu0 %v1292
      %v1294 = vpop.xlane.xlu0 %1293
      %v1295 = vmax.f32 %v938, %v940
      %v1296 = vmax.f32 %v1295, %v1131
      %v1297 = vmax.f32 %v1296, %v1133
      %1298 = vmax.xlane.f32.xlu0 %v1297
      %v1299 = vpop.xlane.xlu0 %1298
      %v1300 = vmax.f32 %v944, %v946
      %v1301 = vmax.f32 %v1300, %v1137
      %v1302 = vmax.f32 %v1301, %v1139
      %1303 = vmax.xlane.f32.xlu0 %v1302
      %v1304 = vpop.xlane.xlu0 %1303
      %v1305 = vmax.f32 %v948, %v950
      %v1306 = vmax.f32 %v1305, %v1141
      %v1307 = vmax.f32 %v1306, %v1143
      %1308 = vmax.xlane.f32.xlu0 %v1307
      %v1309 = vpop.xlane.xlu0 %1308
      %v1310 = vmax.f32 %v954, %v956
      %v1311 = vmax.f32 %v1310, %v1147
      %v1312 = vmax.f32 %v1311, %v1149
      %1313 = vmax.xlane.f32.xlu0 %v1312
      %v1314 = vpop.xlane.xlu0 %1313
      %v1315 = vmax.f32 %v958, %v960
      %v1316 = vmax.f32 %v1315, %v1151
      %v1317 = vmax.f32 %v1316, %v1153
      %1318 = vmax.xlane.f32.xlu0 %v1317
      %v1319 = vpop.xlane.xlu0 %1318
      %vm1320 = vcmp.eq.f32.partialorder %v804, %v1164
      %vm1321 = vcmp.eq.f32.partialorder %v806, %v1164
      %vm1322 = vcmp.eq.f32.partialorder %v997, %v1164
      %vm1323 = vcmp.eq.f32.partialorder %v999, %v1164
      %vm1324 = vcmp.eq.f32.partialorder %v808, %v1169
      %vm1325 = vcmp.eq.f32.partialorder %v810, %v1169
      %vm1326 = vcmp.eq.f32.partialorder %v1001, %v1169
      %vm1327 = vcmp.eq.f32.partialorder %v1003, %v1169
      %vm1328 = vcmp.eq.f32.partialorder %v814, %v1174
      %vm1329 = vcmp.eq.f32.partialorder %v816, %v1174
      %vm1330 = vcmp.eq.f32.partialorder %v1007, %v1174
      %vm1331 = vcmp.eq.f32.partialorder %v1009, %v1174
      %vm1332 = vcmp.eq.f32.partialorder %v818, %v1179
      %vm1333 = vcmp.eq.f32.partialorder %v820, %v1179
      %vm1334 = vcmp.eq.f32.partialorder %v1011, %v1179
      %vm1335 = vcmp.eq.f32.partialorder %v1013, %v1179
      %vm1336 = vcmp.eq.f32.partialorder %v824, %v1184
      %vm1337 = vcmp.eq.f32.partialorder %v826, %v1184
      %vm1338 = vcmp.eq.f32.partialorder %v1017, %v1184
      %vm1339 = vcmp.eq.f32.partialorder %v1019, %v1184
      %vm1340 = vcmp.eq.f32.partialorder %v828, %v1189
      %vm1341 = vcmp.eq.f32.partialorder %v830, %v1189
      %vm1342 = vcmp.eq.f32.partialorder %v1021, %v1189
      %vm1343 = vcmp.eq.f32.partialorder %v1023, %v1189
      %vm1344 = vcmp.eq.f32.partialorder %v834, %v1194
      %vm1345 = vcmp.eq.f32.partialorder %v836, %v1194
      %vm1346 = vcmp.eq.f32.partialorder %v1027, %v1194
      %vm1347 = vcmp.eq.f32.partialorder %v1029, %v1194
      %vm1348 = vcmp.eq.f32.partialorder %v838, %v1199
      %vm1349 = vcmp.eq.f32.partialorder %v840, %v1199
      %vm1350 = vcmp.eq.f32.partialorder %v1031, %v1199
      %vm1351 = vcmp.eq.f32.partialorder %v1033, %v1199
      %vm1352 = vcmp.eq.f32.partialorder %v844, %v1204
      %vm1353 = vcmp.eq.f32.partialorder %v846, %v1204
      %vm1354 = vcmp.eq.f32.partialorder %v1037, %v1204
      %vm1355 = vcmp.eq.f32.partialorder %v1039, %v1204
      %vm1356 = vcmp.eq.f32.partialorder %v848, %v1209
      %vm1357 = vcmp.eq.f32.partialorder %v850, %v1209
      %vm1358 = vcmp.eq.f32.partialorder %v1041, %v1209
      %vm1359 = vcmp.eq.f32.partialorder %v1043, %v1209
      %vm1360 = vcmp.eq.f32.partialorder %v854, %v1214
      %vm1361 = vcmp.eq.f32.partialorder %v856, %v1214
      %vm1362 = vcmp.eq.f32.partialorder %v1047, %v1214
      %vm1363 = vcmp.eq.f32.partialorder %v1049, %v1214
      %vm1364 = vcmp.eq.f32.partialorder %v858, %v1219
      %vm1365 = vcmp.eq.f32.partialorder %v860, %v1219
      %vm1366 = vcmp.eq.f32.partialorder %v1051, %v1219
      %vm1367 = vcmp.eq.f32.partialorder %v1053, %v1219
      %vm1368 = vcmp.eq.f32.partialorder %v864, %v1224
      %vm1369 = vcmp.eq.f32.partialorder %v866, %v1224
      %vm1370 = vcmp.eq.f32.partialorder %v1057, %v1224
      %vm1371 = vcmp.eq.f32.partialorder %v1059, %v1224
      %vm1372 = vcmp.eq.f32.partialorder %v868, %v1229
      %vm1373 = vcmp.eq.f32.partialorder %v870, %v1229
      %vm1374 = vcmp.eq.f32.partialorder %v1061, %v1229
      %vm1375 = vcmp.eq.f32.partialorder %v1063, %v1229
      %vm1376 = vcmp.eq.f32.partialorder %v874, %v1234
      %vm1377 = vcmp.eq.f32.partialorder %v876, %v1234
      %vm1378 = vcmp.eq.f32.partialorder %v1067, %v1234
      %vm1379 = vcmp.eq.f32.partialorder %v1069, %v1234
      %vm1380 = vcmp.eq.f32.partialorder %v878, %v1239
      %vm1381 = vcmp.eq.f32.partialorder %v880, %v1239
      %vm1382 = vcmp.eq.f32.partialorder %v1071, %v1239
      %vm1383 = vcmp.eq.f32.partialorder %v1073, %v1239
      %vm1384 = vcmp.eq.f32.partialorder %v884, %v1244
      %vm1385 = vcmp.eq.f32.partialorder %v886, %v1244
      %vm1386 = vcmp.eq.f32.partialorder %v1077, %v1244
      %vm1387 = vcmp.eq.f32.partialorder %v1079, %v1244
      %vm1388 = vcmp.eq.f32.partialorder %v888, %v1249
      %vm1389 = vcmp.eq.f32.partialorder %v890, %v1249
      %vm1390 = vcmp.eq.f32.partialorder %v1081, %v1249
      %vm1391 = vcmp.eq.f32.partialorder %v1083, %v1249
      %vm1392 = vcmp.eq.f32.partialorder %v894, %v1254
      %vm1393 = vcmp.eq.f32.partialorder %v896, %v1254
      %vm1394 = vcmp.eq.f32.partialorder %v1087, %v1254
      %vm1395 = vcmp.eq.f32.partialorder %v1089, %v1254
      %vm1396 = vcmp.eq.f32.partialorder %v898, %v1259
      %vm1397 = vcmp.eq.f32.partialorder %v900, %v1259
      %vm1398 = vcmp.eq.f32.partialorder %v1091, %v1259
      %vm1399 = vcmp.eq.f32.partialorder %v1093, %v1259
      %vm1400 = vcmp.eq.f32.partialorder %v904, %v1264
      %vm1401 = vcmp.eq.f32.partialorder %v906, %v1264
      %vm1402 = vcmp.eq.f32.partialorder %v1097, %v1264
      %vm1403 = vcmp.eq.f32.partialorder %v1099, %v1264
      %vm1404 = vcmp.eq.f32.partialorder %v908, %v1269
      %vm1405 = vcmp.eq.f32.partialorder %v910, %v1269
      %vm1406 = vcmp.eq.f32.partialorder %v1101, %v1269
      %vm1407 = vcmp.eq.f32.partialorder %v1103, %v1269
      %vm1408 = vcmp.eq.f32.partialorder %v914, %v1274
      %vm1409 = vcmp.eq.f32.partialorder %v916, %v1274
      %vm1410 = vcmp.eq.f32.partialorder %v1107, %v1274
      %vm1411 = vcmp.eq.f32.partialorder %v1109, %v1274
      %vm1412 = vcmp.eq.f32.partialorder %v918, %v1279
      %vm1413 = vcmp.eq.f32.partialorder %v920, %v1279
      %vm1414 = vcmp.eq.f32.partialorder %v1111, %v1279
      %vm1415 = vcmp.eq.f32.partialorder %v1113, %v1279
      %vm1416 = vcmp.eq.f32.partialorder %v924, %v1284
      %vm1417 = vcmp.eq.f32.partialorder %v926, %v1284
      %vm1418 = vcmp.eq.f32.partialorder %v1117, %v1284
      %vm1419 = vcmp.eq.f32.partialorder %v1119, %v1284
      %vm1420 = vcmp.eq.f32.partialorder %v928, %v1289
      %vm1421 = vcmp.eq.f32.partialorder %v930, %v1289
      %vm1422 = vcmp.eq.f32.partialorder %v1121, %v1289
      %vm1423 = vcmp.eq.f32.partialorder %v1123, %v1289
      %vm1424 = vcmp.eq.f32.partialorder %v934, %v1294
      %vm1425 = vcmp.eq.f32.partialorder %v936, %v1294
      %vm1426 = vcmp.eq.f32.partialorder %v1127, %v1294
      %vm1427 = vcmp.eq.f32.partialorder %v1129, %v1294
      %vm1428 = vcmp.eq.f32.partialorder %v938, %v1299
      %vm1429 = vcmp.eq.f32.partialorder %v940, %v1299
      %vm1430 = vcmp.eq.f32.partialorder %v1131, %v1299
      %vm1431 = vcmp.eq.f32.partialorder %v1133, %v1299
      %vm1432 = vcmp.eq.f32.partialorder %v944, %v1304
      %vm1433 = vcmp.eq.f32.partialorder %v946, %v1304
      %vm1434 = vcmp.eq.f32.partialorder %v1137, %v1304
      %vm1435 = vcmp.eq.f32.partialorder %v1139, %v1304
      %vm1436 = vcmp.eq.f32.partialorder %v948, %v1309
      %vm1437 = vcmp.eq.f32.partialorder %v950, %v1309
      %vm1438 = vcmp.eq.f32.partialorder %v1141, %v1309
      %vm1439 = vcmp.eq.f32.partialorder %v1143, %v1309
      %vm1440 = vcmp.eq.f32.partialorder %v954, %v1314
      %vm1441 = vcmp.eq.f32.partialorder %v956, %v1314
      %vm1442 = vcmp.eq.f32.partialorder %v1147, %v1314
      %vm1443 = vcmp.eq.f32.partialorder %v1149, %v1314
      %vm1444 = vcmp.eq.f32.partialorder %v958, %v1319
      %vm1445 = vcmp.eq.f32.partialorder %v960, %v1319
      %vm1446 = vcmp.eq.f32.partialorder %v1151, %v1319
      %vm1447 = vcmp.eq.f32.partialorder %v1153, %v1319
      %v1448 = vsel %vm1320, %v1156, 512
      %v1449 = vsel %vm1321, %v1157, 512
      %v1450 = vsel %vm1322, %v1158, 512
      %v1451 = vsel %vm1323, %v1159, 512
      %v1452 = vsel %vm1324, %v1156, 512
      %v1453 = vsel %vm1325, %v1157, 512
      %v1454 = vsel %vm1326, %v1158, 512
      %v1455 = vsel %vm1327, %v1159, 512
      %v1456 = vsel %vm1328, %v1156, 512
      %v1457 = vsel %vm1329, %v1157, 512
      %v1458 = vsel %vm1330, %v1158, 512
      %v1459 = vsel %vm1331, %v1159, 512
      %v1460 = vsel %vm1332, %v1156, 512
      %v1461 = vsel %vm1333, %v1157, 512
      %v1462 = vsel %vm1334, %v1158, 512
      %v1463 = vsel %vm1335, %v1159, 512
      %v1464 = vsel %vm1336, %v1156, 512
      %v1465 = vsel %vm1337, %v1157, 512
      %v1466 = vsel %vm1338, %v1158, 512
      %v1467 = vsel %vm1339, %v1159, 512
      %v1468 = vsel %vm1340, %v1156, 512
      %v1469 = vsel %vm1341, %v1157, 512
      %v1470 = vsel %vm1342, %v1158, 512
      %v1471 = vsel %vm1343, %v1159, 512
      %v1472 = vsel %vm1344, %v1156, 512
      %v1473 = vsel %vm1345, %v1157, 512
      %v1474 = vsel %vm1346, %v1158, 512
      %v1475 = vsel %vm1347, %v1159, 512
      %v1476 = vsel %vm1348, %v1156, 512
      %v1477 = vsel %vm1349, %v1157, 512
      %v1478 = vsel %vm1350, %v1158, 512
      %v1479 = vsel %vm1351, %v1159, 512
      %v1480 = vsel %vm1352, %v1156, 512
      %v1481 = vsel %vm1353, %v1157, 512
      %v1482 = vsel %vm1354, %v1158, 512
      %v1483 = vsel %vm1355, %v1159, 512
      %v1484 = vsel %vm1356, %v1156, 512
      %v1485 = vsel %vm1357, %v1157, 512
      %v1486 = vsel %vm1358, %v1158, 512
      %v1487 = vsel %vm1359, %v1159, 512
      %v1488 = vsel %vm1360, %v1156, 512
      %v1489 = vsel %vm1361, %v1157, 512
      %v1490 = vsel %vm1362, %v1158, 512
      %v1491 = vsel %vm1363, %v1159, 512
      %v1492 = vsel %vm1364, %v1156, 512
      %v1493 = vsel %vm1365, %v1157, 512
      %v1494 = vsel %vm1366, %v1158, 512
      %v1495 = vsel %vm1367, %v1159, 512
      %v1496 = vsel %vm1368, %v1156, 512
      %v1497 = vsel %vm1369, %v1157, 512
      %v1498 = vsel %vm1370, %v1158, 512
      %v1499 = vsel %vm1371, %v1159, 512
      %v1500 = vsel %vm1372, %v1156, 512
      %v1501 = vsel %vm1373, %v1157, 512
      %v1502 = vsel %vm1374, %v1158, 512
      %v1503 = vsel %vm1375, %v1159, 512
      %v1504 = vsel %vm1376, %v1156, 512
      %v1505 = vsel %vm1377, %v1157, 512
      %v1506 = vsel %vm1378, %v1158, 512
      %v1507 = vsel %vm1379, %v1159, 512
      %v1508 = vsel %vm1380, %v1156, 512
      %v1509 = vsel %vm1381, %v1157, 512
      %v1510 = vsel %vm1382, %v1158, 512
      %v1511 = vsel %vm1383, %v1159, 512
      %v1512 = vsel %vm1384, %v1156, 512
      %v1513 = vsel %vm1385, %v1157, 512
      %v1514 = vsel %vm1386, %v1158, 512
      %v1515 = vsel %vm1387, %v1159, 512
      %v1516 = vsel %vm1388, %v1156, 512
      %v1517 = vsel %vm1389, %v1157, 512
      %v1518 = vsel %vm1390, %v1158, 512
      %v1519 = vsel %vm1391, %v1159, 512
      %v1520 = vsel %vm1392, %v1156, 512
      %v1521 = vsel %vm1393, %v1157, 512
      %v1522 = vsel %vm1394, %v1158, 512
      %v1523 = vsel %vm1395, %v1159, 512
      %v1524 = vsel %vm1396, %v1156, 512
      %v1525 = vsel %vm1397, %v1157, 512
      %v1526 = vsel %vm1398, %v1158, 512
      %v1527 = vsel %vm1399, %v1159, 512
      %v1528 = vsel %vm1400, %v1156, 512
      %v1529 = vsel %vm1401, %v1157, 512
      %v1530 = vsel %vm1402, %v1158, 512
      %v1531 = vsel %vm1403, %v1159, 512
      %v1532 = vsel %vm1404, %v1156, 512
      %v1533 = vsel %vm1405, %v1157, 512
      %v1534 = vsel %vm1406, %v1158, 512
      %v1535 = vsel %vm1407, %v1159, 512
      %v1536 = vsel %vm1408, %v1156, 512
      %v1537 = vsel %vm1409, %v1157, 512
      %v1538 = vsel %vm1410, %v1158, 512
      %v1539 = vsel %vm1411, %v1159, 512
      %v1540 = vsel %vm1412, %v1156, 512
      %v1541 = vsel %vm1413, %v1157, 512
      %v1542 = vsel %vm1414, %v1158, 512
      %v1543 = vsel %vm1415, %v1159, 512
      %v1544 = vsel %vm1416, %v1156, 512
      %v1545 = vsel %vm1417, %v1157, 512
      %v1546 = vsel %vm1418, %v1158, 512
      %v1547 = vsel %vm1419, %v1159, 512
      %v1548 = vsel %vm1420, %v1156, 512
      %v1549 = vsel %vm1421, %v1157, 512
      %v1550 = vsel %vm1422, %v1158, 512
      %v1551 = vsel %vm1423, %v1159, 512
      %v1552 = vsel %vm1424, %v1156, 512
      %v1553 = vsel %vm1425, %v1157, 512
      %v1554 = vsel %vm1426, %v1158, 512
      %v1555 = vsel %vm1427, %v1159, 512
      %v1556 = vsel %vm1428, %v1156, 512
      %v1557 = vsel %vm1429, %v1157, 512
      %v1558 = vsel %vm1430, %v1158, 512
      %v1559 = vsel %vm1431, %v1159, 512
      %v1560 = vsel %vm1432, %v1156, 512
      %v1561 = vsel %vm1433, %v1157, 512
      %v1562 = vsel %vm1434, %v1158, 512
      %v1563 = vsel %vm1435, %v1159, 512
      %v1564 = vsel %vm1436, %v1156, 512
      %v1565 = vsel %vm1437, %v1157, 512
      %v1566 = vsel %vm1438, %v1158, 512
      %v1567 = vsel %vm1439, %v1159, 512
      %v1568 = vsel %vm1440, %v1156, 512
      %v1569 = vsel %vm1441, %v1157, 512
      %v1570 = vsel %vm1442, %v1158, 512
      %v1571 = vsel %vm1443, %v1159, 512
      %v1572 = vsel %vm1444, %v1156, 512
      %v1573 = vsel %vm1445, %v1157, 512
      %v1574 = vsel %vm1446, %v1158, 512
      %v1575 = vsel %vm1447, %v1159, 512
      %vm1576 = vcmp.lt.s32.totalorder %v1448, %v1449
      %v1577 = vsel %vm1576, %v1448, %v1449
      %vm1578 = vcmp.lt.s32.totalorder %v1577, %v1450
      %v1579 = vsel %vm1578, %v1577, %v1450
      %vm1580 = vcmp.lt.s32.totalorder %v1579, %v1451
      %v1581 = vsel %vm1580, %v1579, %v1451
      %v1582 = vand.u32 %v1581, 65535
      %v1583 = vshra.s32 %v1581, 16
      %v1584 = vcvt.s32.f32 %v1582
      %v1585 = vcvt.s32.f32 %v1583
      %1586 = vmin.xlane.f32.xlu0 %v1585
      %v1587 = vpop.xlane.xlu0 %1586
      %vm1588 = vcmp.eq.f32.partialorder %v1585, %v1587
      %v1589 = vsel %vm1588, %v1584, inf
      %1590 = vmin.xlane.f32.xlu0 %v1589
      %v1591 = vpop.xlane.xlu0 %1590
      %v1592 = vcvt.f32.s32 %v1591
      %v1593 = vcvt.f32.s32 %v1587
      %v1594 = vshll.u32 %v1593, 16
      %v1595 = vadd.s32 %v1594, %v1592
      %vm1596 = vcmp.lt.s32.totalorder %v1452, %v1453
      %v1597 = vsel %vm1596, %v1452, %v1453
      %vm1598 = vcmp.lt.s32.totalorder %v1597, %v1454
      %v1599 = vsel %vm1598, %v1597, %v1454
      %vm1600 = vcmp.lt.s32.totalorder %v1599, %v1455
      %v1601 = vsel %vm1600, %v1599, %v1455
      %v1602 = vand.u32 %v1601, 65535
      %v1603 = vshra.s32 %v1601, 16
      %v1604 = vcvt.s32.f32 %v1602
      %v1605 = vcvt.s32.f32 %v1603
      %1606 = vmin.xlane.f32.xlu0 %v1605
      %v1607 = vpop.xlane.xlu0 %1606
      %vm1608 = vcmp.eq.f32.partialorder %v1605, %v1607
      %v1609 = vsel %vm1608, %v1604, inf
      %1610 = vmin.xlane.f32.xlu0 %v1609
      %v1611 = vpop.xlane.xlu0 %1610
      %v1612 = vcvt.f32.s32 %v1611
      %v1613 = vcvt.f32.s32 %v1607
      %v1614 = vshll.u32 %v1613, 16
      %v1615 = vadd.s32 %v1614, %v1612
      %vm1616 = vcmp.lt.s32.totalorder %v1456, %v1457
      %v1617 = vsel %vm1616, %v1456, %v1457
      %vm1618 = vcmp.lt.s32.totalorder %v1617, %v1458
      %v1619 = vsel %vm1618, %v1617, %v1458
      %vm1620 = vcmp.lt.s32.totalorder %v1619, %v1459
      %v1621 = vsel %vm1620, %v1619, %v1459
      %v1622 = vand.u32 %v1621, 65535
      %v1623 = vshra.s32 %v1621, 16
      %v1624 = vcvt.s32.f32 %v1622
      %v1625 = vcvt.s32.f32 %v1623
      %1626 = vmin.xlane.f32.xlu0 %v1625
      %v1627 = vpop.xlane.xlu0 %1626
      %vm1628 = vcmp.eq.f32.partialorder %v1625, %v1627
      %v1629 = vsel %vm1628, %v1624, inf
      %1630 = vmin.xlane.f32.xlu0 %v1629
      %v1631 = vpop.xlane.xlu0 %1630
      %v1632 = vcvt.f32.s32 %v1631
      %v1633 = vcvt.f32.s32 %v1627
      %v1634 = vshll.u32 %v1633, 16
      %v1635 = vadd.s32 %v1634, %v1632
      %vm1636 = vcmp.lt.s32.totalorder %v1460, %v1461
      %v1637 = vsel %vm1636, %v1460, %v1461
      %vm1638 = vcmp.lt.s32.totalorder %v1637, %v1462
      %v1639 = vsel %vm1638, %v1637, %v1462
      %vm1640 = vcmp.lt.s32.totalorder %v1639, %v1463
      %v1641 = vsel %vm1640, %v1639, %v1463
      %v1642 = vand.u32 %v1641, 65535
      %v1643 = vshra.s32 %v1641, 16
      %v1644 = vcvt.s32.f32 %v1642
      %v1645 = vcvt.s32.f32 %v1643
      %1646 = vmin.xlane.f32.xlu0 %v1645
      %v1647 = vpop.xlane.xlu0 %1646
      %vm1648 = vcmp.eq.f32.partialorder %v1645, %v1647
      %v1649 = vsel %vm1648, %v1644, inf
      %1650 = vmin.xlane.f32.xlu0 %v1649
      %v1651 = vpop.xlane.xlu0 %1650
      %v1652 = vcvt.f32.s32 %v1651
      %v1653 = vcvt.f32.s32 %v1647
      %v1654 = vshll.u32 %v1653, 16
      %v1655 = vadd.s32 %v1654, %v1652
      %vm1656 = vcmp.lt.s32.totalorder %v1464, %v1465
      %v1657 = vsel %vm1656, %v1464, %v1465
      %vm1658 = vcmp.lt.s32.totalorder %v1657, %v1466
      %v1659 = vsel %vm1658, %v1657, %v1466
      %vm1660 = vcmp.lt.s32.totalorder %v1659, %v1467
      %v1661 = vsel %vm1660, %v1659, %v1467
      %v1662 = vand.u32 %v1661, 65535
      %v1663 = vshra.s32 %v1661, 16
      %v1664 = vcvt.s32.f32 %v1662
      %v1665 = vcvt.s32.f32 %v1663
      %1666 = vmin.xlane.f32.xlu0 %v1665
      %v1667 = vpop.xlane.xlu0 %1666
      %vm1668 = vcmp.eq.f32.partialorder %v1665, %v1667
      %v1669 = vsel %vm1668, %v1664, inf
      %1670 = vmin.xlane.f32.xlu0 %v1669
      %v1671 = vpop.xlane.xlu0 %1670
      %v1672 = vcvt.f32.s32 %v1671
      %v1673 = vcvt.f32.s32 %v1667
      %v1674 = vshll.u32 %v1673, 16
      %v1675 = vadd.s32 %v1674, %v1672
      %vm1676 = vcmp.lt.s32.totalorder %v1468, %v1469
      %v1677 = vsel %vm1676, %v1468, %v1469
      %vm1678 = vcmp.lt.s32.totalorder %v1677, %v1470
      %v1679 = vsel %vm1678, %v1677, %v1470
      %vm1680 = vcmp.lt.s32.totalorder %v1679, %v1471
      %v1681 = vsel %vm1680, %v1679, %v1471
      %v1682 = vand.u32 %v1681, 65535
      %v1683 = vshra.s32 %v1681, 16
      %v1684 = vcvt.s32.f32 %v1682
      %v1685 = vcvt.s32.f32 %v1683
      %1686 = vmin.xlane.f32.xlu0 %v1685
      %v1687 = vpop.xlane.xlu0 %1686
      %vm1688 = vcmp.eq.f32.partialorder %v1685, %v1687
      %v1689 = vsel %vm1688, %v1684, inf
      %1690 = vmin.xlane.f32.xlu0 %v1689
      %v1691 = vpop.xlane.xlu0 %1690
      %v1692 = vcvt.f32.s32 %v1691
      %v1693 = vcvt.f32.s32 %v1687
      %v1694 = vshll.u32 %v1693, 16
      %v1695 = vadd.s32 %v1694, %v1692
      %vm1696 = vcmp.lt.s32.totalorder %v1472, %v1473
      %v1697 = vsel %vm1696, %v1472, %v1473
      %vm1698 = vcmp.lt.s32.totalorder %v1697, %v1474
      %v1699 = vsel %vm1698, %v1697, %v1474
      %vm1700 = vcmp.lt.s32.totalorder %v1699, %v1475
      %v1701 = vsel %vm1700, %v1699, %v1475
      %v1702 = vand.u32 %v1701, 65535
      %v1703 = vshra.s32 %v1701, 16
      %v1704 = vcvt.s32.f32 %v1702
      %v1705 = vcvt.s32.f32 %v1703
      %1706 = vmin.xlane.f32.xlu0 %v1705
      %v1707 = vpop.xlane.xlu0 %1706
      %vm1708 = vcmp.eq.f32.partialorder %v1705, %v1707
      %v1709 = vsel %vm1708, %v1704, inf
      %1710 = vmin.xlane.f32.xlu0 %v1709
      %v1711 = vpop.xlane.xlu0 %1710
      %v1712 = vcvt.f32.s32 %v1711
      %v1713 = vcvt.f32.s32 %v1707
      %v1714 = vshll.u32 %v1713, 16
      %v1715 = vadd.s32 %v1714, %v1712
      %vm1716 = vcmp.lt.s32.totalorder %v1476, %v1477
      %v1717 = vsel %vm1716, %v1476, %v1477
      %vm1718 = vcmp.lt.s32.totalorder %v1717, %v1478
      %v1719 = vsel %vm1718, %v1717, %v1478
      %vm1720 = vcmp.lt.s32.totalorder %v1719, %v1479
      %v1721 = vsel %vm1720, %v1719, %v1479
      %v1722 = vand.u32 %v1721, 65535
      %v1723 = vshra.s32 %v1721, 16
      %v1724 = vcvt.s32.f32 %v1722
      %v1725 = vcvt.s32.f32 %v1723
      %1726 = vmin.xlane.f32.xlu0 %v1725
      %v1727 = vpop.xlane.xlu0 %1726
      %vm1728 = vcmp.eq.f32.partialorder %v1725, %v1727
      %v1729 = vsel %vm1728, %v1724, inf
      %1730 = vmin.xlane.f32.xlu0 %v1729
      %v1731 = vpop.xlane.xlu0 %1730
      %v1732 = vcvt.f32.s32 %v1731
      %v1733 = vcvt.f32.s32 %v1727
      %v1734 = vshll.u32 %v1733, 16
      %v1735 = vadd.s32 %v1734, %v1732
      %vm1736 = vcmp.lt.s32.totalorder %v1480, %v1481
      %v1737 = vsel %vm1736, %v1480, %v1481
      %vm1738 = vcmp.lt.s32.totalorder %v1737, %v1482
      %v1739 = vsel %vm1738, %v1737, %v1482
      %vm1740 = vcmp.lt.s32.totalorder %v1739, %v1483
      %v1741 = vsel %vm1740, %v1739, %v1483
      %v1742 = vand.u32 %v1741, 65535
      %v1743 = vshra.s32 %v1741, 16
      %v1744 = vcvt.s32.f32 %v1742
      %v1745 = vcvt.s32.f32 %v1743
      %1746 = vmin.xlane.f32.xlu0 %v1745
      %v1747 = vpop.xlane.xlu0 %1746
      %vm1748 = vcmp.eq.f32.partialorder %v1745, %v1747
      %v1749 = vsel %vm1748, %v1744, inf
      %1750 = vmin.xlane.f32.xlu0 %v1749
      %v1751 = vpop.xlane.xlu0 %1750
      %v1752 = vcvt.f32.s32 %v1751
      %v1753 = vcvt.f32.s32 %v1747
      %v1754 = vshll.u32 %v1753, 16
      %v1755 = vadd.s32 %v1754, %v1752
      %vm1756 = vcmp.lt.s32.totalorder %v1484, %v1485
      %v1757 = vsel %vm1756, %v1484, %v1485
      %vm1758 = vcmp.lt.s32.totalorder %v1757, %v1486
      %v1759 = vsel %vm1758, %v1757, %v1486
      %vm1760 = vcmp.lt.s32.totalorder %v1759, %v1487
      %v1761 = vsel %vm1760, %v1759, %v1487
      %v1762 = vand.u32 %v1761, 65535
      %v1763 = vshra.s32 %v1761, 16
      %v1764 = vcvt.s32.f32 %v1762
      %v1765 = vcvt.s32.f32 %v1763
      %1766 = vmin.xlane.f32.xlu0 %v1765
      %v1767 = vpop.xlane.xlu0 %1766
      %vm1768 = vcmp.eq.f32.partialorder %v1765, %v1767
      %v1769 = vsel %vm1768, %v1764, inf
      %1770 = vmin.xlane.f32.xlu0 %v1769
      %v1771 = vpop.xlane.xlu0 %1770
      %v1772 = vcvt.f32.s32 %v1771
      %v1773 = vcvt.f32.s32 %v1767
      %v1774 = vshll.u32 %v1773, 16
      %v1775 = vadd.s32 %v1774, %v1772
      %vm1776 = vcmp.lt.s32.totalorder %v1488, %v1489
      %v1777 = vsel %vm1776, %v1488, %v1489
      %vm1778 = vcmp.lt.s32.totalorder %v1777, %v1490
      %v1779 = vsel %vm1778, %v1777, %v1490
      %vm1780 = vcmp.lt.s32.totalorder %v1779, %v1491
      %v1781 = vsel %vm1780, %v1779, %v1491
      %v1782 = vand.u32 %v1781, 65535
      %v1783 = vshra.s32 %v1781, 16
      %v1784 = vcvt.s32.f32 %v1782
      %v1785 = vcvt.s32.f32 %v1783
      %1786 = vmin.xlane.f32.xlu0 %v1785
      %v1787 = vpop.xlane.xlu0 %1786
      %vm1788 = vcmp.eq.f32.partialorder %v1785, %v1787
      %v1789 = vsel %vm1788, %v1784, inf
      %1790 = vmin.xlane.f32.xlu0 %v1789
      %v1791 = vpop.xlane.xlu0 %1790
      %v1792 = vcvt.f32.s32 %v1791
      %v1793 = vcvt.f32.s32 %v1787
      %v1794 = vshll.u32 %v1793, 16
      %v1795 = vadd.s32 %v1794, %v1792
      %vm1796 = vcmp.lt.s32.totalorder %v1492, %v1493
      %v1797 = vsel %vm1796, %v1492, %v1493
      %vm1798 = vcmp.lt.s32.totalorder %v1797, %v1494
      %v1799 = vsel %vm1798, %v1797, %v1494
      %vm1800 = vcmp.lt.s32.totalorder %v1799, %v1495
      %v1801 = vsel %vm1800, %v1799, %v1495
      %v1802 = vand.u32 %v1801, 65535
      %v1803 = vshra.s32 %v1801, 16
      %v1804 = vcvt.s32.f32 %v1802
      %v1805 = vcvt.s32.f32 %v1803
      %1806 = vmin.xlane.f32.xlu0 %v1805
      %v1807 = vpop.xlane.xlu0 %1806
      %vm1808 = vcmp.eq.f32.partialorder %v1805, %v1807
      %v1809 = vsel %vm1808, %v1804, inf
      %1810 = vmin.xlane.f32.xlu0 %v1809
      %v1811 = vpop.xlane.xlu0 %1810
      %v1812 = vcvt.f32.s32 %v1811
      %v1813 = vcvt.f32.s32 %v1807
      %v1814 = vshll.u32 %v1813, 16
      %v1815 = vadd.s32 %v1814, %v1812
      %vm1816 = vcmp.lt.s32.totalorder %v1496, %v1497
      %v1817 = vsel %vm1816, %v1496, %v1497
      %vm1818 = vcmp.lt.s32.totalorder %v1817, %v1498
      %v1819 = vsel %vm1818, %v1817, %v1498
      %vm1820 = vcmp.lt.s32.totalorder %v1819, %v1499
      %v1821 = vsel %vm1820, %v1819, %v1499
      %v1822 = vand.u32 %v1821, 65535
      %v1823 = vshra.s32 %v1821, 16
      %v1824 = vcvt.s32.f32 %v1822
      %v1825 = vcvt.s32.f32 %v1823
      %1826 = vmin.xlane.f32.xlu0 %v1825
      %v1827 = vpop.xlane.xlu0 %1826
      %vm1828 = vcmp.eq.f32.partialorder %v1825, %v1827
      %v1829 = vsel %vm1828, %v1824, inf
      %1830 = vmin.xlane.f32.xlu0 %v1829
      %v1831 = vpop.xlane.xlu0 %1830
      %v1832 = vcvt.f32.s32 %v1831
      %v1833 = vcvt.f32.s32 %v1827
      %v1834 = vshll.u32 %v1833, 16
      %v1835 = vadd.s32 %v1834, %v1832
      %vm1836 = vcmp.lt.s32.totalorder %v1500, %v1501
      %v1837 = vsel %vm1836, %v1500, %v1501
      %vm1838 = vcmp.lt.s32.totalorder %v1837, %v1502
      %v1839 = vsel %vm1838, %v1837, %v1502
      %vm1840 = vcmp.lt.s32.totalorder %v1839, %v1503
      %v1841 = vsel %vm1840, %v1839, %v1503
      %v1842 = vand.u32 %v1841, 65535
      %v1843 = vshra.s32 %v1841, 16
      %v1844 = vcvt.s32.f32 %v1842
      %v1845 = vcvt.s32.f32 %v1843
      %1846 = vmin.xlane.f32.xlu0 %v1845
      %v1847 = vpop.xlane.xlu0 %1846
      %vm1848 = vcmp.eq.f32.partialorder %v1845, %v1847
      %v1849 = vsel %vm1848, %v1844, inf
      %1850 = vmin.xlane.f32.xlu0 %v1849
      %v1851 = vpop.xlane.xlu0 %1850
      %v1852 = vcvt.f32.s32 %v1851
      %v1853 = vcvt.f32.s32 %v1847
      %v1854 = vshll.u32 %v1853, 16
      %v1855 = vadd.s32 %v1854, %v1852
      %vm1856 = vcmp.lt.s32.totalorder %v1504, %v1505
      %v1857 = vsel %vm1856, %v1504, %v1505
      %vm1858 = vcmp.lt.s32.totalorder %v1857, %v1506
      %v1859 = vsel %vm1858, %v1857, %v1506
      %vm1860 = vcmp.lt.s32.totalorder %v1859, %v1507
      %v1861 = vsel %vm1860, %v1859, %v1507
      %v1862 = vand.u32 %v1861, 65535
      %v1863 = vshra.s32 %v1861, 16
      %v1864 = vcvt.s32.f32 %v1862
      %v1865 = vcvt.s32.f32 %v1863
      %1866 = vmin.xlane.f32.xlu0 %v1865
      %v1867 = vpop.xlane.xlu0 %1866
      %vm1868 = vcmp.eq.f32.partialorder %v1865, %v1867
      %v1869 = vsel %vm1868, %v1864, inf
      %1870 = vmin.xlane.f32.xlu0 %v1869
      %v1871 = vpop.xlane.xlu0 %1870
      %v1872 = vcvt.f32.s32 %v1871
      %v1873 = vcvt.f32.s32 %v1867
      %v1874 = vshll.u32 %v1873, 16
      %v1875 = vadd.s32 %v1874, %v1872
      %vm1876 = vcmp.lt.s32.totalorder %v1508, %v1509
      %v1877 = vsel %vm1876, %v1508, %v1509
      %vm1878 = vcmp.lt.s32.totalorder %v1877, %v1510
      %v1879 = vsel %vm1878, %v1877, %v1510
      %vm1880 = vcmp.lt.s32.totalorder %v1879, %v1511
      %v1881 = vsel %vm1880, %v1879, %v1511
      %v1882 = vand.u32 %v1881, 65535
      %v1883 = vshra.s32 %v1881, 16
      %v1884 = vcvt.s32.f32 %v1882
      %v1885 = vcvt.s32.f32 %v1883
      %1886 = vmin.xlane.f32.xlu0 %v1885
      %v1887 = vpop.xlane.xlu0 %1886
      %vm1888 = vcmp.eq.f32.partialorder %v1885, %v1887
      %v1889 = vsel %vm1888, %v1884, inf
      %1890 = vmin.xlane.f32.xlu0 %v1889
      %v1891 = vpop.xlane.xlu0 %1890
      %v1892 = vcvt.f32.s32 %v1891
      %v1893 = vcvt.f32.s32 %v1887
      %v1894 = vshll.u32 %v1893, 16
      %v1895 = vadd.s32 %v1894, %v1892
      %vm1896 = vcmp.lt.s32.totalorder %v1512, %v1513
      %v1897 = vsel %vm1896, %v1512, %v1513
      %vm1898 = vcmp.lt.s32.totalorder %v1897, %v1514
      %v1899 = vsel %vm1898, %v1897, %v1514
      %vm1900 = vcmp.lt.s32.totalorder %v1899, %v1515
      %v1901 = vsel %vm1900, %v1899, %v1515
      %v1902 = vand.u32 %v1901, 65535
      %v1903 = vshra.s32 %v1901, 16
      %v1904 = vcvt.s32.f32 %v1902
      %v1905 = vcvt.s32.f32 %v1903
      %1906 = vmin.xlane.f32.xlu0 %v1905
      %v1907 = vpop.xlane.xlu0 %1906
      %vm1908 = vcmp.eq.f32.partialorder %v1905, %v1907
      %v1909 = vsel %vm1908, %v1904, inf
      %1910 = vmin.xlane.f32.xlu0 %v1909
      %v1911 = vpop.xlane.xlu0 %1910
      %v1912 = vcvt.f32.s32 %v1911
      %v1913 = vcvt.f32.s32 %v1907
      %v1914 = vshll.u32 %v1913, 16
      %v1915 = vadd.s32 %v1914, %v1912
      %vm1916 = vcmp.lt.s32.totalorder %v1516, %v1517
      %v1917 = vsel %vm1916, %v1516, %v1517
      %vm1918 = vcmp.lt.s32.totalorder %v1917, %v1518
      %v1919 = vsel %vm1918, %v1917, %v1518
      %vm1920 = vcmp.lt.s32.totalorder %v1919, %v1519
      %v1921 = vsel %vm1920, %v1919, %v1519
      %v1922 = vand.u32 %v1921, 65535
      %v1923 = vshra.s32 %v1921, 16
      %v1924 = vcvt.s32.f32 %v1922
      %v1925 = vcvt.s32.f32 %v1923
      %1926 = vmin.xlane.f32.xlu0 %v1925
      %v1927 = vpop.xlane.xlu0 %1926
      %vm1928 = vcmp.eq.f32.partialorder %v1925, %v1927
      %v1929 = vsel %vm1928, %v1924, inf
      %1930 = vmin.xlane.f32.xlu0 %v1929
      %v1931 = vpop.xlane.xlu0 %1930
      %v1932 = vcvt.f32.s32 %v1931
      %v1933 = vcvt.f32.s32 %v1927
      %v1934 = vshll.u32 %v1933, 16
      %v1935 = vadd.s32 %v1934, %v1932
      %vm1936 = vcmp.lt.s32.totalorder %v1520, %v1521
      %v1937 = vsel %vm1936, %v1520, %v1521
      %vm1938 = vcmp.lt.s32.totalorder %v1937, %v1522
      %v1939 = vsel %vm1938, %v1937, %v1522
      %vm1940 = vcmp.lt.s32.totalorder %v1939, %v1523
      %v1941 = vsel %vm1940, %v1939, %v1523
      %v1942 = vand.u32 %v1941, 65535
      %v1943 = vshra.s32 %v1941, 16
      %v1944 = vcvt.s32.f32 %v1942
      %v1945 = vcvt.s32.f32 %v1943
      %1946 = vmin.xlane.f32.xlu0 %v1945
      %v1947 = vpop.xlane.xlu0 %1946
      %vm1948 = vcmp.eq.f32.partialorder %v1945, %v1947
      %v1949 = vsel %vm1948, %v1944, inf
      %1950 = vmin.xlane.f32.xlu0 %v1949
      %v1951 = vpop.xlane.xlu0 %1950
      %v1952 = vcvt.f32.s32 %v1951
      %v1953 = vcvt.f32.s32 %v1947
      %v1954 = vshll.u32 %v1953, 16
      %v1955 = vadd.s32 %v1954, %v1952
      %vm1956 = vcmp.lt.s32.totalorder %v1524, %v1525
      %v1957 = vsel %vm1956, %v1524, %v1525
      %vm1958 = vcmp.lt.s32.totalorder %v1957, %v1526
      %v1959 = vsel %vm1958, %v1957, %v1526
      %vm1960 = vcmp.lt.s32.totalorder %v1959, %v1527
      %v1961 = vsel %vm1960, %v1959, %v1527
      %v1962 = vand.u32 %v1961, 65535
      %v1963 = vshra.s32 %v1961, 16
      %v1964 = vcvt.s32.f32 %v1962
      %v1965 = vcvt.s32.f32 %v1963
      %1966 = vmin.xlane.f32.xlu0 %v1965
      %v1967 = vpop.xlane.xlu0 %1966
      %vm1968 = vcmp.eq.f32.partialorder %v1965, %v1967
      %v1969 = vsel %vm1968, %v1964, inf
      %1970 = vmin.xlane.f32.xlu0 %v1969
      %v1971 = vpop.xlane.xlu0 %1970
      %v1972 = vcvt.f32.s32 %v1971
      %v1973 = vcvt.f32.s32 %v1967
      %v1974 = vshll.u32 %v1973, 16
      %v1975 = vadd.s32 %v1974, %v1972
      %vm1976 = vcmp.lt.s32.totalorder %v1528, %v1529
      %v1977 = vsel %vm1976, %v1528, %v1529
      %vm1978 = vcmp.lt.s32.totalorder %v1977, %v1530
      %v1979 = vsel %vm1978, %v1977, %v1530
      %vm1980 = vcmp.lt.s32.totalorder %v1979, %v1531
      %v1981 = vsel %vm1980, %v1979, %v1531
      %v1982 = vand.u32 %v1981, 65535
      %v1983 = vshra.s32 %v1981, 16
      %v1984 = vcvt.s32.f32 %v1982
      %v1985 = vcvt.s32.f32 %v1983
      %1986 = vmin.xlane.f32.xlu0 %v1985
      %v1987 = vpop.xlane.xlu0 %1986
      %vm1988 = vcmp.eq.f32.partialorder %v1985, %v1987
      %v1989 = vsel %vm1988, %v1984, inf
      %1990 = vmin.xlane.f32.xlu0 %v1989
      %v1991 = vpop.xlane.xlu0 %1990
      %v1992 = vcvt.f32.s32 %v1991
      %v1993 = vcvt.f32.s32 %v1987
      %v1994 = vshll.u32 %v1993, 16
      %v1995 = vadd.s32 %v1994, %v1992
      %vm1996 = vcmp.lt.s32.totalorder %v1532, %v1533
      %v1997 = vsel %vm1996, %v1532, %v1533
      %vm1998 = vcmp.lt.s32.totalorder %v1997, %v1534
      %v1999 = vsel %vm1998, %v1997, %v1534
      %vm2000 = vcmp.lt.s32.totalorder %v1999, %v1535
      %v2001 = vsel %vm2000, %v1999, %v1535
      %v2002 = vand.u32 %v2001, 65535
      %v2003 = vshra.s32 %v2001, 16
      %v2004 = vcvt.s32.f32 %v2002
      %v2005 = vcvt.s32.f32 %v2003
      %2006 = vmin.xlane.f32.xlu0 %v2005
      %v2007 = vpop.xlane.xlu0 %2006
      %vm2008 = vcmp.eq.f32.partialorder %v2005, %v2007
      %v2009 = vsel %vm2008, %v2004, inf
      %2010 = vmin.xlane.f32.xlu0 %v2009
      %v2011 = vpop.xlane.xlu0 %2010
      %v2012 = vcvt.f32.s32 %v2011
      %v2013 = vcvt.f32.s32 %v2007
      %v2014 = vshll.u32 %v2013, 16
      %v2015 = vadd.s32 %v2014, %v2012
      %vm2016 = vcmp.lt.s32.totalorder %v1536, %v1537
      %v2017 = vsel %vm2016, %v1536, %v1537
      %vm2018 = vcmp.lt.s32.totalorder %v2017, %v1538
      %v2019 = vsel %vm2018, %v2017, %v1538
      %vm2020 = vcmp.lt.s32.totalorder %v2019, %v1539
      %v2021 = vsel %vm2020, %v2019, %v1539
      %v2022 = vand.u32 %v2021, 65535
      %v2023 = vshra.s32 %v2021, 16
      %v2024 = vcvt.s32.f32 %v2022
      %v2025 = vcvt.s32.f32 %v2023
      %2026 = vmin.xlane.f32.xlu0 %v2025
      %v2027 = vpop.xlane.xlu0 %2026
      %vm2028 = vcmp.eq.f32.partialorder %v2025, %v2027
      %v2029 = vsel %vm2028, %v2024, inf
      %2030 = vmin.xlane.f32.xlu0 %v2029
      %v2031 = vpop.xlane.xlu0 %2030
      %v2032 = vcvt.f32.s32 %v2031
      %v2033 = vcvt.f32.s32 %v2027
      %v2034 = vshll.u32 %v2033, 16
      %v2035 = vadd.s32 %v2034, %v2032
      %vm2036 = vcmp.lt.s32.totalorder %v1540, %v1541
      %v2037 = vsel %vm2036, %v1540, %v1541
      %vm2038 = vcmp.lt.s32.totalorder %v2037, %v1542
      %v2039 = vsel %vm2038, %v2037, %v1542
      %vm2040 = vcmp.lt.s32.totalorder %v2039, %v1543
      %v2041 = vsel %vm2040, %v2039, %v1543
      %v2042 = vand.u32 %v2041, 65535
      %v2043 = vshra.s32 %v2041, 16
      %v2044 = vcvt.s32.f32 %v2042
      %v2045 = vcvt.s32.f32 %v2043
      %2046 = vmin.xlane.f32.xlu0 %v2045
      %v2047 = vpop.xlane.xlu0 %2046
      %vm2048 = vcmp.eq.f32.partialorder %v2045, %v2047
      %v2049 = vsel %vm2048, %v2044, inf
      %2050 = vmin.xlane.f32.xlu0 %v2049
      %v2051 = vpop.xlane.xlu0 %2050
      %v2052 = vcvt.f32.s32 %v2051
      %v2053 = vcvt.f32.s32 %v2047
      %v2054 = vshll.u32 %v2053, 16
      %v2055 = vadd.s32 %v2054, %v2052
      %vm2056 = vcmp.lt.s32.totalorder %v1544, %v1545
      %v2057 = vsel %vm2056, %v1544, %v1545
      %vm2058 = vcmp.lt.s32.totalorder %v2057, %v1546
      %v2059 = vsel %vm2058, %v2057, %v1546
      %vm2060 = vcmp.lt.s32.totalorder %v2059, %v1547
      %v2061 = vsel %vm2060, %v2059, %v1547
      %v2062 = vand.u32 %v2061, 65535
      %v2063 = vshra.s32 %v2061, 16
      %v2064 = vcvt.s32.f32 %v2062
      %v2065 = vcvt.s32.f32 %v2063
      %2066 = vmin.xlane.f32.xlu0 %v2065
      %v2067 = vpop.xlane.xlu0 %2066
      %vm2068 = vcmp.eq.f32.partialorder %v2065, %v2067
      %v2069 = vsel %vm2068, %v2064, inf
      %2070 = vmin.xlane.f32.xlu0 %v2069
      %v2071 = vpop.xlane.xlu0 %2070
      %v2072 = vcvt.f32.s32 %v2071
      %v2073 = vcvt.f32.s32 %v2067
      %v2074 = vshll.u32 %v2073, 16
      %v2075 = vadd.s32 %v2074, %v2072
      %vm2076 = vcmp.lt.s32.totalorder %v1548, %v1549
      %v2077 = vsel %vm2076, %v1548, %v1549
      %vm2078 = vcmp.lt.s32.totalorder %v2077, %v1550
      %v2079 = vsel %vm2078, %v2077, %v1550
      %vm2080 = vcmp.lt.s32.totalorder %v2079, %v1551
      %v2081 = vsel %vm2080, %v2079, %v1551
      %v2082 = vand.u32 %v2081, 65535
      %v2083 = vshra.s32 %v2081, 16
      %v2084 = vcvt.s32.f32 %v2082
      %v2085 = vcvt.s32.f32 %v2083
      %2086 = vmin.xlane.f32.xlu0 %v2085
      %v2087 = vpop.xlane.xlu0 %2086
      %vm2088 = vcmp.eq.f32.partialorder %v2085, %v2087
      %v2089 = vsel %vm2088, %v2084, inf
      %2090 = vmin.xlane.f32.xlu0 %v2089
      %v2091 = vpop.xlane.xlu0 %2090
      %v2092 = vcvt.f32.s32 %v2091
      %v2093 = vcvt.f32.s32 %v2087
      %v2094 = vshll.u32 %v2093, 16
      %v2095 = vadd.s32 %v2094, %v2092
      %vm2096 = vcmp.lt.s32.totalorder %v1552, %v1553
      %v2097 = vsel %vm2096, %v1552, %v1553
      %vm2098 = vcmp.lt.s32.totalorder %v2097, %v1554
      %v2099 = vsel %vm2098, %v2097, %v1554
      %vm2100 = vcmp.lt.s32.totalorder %v2099, %v1555
      %v2101 = vsel %vm2100, %v2099, %v1555
      %v2102 = vand.u32 %v2101, 65535
      %v2103 = vshra.s32 %v2101, 16
      %v2104 = vcvt.s32.f32 %v2102
      %v2105 = vcvt.s32.f32 %v2103
      %2106 = vmin.xlane.f32.xlu0 %v2105
      %v2107 = vpop.xlane.xlu0 %2106
      %vm2108 = vcmp.eq.f32.partialorder %v2105, %v2107
      %v2109 = vsel %vm2108, %v2104, inf
      %2110 = vmin.xlane.f32.xlu0 %v2109
      %v2111 = vpop.xlane.xlu0 %2110
      %v2112 = vcvt.f32.s32 %v2111
      %v2113 = vcvt.f32.s32 %v2107
      %v2114 = vshll.u32 %v2113, 16
      %v2115 = vadd.s32 %v2114, %v2112
      %vm2116 = vcmp.lt.s32.totalorder %v1556, %v1557
      %v2117 = vsel %vm2116, %v1556, %v1557
      %vm2118 = vcmp.lt.s32.totalorder %v2117, %v1558
      %v2119 = vsel %vm2118, %v2117, %v1558
      %vm2120 = vcmp.lt.s32.totalorder %v2119, %v1559
      %v2121 = vsel %vm2120, %v2119, %v1559
      %v2122 = vand.u32 %v2121, 65535
      %v2123 = vshra.s32 %v2121, 16
      %v2124 = vcvt.s32.f32 %v2122
      %v2125 = vcvt.s32.f32 %v2123
      %2126 = vmin.xlane.f32.xlu0 %v2125
      %v2127 = vpop.xlane.xlu0 %2126
      %vm2128 = vcmp.eq.f32.partialorder %v2125, %v2127
      %v2129 = vsel %vm2128, %v2124, inf
      %2130 = vmin.xlane.f32.xlu0 %v2129
      %v2131 = vpop.xlane.xlu0 %2130
      %v2132 = vcvt.f32.s32 %v2131
      %v2133 = vcvt.f32.s32 %v2127
      %v2134 = vshll.u32 %v2133, 16
      %v2135 = vadd.s32 %v2134, %v2132
      %vm2136 = vcmp.lt.s32.totalorder %v1560, %v1561
      %v2137 = vsel %vm2136, %v1560, %v1561
      %vm2138 = vcmp.lt.s32.totalorder %v2137, %v1562
      %v2139 = vsel %vm2138, %v2137, %v1562
      %vm2140 = vcmp.lt.s32.totalorder %v2139, %v1563
      %v2141 = vsel %vm2140, %v2139, %v1563
      %v2142 = vand.u32 %v2141, 65535
      %v2143 = vshra.s32 %v2141, 16
      %v2144 = vcvt.s32.f32 %v2142
      %v2145 = vcvt.s32.f32 %v2143
      %2146 = vmin.xlane.f32.xlu0 %v2145
      %v2147 = vpop.xlane.xlu0 %2146
      %vm2148 = vcmp.eq.f32.partialorder %v2145, %v2147
      %v2149 = vsel %vm2148, %v2144, inf
      %2150 = vmin.xlane.f32.xlu0 %v2149
      %v2151 = vpop.xlane.xlu0 %2150
      %v2152 = vcvt.f32.s32 %v2151
      %v2153 = vcvt.f32.s32 %v2147
      %v2154 = vshll.u32 %v2153, 16
      %v2155 = vadd.s32 %v2154, %v2152
      %vm2156 = vcmp.lt.s32.totalorder %v1564, %v1565
      %v2157 = vsel %vm2156, %v1564, %v1565
      %vm2158 = vcmp.lt.s32.totalorder %v2157, %v1566
      %v2159 = vsel %vm2158, %v2157, %v1566
      %vm2160 = vcmp.lt.s32.totalorder %v2159, %v1567
      %v2161 = vsel %vm2160, %v2159, %v1567
      %v2162 = vand.u32 %v2161, 65535
      %v2163 = vshra.s32 %v2161, 16
      %v2164 = vcvt.s32.f32 %v2162
      %v2165 = vcvt.s32.f32 %v2163
      %2166 = vmin.xlane.f32.xlu0 %v2165
      %v2167 = vpop.xlane.xlu0 %2166
      %vm2168 = vcmp.eq.f32.partialorder %v2165, %v2167
      %v2169 = vsel %vm2168, %v2164, inf
      %2170 = vmin.xlane.f32.xlu0 %v2169
      %v2171 = vpop.xlane.xlu0 %2170
      %v2172 = vcvt.f32.s32 %v2171
      %v2173 = vcvt.f32.s32 %v2167
      %v2174 = vshll.u32 %v2173, 16
      %v2175 = vadd.s32 %v2174, %v2172
      %vm2176 = vcmp.lt.s32.totalorder %v1568, %v1569
      %v2177 = vsel %vm2176, %v1568, %v1569
      %vm2178 = vcmp.lt.s32.totalorder %v2177, %v1570
      %v2179 = vsel %vm2178, %v2177, %v1570
      %vm2180 = vcmp.lt.s32.totalorder %v2179, %v1571
      %v2181 = vsel %vm2180, %v2179, %v1571
      %v2182 = vand.u32 %v2181, 65535
      %v2183 = vshra.s32 %v2181, 16
      %v2184 = vcvt.s32.f32 %v2182
      %v2185 = vcvt.s32.f32 %v2183
      %2186 = vmin.xlane.f32.xlu0 %v2185
      %v2187 = vpop.xlane.xlu0 %2186
      %vm2188 = vcmp.eq.f32.partialorder %v2185, %v2187
      %v2189 = vsel %vm2188, %v2184, inf
      %2190 = vmin.xlane.f32.xlu0 %v2189
      %v2191 = vpop.xlane.xlu0 %2190
      %v2192 = vcvt.f32.s32 %v2191
      %v2193 = vcvt.f32.s32 %v2187
      %v2194 = vshll.u32 %v2193, 16
      %v2195 = vadd.s32 %v2194, %v2192
      %vm2196 = vcmp.lt.s32.totalorder %v1572, %v1573
      %v2197 = vsel %vm2196, %v1572, %v1573
      %vm2198 = vcmp.lt.s32.totalorder %v2197, %v1574
      %v2199 = vsel %vm2198, %v2197, %v1574
      %vm2200 = vcmp.lt.s32.totalorder %v2199, %v1575
      %v2201 = vsel %vm2200, %v2199, %v1575
      %v2202 = vand.u32 %v2201, 65535
      %v2203 = vshra.s32 %v2201, 16
      %v2204 = vcvt.s32.f32 %v2202
      %v2205 = vcvt.s32.f32 %v2203
      %2206 = vmin.xlane.f32.xlu0 %v2205
      %v2207 = vpop.xlane.xlu0 %2206
      %vm2208 = vcmp.eq.f32.partialorder %v2205, %v2207
      %v2209 = vsel %vm2208, %v2204, inf
      %2210 = vmin.xlane.f32.xlu0 %v2209
      %v2211 = vpop.xlane.xlu0 %2210
      %v2212 = vcvt.f32.s32 %v2211
      %v2213 = vcvt.f32.s32 %v2207
      %v2214 = vshll.u32 %v2213, 16
      %v2215 = vadd.s32 %v2214, %v2212
      %vm2216 = vcmp.eq.s32.totalorder %v1156, %v1595
      %vm2217 = vcmp.eq.s32.totalorder %v1157, %v1595
      %vm2218 = vcmp.eq.s32.totalorder %v1158, %v1595
      %vm2219 = vcmp.eq.s32.totalorder %v1159, %v1595
      %vm2220 = vcmp.eq.s32.totalorder %v1156, %v1615
      %vm2221 = vcmp.eq.s32.totalorder %v1157, %v1615
      %vm2222 = vcmp.eq.s32.totalorder %v1158, %v1615
      %vm2223 = vcmp.eq.s32.totalorder %v1159, %v1615
      %vm2224 = vcmp.eq.s32.totalorder %v1156, %v1635
      %vm2225 = vcmp.eq.s32.totalorder %v1157, %v1635
      %vm2226 = vcmp.eq.s32.totalorder %v1158, %v1635
      %vm2227 = vcmp.eq.s32.totalorder %v1159, %v1635
      %vm2228 = vcmp.eq.s32.totalorder %v1156, %v1655
      %vm2229 = vcmp.eq.s32.totalorder %v1157, %v1655
      %vm2230 = vcmp.eq.s32.totalorder %v1158, %v1655
      %vm2231 = vcmp.eq.s32.totalorder %v1159, %v1655
      %vm2232 = vcmp.eq.s32.totalorder %v1156, %v1675
      %vm2233 = vcmp.eq.s32.totalorder %v1157, %v1675
      %vm2234 = vcmp.eq.s32.totalorder %v1158, %v1675
      %vm2235 = vcmp.eq.s32.totalorder %v1159, %v1675
      %vm2236 = vcmp.eq.s32.totalorder %v1156, %v1695
      %vm2237 = vcmp.eq.s32.totalorder %v1157, %v1695
      %vm2238 = vcmp.eq.s32.totalorder %v1158, %v1695
      %vm2239 = vcmp.eq.s32.totalorder %v1159, %v1695
      %vm2240 = vcmp.eq.s32.totalorder %v1156, %v1715
      %vm2241 = vcmp.eq.s32.totalorder %v1157, %v1715
      %vm2242 = vcmp.eq.s32.totalorder %v1158, %v1715
      %vm2243 = vcmp.eq.s32.totalorder %v1159, %v1715
      %vm2244 = vcmp.eq.s32.totalorder %v1156, %v1735
      %vm2245 = vcmp.eq.s32.totalorder %v1157, %v1735
      %vm2246 = vcmp.eq.s32.totalorder %v1158, %v1735
      %vm2247 = vcmp.eq.s32.totalorder %v1159, %v1735
      %vm2248 = vcmp.eq.s32.totalorder %v1156, %v1755
      %vm2249 = vcmp.eq.s32.totalorder %v1157, %v1755
      %vm2250 = vcmp.eq.s32.totalorder %v1158, %v1755
      %vm2251 = vcmp.eq.s32.totalorder %v1159, %v1755
      %vm2252 = vcmp.eq.s32.totalorder %v1156, %v1775
      %vm2253 = vcmp.eq.s32.totalorder %v1157, %v1775
      %vm2254 = vcmp.eq.s32.totalorder %v1158, %v1775
      %vm2255 = vcmp.eq.s32.totalorder %v1159, %v1775
      %vm2256 = vcmp.eq.s32.totalorder %v1156, %v1795
      %vm2257 = vcmp.eq.s32.totalorder %v1157, %v1795
      %vm2258 = vcmp.eq.s32.totalorder %v1158, %v1795
      %vm2259 = vcmp.eq.s32.totalorder %v1159, %v1795
      %vm2260 = vcmp.eq.s32.totalorder %v1156, %v1815
      %vm2261 = vcmp.eq.s32.totalorder %v1157, %v1815
      %vm2262 = vcmp.eq.s32.totalorder %v1158, %v1815
      %vm2263 = vcmp.eq.s32.totalorder %v1159, %v1815
      %vm2264 = vcmp.eq.s32.totalorder %v1156, %v1835
      %vm2265 = vcmp.eq.s32.totalorder %v1157, %v1835
      %vm2266 = vcmp.eq.s32.totalorder %v1158, %v1835
      %vm2267 = vcmp.eq.s32.totalorder %v1159, %v1835
      %vm2268 = vcmp.eq.s32.totalorder %v1156, %v1855
      %vm2269 = vcmp.eq.s32.totalorder %v1157, %v1855
      %vm2270 = vcmp.eq.s32.totalorder %v1158, %v1855
      %vm2271 = vcmp.eq.s32.totalorder %v1159, %v1855
      %vm2272 = vcmp.eq.s32.totalorder %v1156, %v1875
      %vm2273 = vcmp.eq.s32.totalorder %v1157, %v1875
      %vm2274 = vcmp.eq.s32.totalorder %v1158, %v1875
      %vm2275 = vcmp.eq.s32.totalorder %v1159, %v1875
      %vm2276 = vcmp.eq.s32.totalorder %v1156, %v1895
      %vm2277 = vcmp.eq.s32.totalorder %v1157, %v1895
      %vm2278 = vcmp.eq.s32.totalorder %v1158, %v1895
      %vm2279 = vcmp.eq.s32.totalorder %v1159, %v1895
      %vm2280 = vcmp.eq.s32.totalorder %v1156, %v1915
      %vm2281 = vcmp.eq.s32.totalorder %v1157, %v1915
      %vm2282 = vcmp.eq.s32.totalorder %v1158, %v1915
      %vm2283 = vcmp.eq.s32.totalorder %v1159, %v1915
      %vm2284 = vcmp.eq.s32.totalorder %v1156, %v1935
      %vm2285 = vcmp.eq.s32.totalorder %v1157, %v1935
      %vm2286 = vcmp.eq.s32.totalorder %v1158, %v1935
      %vm2287 = vcmp.eq.s32.totalorder %v1159, %v1935
      %vm2288 = vcmp.eq.s32.totalorder %v1156, %v1955
      %vm2289 = vcmp.eq.s32.totalorder %v1157, %v1955
      %vm2290 = vcmp.eq.s32.totalorder %v1158, %v1955
      %vm2291 = vcmp.eq.s32.totalorder %v1159, %v1955
      %vm2292 = vcmp.eq.s32.totalorder %v1156, %v1975
      %vm2293 = vcmp.eq.s32.totalorder %v1157, %v1975
      %vm2294 = vcmp.eq.s32.totalorder %v1158, %v1975
      %vm2295 = vcmp.eq.s32.totalorder %v1159, %v1975
      %vm2296 = vcmp.eq.s32.totalorder %v1156, %v1995
      %vm2297 = vcmp.eq.s32.totalorder %v1157, %v1995
      %vm2298 = vcmp.eq.s32.totalorder %v1158, %v1995
      %vm2299 = vcmp.eq.s32.totalorder %v1159, %v1995
      %vm2300 = vcmp.eq.s32.totalorder %v1156, %v2015
      %vm2301 = vcmp.eq.s32.totalorder %v1157, %v2015
      %vm2302 = vcmp.eq.s32.totalorder %v1158, %v2015
      %vm2303 = vcmp.eq.s32.totalorder %v1159, %v2015
      %vm2304 = vcmp.eq.s32.totalorder %v1156, %v2035
      %vm2305 = vcmp.eq.s32.totalorder %v1157, %v2035
      %vm2306 = vcmp.eq.s32.totalorder %v1158, %v2035
      %vm2307 = vcmp.eq.s32.totalorder %v1159, %v2035
      %vm2308 = vcmp.eq.s32.totalorder %v1156, %v2055
      %vm2309 = vcmp.eq.s32.totalorder %v1157, %v2055
      %vm2310 = vcmp.eq.s32.totalorder %v1158, %v2055
      %vm2311 = vcmp.eq.s32.totalorder %v1159, %v2055
      %vm2312 = vcmp.eq.s32.totalorder %v1156, %v2075
      %vm2313 = vcmp.eq.s32.totalorder %v1157, %v2075
      %vm2314 = vcmp.eq.s32.totalorder %v1158, %v2075
      %vm2315 = vcmp.eq.s32.totalorder %v1159, %v2075
      %vm2316 = vcmp.eq.s32.totalorder %v1156, %v2095
      %vm2317 = vcmp.eq.s32.totalorder %v1157, %v2095
      %vm2318 = vcmp.eq.s32.totalorder %v1158, %v2095
      %vm2319 = vcmp.eq.s32.totalorder %v1159, %v2095
      %vm2320 = vcmp.eq.s32.totalorder %v1156, %v2115
      %vm2321 = vcmp.eq.s32.totalorder %v1157, %v2115
      %vm2322 = vcmp.eq.s32.totalorder %v1158, %v2115
      %vm2323 = vcmp.eq.s32.totalorder %v1159, %v2115
      %vm2324 = vcmp.eq.s32.totalorder %v1156, %v2135
      %vm2325 = vcmp.eq.s32.totalorder %v1157, %v2135
      %vm2326 = vcmp.eq.s32.totalorder %v1158, %v2135
      %vm2327 = vcmp.eq.s32.totalorder %v1159, %v2135
      %vm2328 = vcmp.eq.s32.totalorder %v1156, %v2155
      %vm2329 = vcmp.eq.s32.totalorder %v1157, %v2155
      %vm2330 = vcmp.eq.s32.totalorder %v1158, %v2155
      %vm2331 = vcmp.eq.s32.totalorder %v1159, %v2155
      %vm2332 = vcmp.eq.s32.totalorder %v1156, %v2175
      %vm2333 = vcmp.eq.s32.totalorder %v1157, %v2175
      %vm2334 = vcmp.eq.s32.totalorder %v1158, %v2175
      %vm2335 = vcmp.eq.s32.totalorder %v1159, %v2175
      %vm2336 = vcmp.eq.s32.totalorder %v1156, %v2195
      %vm2337 = vcmp.eq.s32.totalorder %v1157, %v2195
      %vm2338 = vcmp.eq.s32.totalorder %v1158, %v2195
      %vm2339 = vcmp.eq.s32.totalorder %v1159, %v2195
      %vm2340 = vcmp.eq.s32.totalorder %v1156, %v2215
      %vm2341 = vcmp.eq.s32.totalorder %v1157, %v2215
      %vm2342 = vcmp.eq.s32.totalorder %v1158, %v2215
      %vm2343 = vcmp.eq.s32.totalorder %v1159, %v2215
      %v2344 = vsel %vm2216, 1, 0
      %v2345 = vsel %vm2217, 1, 0
      %v2346 = vsel %vm2218, 1, 0
      %v2347 = vsel %vm2219, 1, 0
      %v2348 = vsel %vm2220, 1, 0
      %v2349 = vsel %vm2221, 1, 0
      %v2350 = vsel %vm2222, 1, 0
      %v2351 = vsel %vm2223, 1, 0
      %v2352 = vsel %vm2224, 1, 0
      %v2353 = vsel %vm2225, 1, 0
      %v2354 = vsel %vm2226, 1, 0
      %v2355 = vsel %vm2227, 1, 0
      %v2356 = vsel %vm2228, 1, 0
      %v2357 = vsel %vm2229, 1, 0
      %v2358 = vsel %vm2230, 1, 0
      %v2359 = vsel %vm2231, 1, 0
      %v2360 = vsel %vm2232, 1, 0
      %v2361 = vsel %vm2233, 1, 0
      %v2362 = vsel %vm2234, 1, 0
      %v2363 = vsel %vm2235, 1, 0
      %v2364 = vsel %vm2236, 1, 0
      %v2365 = vsel %vm2237, 1, 0
      %v2366 = vsel %vm2238, 1, 0
      %v2367 = vsel %vm2239, 1, 0
      %v2368 = vsel %vm2240, 1, 0
      %v2369 = vsel %vm2241, 1, 0
      %v2370 = vsel %vm2242, 1, 0
      %v2371 = vsel %vm2243, 1, 0
      %v2372 = vsel %vm2244, 1, 0
      %v2373 = vsel %vm2245, 1, 0
      %v2374 = vsel %vm2246, 1, 0
      %v2375 = vsel %vm2247, 1, 0
      %v2376 = vsel %vm2248, 1, 0
      %v2377 = vsel %vm2249, 1, 0
      %v2378 = vsel %vm2250, 1, 0
      %v2379 = vsel %vm2251, 1, 0
      %v2380 = vsel %vm2252, 1, 0
      %v2381 = vsel %vm2253, 1, 0
      %v2382 = vsel %vm2254, 1, 0
      %v2383 = vsel %vm2255, 1, 0
      %v2384 = vsel %vm2256, 1, 0
      %v2385 = vsel %vm2257, 1, 0
      %v2386 = vsel %vm2258, 1, 0
      %v2387 = vsel %vm2259, 1, 0
      %v2388 = vsel %vm2260, 1, 0
      %v2389 = vsel %vm2261, 1, 0
      %v2390 = vsel %vm2262, 1, 0
      %v2391 = vsel %vm2263, 1, 0
      %v2392 = vsel %vm2264, 1, 0
      %v2393 = vsel %vm2265, 1, 0
      %v2394 = vsel %vm2266, 1, 0
      %v2395 = vsel %vm2267, 1, 0
      %v2396 = vsel %vm2268, 1, 0
      %v2397 = vsel %vm2269, 1, 0
      %v2398 = vsel %vm2270, 1, 0
      %v2399 = vsel %vm2271, 1, 0
      %v2400 = vsel %vm2272, 1, 0
      %v2401 = vsel %vm2273, 1, 0
      %v2402 = vsel %vm2274, 1, 0
      %v2403 = vsel %vm2275, 1, 0
      %v2404 = vsel %vm2276, 1, 0
      %v2405 = vsel %vm2277, 1, 0
      %v2406 = vsel %vm2278, 1, 0
      %v2407 = vsel %vm2279, 1, 0
      %v2408 = vsel %vm2280, 1, 0
      %v2409 = vsel %vm2281, 1, 0
      %v2410 = vsel %vm2282, 1, 0
      %v2411 = vsel %vm2283, 1, 0
      %v2412 = vsel %vm2284, 1, 0
      %v2413 = vsel %vm2285, 1, 0
      %v2414 = vsel %vm2286, 1, 0
      %v2415 = vsel %vm2287, 1, 0
      %v2416 = vsel %vm2288, 1, 0
      %v2417 = vsel %vm2289, 1, 0
      %v2418 = vsel %vm2290, 1, 0
      %v2419 = vsel %vm2291, 1, 0
      %v2420 = vsel %vm2292, 1, 0
      %v2421 = vsel %vm2293, 1, 0
      %v2422 = vsel %vm2294, 1, 0
      %v2423 = vsel %vm2295, 1, 0
      %v2424 = vsel %vm2296, 1, 0
      %v2425 = vsel %vm2297, 1, 0
      %v2426 = vsel %vm2298, 1, 0
      %v2427 = vsel %vm2299, 1, 0
      %v2428 = vsel %vm2300, 1, 0
      %v2429 = vsel %vm2301, 1, 0
      %v2430 = vsel %vm2302, 1, 0
      %v2431 = vsel %vm2303, 1, 0
      %v2432 = vsel %vm2304, 1, 0
      %v2433 = vsel %vm2305, 1, 0
      %v2434 = vsel %vm2306, 1, 0
      %v2435 = vsel %vm2307, 1, 0
      %v2436 = vsel %vm2308, 1, 0
      %v2437 = vsel %vm2309, 1, 0
      %v2438 = vsel %vm2310, 1, 0
      %v2439 = vsel %vm2311, 1, 0
      %v2440 = vsel %vm2312, 1, 0
      %v2441 = vsel %vm2313, 1, 0
      %v2442 = vsel %vm2314, 1, 0
      %v2443 = vsel %vm2315, 1, 0
      %v2444 = vsel %vm2316, 1, 0
      %v2445 = vsel %vm2317, 1, 0
      %v2446 = vsel %vm2318, 1, 0
      %v2447 = vsel %vm2319, 1, 0
      %v2448 = vsel %vm2320, 1, 0
      %v2449 = vsel %vm2321, 1, 0
      %v2450 = vsel %vm2322, 1, 0
      %v2451 = vsel %vm2323, 1, 0
      %v2452 = vsel %vm2324, 1, 0
      %v2453 = vsel %vm2325, 1, 0
      %v2454 = vsel %vm2326, 1, 0
      %v2455 = vsel %vm2327, 1, 0
      %v2456 = vsel %vm2328, 1, 0
      %v2457 = vsel %vm2329, 1, 0
      %v2458 = vsel %vm2330, 1, 0
      %v2459 = vsel %vm2331, 1, 0
      %v2460 = vsel %vm2332, 1, 0
      %v2461 = vsel %vm2333, 1, 0
      %v2462 = vsel %vm2334, 1, 0
      %v2463 = vsel %vm2335, 1, 0
      %v2464 = vsel %vm2336, 1, 0
      %v2465 = vsel %vm2337, 1, 0
      %v2466 = vsel %vm2338, 1, 0
      %v2467 = vsel %vm2339, 1, 0
      %v2468 = vsel %vm2340, 1, 0
      %v2469 = vsel %vm2341, 1, 0
      %v2470 = vsel %vm2342, 1, 0
      %v2471 = vsel %vm2343, 1, 0
      %v2472 = vcvt.s32.f32 %v2344
      %v2473 = vcvt.s32.f32 %v2345
      %v2474 = vcvt.s32.f32 %v2346
      %v2475 = vcvt.s32.f32 %v2347
      %v2476 = vcvt.s32.f32 %v2348
      %v2477 = vcvt.s32.f32 %v2349
      %v2478 = vcvt.s32.f32 %v2350
      %v2479 = vcvt.s32.f32 %v2351
      %v2480 = vcvt.s32.f32 %v2352
      %v2481 = vcvt.s32.f32 %v2353
      %v2482 = vcvt.s32.f32 %v2354
      %v2483 = vcvt.s32.f32 %v2355
      %v2484 = vcvt.s32.f32 %v2356
      %v2485 = vcvt.s32.f32 %v2357
      %v2486 = vcvt.s32.f32 %v2358
      %v2487 = vcvt.s32.f32 %v2359
      %v2488 = vcvt.s32.f32 %v2360
      %v2489 = vcvt.s32.f32 %v2361
      %v2490 = vcvt.s32.f32 %v2362
      %v2491 = vcvt.s32.f32 %v2363
      %v2492 = vcvt.s32.f32 %v2364
      %v2493 = vcvt.s32.f32 %v2365
      %v2494 = vcvt.s32.f32 %v2366
      %v2495 = vcvt.s32.f32 %v2367
      %v2496 = vcvt.s32.f32 %v2368
      %v2497 = vcvt.s32.f32 %v2369
      %v2498 = vcvt.s32.f32 %v2370
      %v2499 = vcvt.s32.f32 %v2371
      %v2500 = vcvt.s32.f32 %v2372
      %v2501 = vcvt.s32.f32 %v2373
      %v2502 = vcvt.s32.f32 %v2374
      %v2503 = vcvt.s32.f32 %v2375
      %v2504 = vcvt.s32.f32 %v2376
      %v2505 = vcvt.s32.f32 %v2377
      %v2506 = vcvt.s32.f32 %v2378
      %v2507 = vcvt.s32.f32 %v2379
      %v2508 = vcvt.s32.f32 %v2380
      %v2509 = vcvt.s32.f32 %v2381
      %v2510 = vcvt.s32.f32 %v2382
      %v2511 = vcvt.s32.f32 %v2383
      %v2512 = vcvt.s32.f32 %v2384
      %v2513 = vcvt.s32.f32 %v2385
      %v2514 = vcvt.s32.f32 %v2386
      %v2515 = vcvt.s32.f32 %v2387
      %v2516 = vcvt.s32.f32 %v2388
      %v2517 = vcvt.s32.f32 %v2389
      %v2518 = vcvt.s32.f32 %v2390
      %v2519 = vcvt.s32.f32 %v2391
      %v2520 = vcvt.s32.f32 %v2392
      %v2521 = vcvt.s32.f32 %v2393
      %v2522 = vcvt.s32.f32 %v2394
      %v2523 = vcvt.s32.f32 %v2395
      %v2524 = vcvt.s32.f32 %v2396
      %v2525 = vcvt.s32.f32 %v2397
      %v2526 = vcvt.s32.f32 %v2398
      %v2527 = vcvt.s32.f32 %v2399
      %v2528 = vcvt.s32.f32 %v2400
      %v2529 = vcvt.s32.f32 %v2401
      %v2530 = vcvt.s32.f32 %v2402
      %v2531 = vcvt.s32.f32 %v2403
      %v2532 = vcvt.s32.f32 %v2404
      %v2533 = vcvt.s32.f32 %v2405
      %v2534 = vcvt.s32.f32 %v2406
      %v2535 = vcvt.s32.f32 %v2407
      %v2536 = vcvt.s32.f32 %v2408
      %v2537 = vcvt.s32.f32 %v2409
      %v2538 = vcvt.s32.f32 %v2410
      %v2539 = vcvt.s32.f32 %v2411
      %v2540 = vcvt.s32.f32 %v2412
      %v2541 = vcvt.s32.f32 %v2413
      %v2542 = vcvt.s32.f32 %v2414
      %v2543 = vcvt.s32.f32 %v2415
      %v2544 = vcvt.s32.f32 %v2416
      %v2545 = vcvt.s32.f32 %v2417
      %v2546 = vcvt.s32.f32 %v2418
      %v2547 = vcvt.s32.f32 %v2419
      %v2548 = vcvt.s32.f32 %v2420
      %v2549 = vcvt.s32.f32 %v2421
      %v2550 = vcvt.s32.f32 %v2422
      %v2551 = vcvt.s32.f32 %v2423
      %v2552 = vcvt.s32.f32 %v2424
      %v2553 = vcvt.s32.f32 %v2425
      %v2554 = vcvt.s32.f32 %v2426
      %v2555 = vcvt.s32.f32 %v2427
      %v2556 = vcvt.s32.f32 %v2428
      %v2557 = vcvt.s32.f32 %v2429
      %v2558 = vcvt.s32.f32 %v2430
      %v2559 = vcvt.s32.f32 %v2431
      %v2560 = vcvt.s32.f32 %v2432
      %v2561 = vcvt.s32.f32 %v2433
      %v2562 = vcvt.s32.f32 %v2434
      %v2563 = vcvt.s32.f32 %v2435
      %v2564 = vcvt.s32.f32 %v2436
      %v2565 = vcvt.s32.f32 %v2437
      %v2566 = vcvt.s32.f32 %v2438
      %v2567 = vcvt.s32.f32 %v2439
      %v2568 = vcvt.s32.f32 %v2440
      %v2569 = vcvt.s32.f32 %v2441
      %v2570 = vcvt.s32.f32 %v2442
      %v2571 = vcvt.s32.f32 %v2443
      %v2572 = vcvt.s32.f32 %v2444
      %v2573 = vcvt.s32.f32 %v2445
      %v2574 = vcvt.s32.f32 %v2446
      %v2575 = vcvt.s32.f32 %v2447
      %v2576 = vcvt.s32.f32 %v2448
      %v2577 = vcvt.s32.f32 %v2449
      %v2578 = vcvt.s32.f32 %v2450
      %v2579 = vcvt.s32.f32 %v2451
      %v2580 = vcvt.s32.f32 %v2452
      %v2581 = vcvt.s32.f32 %v2453
      %v2582 = vcvt.s32.f32 %v2454
      %v2583 = vcvt.s32.f32 %v2455
      %v2584 = vcvt.s32.f32 %v2456
      %v2585 = vcvt.s32.f32 %v2457
      %v2586 = vcvt.s32.f32 %v2458
      %v2587 = vcvt.s32.f32 %v2459
      %v2588 = vcvt.s32.f32 %v2460
      %v2589 = vcvt.s32.f32 %v2461
      %v2590 = vcvt.s32.f32 %v2462
      %v2591 = vcvt.s32.f32 %v2463
      %v2592 = vcvt.s32.f32 %v2464
      %v2593 = vcvt.s32.f32 %v2465
      %v2594 = vcvt.s32.f32 %v2466
      %v2595 = vcvt.s32.f32 %v2467
      %v2596 = vcvt.s32.f32 %v2468
      %v2597 = vcvt.s32.f32 %v2469
      %v2598 = vcvt.s32.f32 %v2470
      %v2599 = vcvt.s32.f32 %v2471
      %v2600 = vpack.c.bf16 %v2476, %v2472
      %v2601 = vpack.c.bf16 %v2477, %v2473
      %v2602 = vpack.c.bf16 %v2478, %v2474
      %v2603 = vpack.c.bf16 %v2479, %v2475
      %v2604 = vpack.c.bf16 %v2484, %v2480
      %v2605 = vpack.c.bf16 %v2485, %v2481
      %v2606 = vpack.c.bf16 %v2486, %v2482
      %v2607 = vpack.c.bf16 %v2487, %v2483
      %v2608 = vpack.c.bf16 %v2492, %v2488
      %v2609 = vpack.c.bf16 %v2493, %v2489
      %v2610 = vpack.c.bf16 %v2494, %v2490
      %v2611 = vpack.c.bf16 %v2495, %v2491
      %v2612 = vpack.c.bf16 %v2500, %v2496
      %v2613 = vpack.c.bf16 %v2501, %v2497
      %v2614 = vpack.c.bf16 %v2502, %v2498
      %v2615 = vpack.c.bf16 %v2503, %v2499
      %v2616 = vpack.c.bf16 %v2508, %v2504
      %v2617 = vpack.c.bf16 %v2509, %v2505
      %v2618 = vpack.c.bf16 %v2510, %v2506
      %v2619 = vpack.c.bf16 %v2511, %v2507
      %v2620 = vpack.c.bf16 %v2516, %v2512
      %v2621 = vpack.c.bf16 %v2517, %v2513
      %v2622 = vpack.c.bf16 %v2518, %v2514
      %v2623 = vpack.c.bf16 %v2519, %v2515
      %v2624 = vpack.c.bf16 %v2524, %v2520
      %v2625 = vpack.c.bf16 %v2525, %v2521
      %v2626 = vpack.c.bf16 %v2526, %v2522
      %v2627 = vpack.c.bf16 %v2527, %v2523
      %v2628 = vpack.c.bf16 %v2532, %v2528
      %v2629 = vpack.c.bf16 %v2533, %v2529
      %v2630 = vpack.c.bf16 %v2534, %v2530
      %v2631 = vpack.c.bf16 %v2535, %v2531
      %v2632 = vpack.c.bf16 %v2540, %v2536
      %v2633 = vpack.c.bf16 %v2541, %v2537
      %v2634 = vpack.c.bf16 %v2542, %v2538
      %v2635 = vpack.c.bf16 %v2543, %v2539
      %v2636 = vpack.c.bf16 %v2548, %v2544
      %v2637 = vpack.c.bf16 %v2549, %v2545
      %v2638 = vpack.c.bf16 %v2550, %v2546
      %v2639 = vpack.c.bf16 %v2551, %v2547
      %v2640 = vpack.c.bf16 %v2556, %v2552
      %v2641 = vpack.c.bf16 %v2557, %v2553
      %v2642 = vpack.c.bf16 %v2558, %v2554
      %v2643 = vpack.c.bf16 %v2559, %v2555
      %v2644 = vpack.c.bf16 %v2564, %v2560
      %v2645 = vpack.c.bf16 %v2565, %v2561
      %v2646 = vpack.c.bf16 %v2566, %v2562
      %v2647 = vpack.c.bf16 %v2567, %v2563
      %v2648 = vpack.c.bf16 %v2572, %v2568
      %v2649 = vpack.c.bf16 %v2573, %v2569
      %v2650 = vpack.c.bf16 %v2574, %v2570
      %v2651 = vpack.c.bf16 %v2575, %v2571
      %v2652 = vpack.c.bf16 %v2580, %v2576
      %v2653 = vpack.c.bf16 %v2581, %v2577
      %v2654 = vpack.c.bf16 %v2582, %v2578
      %v2655 = vpack.c.bf16 %v2583, %v2579
      %v2656 = vpack.c.bf16 %v2588, %v2584
      %v2657 = vpack.c.bf16 %v2589, %v2585
      %v2658 = vpack.c.bf16 %v2590, %v2586
      %v2659 = vpack.c.bf16 %v2591, %v2587
      %v2660 = vpack.c.bf16 %v2596, %v2592
      %v2661 = vpack.c.bf16 %v2597, %v2593
      %v2662 = vpack.c.bf16 %v2598, %v2594
      %v2663 = vpack.c.bf16 %v2599, %v2595
      %v2664 = vld [vmem:[%s3] sm:$0xf]
      %v2665 = vld [vmem:[%s3 + $0x4] sm:$0xf]
      %v2666 = vld [vmem:[%s3 + $0x8] sm:$0xf]
      %v2667 = vld [vmem:[%s3 + $0xc] sm:$0xf]
      %v2668 = vld [vmem:[%s3 + $0x10] sm:$0xf]
      %v2669 = vld [vmem:[%s3 + $0x14] sm:$0xf]
      %v2670 = vld [vmem:[%s3 + $0x18] sm:$0xf]
      %v2671 = vld [vmem:[%s3 + $0x1c] sm:$0xf]
      %v2672 = vld [vmem:[%s3 + $0x20] sm:$0xf]
      %v2673 = vld [vmem:[%s3 + $0x24] sm:$0xf]
      %v2674 = vld [vmem:[%s3 + $0x28] sm:$0xf]
      %v2675 = vld [vmem:[%s3 + $0x2c] sm:$0xf]
      %v2676 = vld [vmem:[%s3 + $0x30] sm:$0xf]
      %v2677 = vld [vmem:[%s3 + $0x34] sm:$0xf]
      %v2678 = vld [vmem:[%s3 + $0x38] sm:$0xf]
      %v2679 = vld [vmem:[%s3 + $0x3c] sm:$0xf]
      %v2680 = vld [vmem:[%s3 + $0x40] sm:$0xf]
      %v2681 = vld [vmem:[%s3 + $0x44] sm:$0xf]
      %v2682 = vld [vmem:[%s3 + $0x48] sm:$0xf]
      %v2683 = vld [vmem:[%s3 + $0x4c] sm:$0xf]
      %v2684 = vld [vmem:[%s3 + $0x50] sm:$0xf]
      %v2685 = vld [vmem:[%s3 + $0x54] sm:$0xf]
      %v2686 = vld [vmem:[%s3 + $0x58] sm:$0xf]
      %v2687 = vld [vmem:[%s3 + $0x5c] sm:$0xf]
      %v2688 = vld [vmem:[%s3 + $0x60] sm:$0xf]
      %v2689 = vld [vmem:[%s3 + $0x64] sm:$0xf]
      %v2690 = vld [vmem:[%s3 + $0x68] sm:$0xf]
      %v2691 = vld [vmem:[%s3 + $0x6c] sm:$0xf]
      %v2692 = vld [vmem:[%s3 + $0x70] sm:$0xf]
      %v2693 = vld [vmem:[%s3 + $0x74] sm:$0xf]
      %v2694 = vld [vmem:[%s3 + $0x78] sm:$0xf]
      %v2695 = vld [vmem:[%s3 + $0x7c] sm:$0xf]
      %v2696 = vld [vmem:[%s3 + $0x80] sm:$0xf]
      %v2697 = vld [vmem:[%s3 + $0x84] sm:$0xf]
      %v2698 = vld [vmem:[%s3 + $0x88] sm:$0xf]
      %v2699 = vld [vmem:[%s3 + $0x8c] sm:$0xf]
      %v2700 = vld [vmem:[%s3 + $0x90] sm:$0xf]
      %v2701 = vld [vmem:[%s3 + $0x94] sm:$0xf]
      %v2702 = vld [vmem:[%s3 + $0x98] sm:$0xf]
      %v2703 = vld [vmem:[%s3 + $0x9c] sm:$0xf]
      %v2704 = vld [vmem:[%s3 + $0xa0] sm:$0xf]
      %v2705 = vld [vmem:[%s3 + $0xa4] sm:$0xf]
      %v2706 = vld [vmem:[%s3 + $0xa8] sm:$0xf]
      %v2707 = vld [vmem:[%s3 + $0xac] sm:$0xf]
      %v2708 = vld [vmem:[%s3 + $0xb0] sm:$0xf]
      %v2709 = vld [vmem:[%s3 + $0xb4] sm:$0xf]
      %v2710 = vld [vmem:[%s3 + $0xb8] sm:$0xf]
      %v2711 = vld [vmem:[%s3 + $0xbc] sm:$0xf]
      %v2712 = vld [vmem:[%s3 + $0xc0] sm:$0xf]
      %v2713 = vld [vmem:[%s3 + $0xc4] sm:$0xf]
      %v2714 = vld [vmem:[%s3 + $0xc8] sm:$0xf]
      %v2715 = vld [vmem:[%s3 + $0xcc] sm:$0xf]
      %v2716 = vld [vmem:[%s3 + $0xd0] sm:$0xf]
      %v2717 = vld [vmem:[%s3 + $0xd4] sm:$0xf]
      %v2718 = vld [vmem:[%s3 + $0xd8] sm:$0xf]
      %v2719 = vld [vmem:[%s3 + $0xdc] sm:$0xf]
      %v2720 = vld [vmem:[%s3 + $0xe0] sm:$0xf]
      %v2721 = vld [vmem:[%s3 + $0xe4] sm:$0xf]
      %v2722 = vld [vmem:[%s3 + $0xe8] sm:$0xf]
      %v2723 = vld [vmem:[%s3 + $0xec] sm:$0xf]
      %v2724 = vld [vmem:[%s3 + $0xf0] sm:$0xf]
      %v2725 = vld [vmem:[%s3 + $0xf4] sm:$0xf]
      %v2726 = vld [vmem:[%s3 + $0xf8] sm:$0xf]
      %v2727 = vld [vmem:[%s3 + $0xfc] sm:$0xf]
      %v2792 = vunpack.c.l.b16 %v2664
      %v2793 = vunpack.c.l.b16 %v2665
      %v2794 = vunpack.c.l.b16 %v2666
      %v2795 = vunpack.c.l.b16 %v2667
      %v2796 = vunpack.c.l.b16 %v2668
      %v2797 = vunpack.c.l.b16 %v2669
      %v2798 = vunpack.c.l.b16 %v2670
      %v2799 = vunpack.c.l.b16 %v2671
      %v2800 = vunpack.c.l.b16 %v2672
      %v2801 = vunpack.c.l.b16 %v2673
      %v2802 = vunpack.c.l.b16 %v2674
      %v2803 = vunpack.c.l.b16 %v2675
      %v2804 = vunpack.c.l.b16 %v2676
      %v2805 = vunpack.c.l.b16 %v2677
      %v2806 = vunpack.c.l.b16 %v2678
      %v2807 = vunpack.c.l.b16 %v2679
      %v2808 = vunpack.c.l.b16 %v2680
      %v2809 = vunpack.c.l.b16 %v2681
      %v2810 = vunpack.c.l.b16 %v2682
      %v2811 = vunpack.c.l.b16 %v2683
      %v2812 = vunpack.c.l.b16 %v2684
      %v2813 = vunpack.c.l.b16 %v2685
      %v2814 = vunpack.c.l.b16 %v2686
      %v2815 = vunpack.c.l.b16 %v2687
      %v2816 = vunpack.c.l.b16 %v2688
      %v2817 = vunpack.c.l.b16 %v2689
      %v2818 = vunpack.c.l.b16 %v2690
      %v2819 = vunpack.c.l.b16 %v2691
      %v2820 = vunpack.c.l.b16 %v2692
      %v2821 = vunpack.c.l.b16 %v2693
      %v2822 = vunpack.c.l.b16 %v2694
      %v2823 = vunpack.c.l.b16 %v2695
      %v2824 = vunpack.c.l.b16 %v2696
      %v2825 = vunpack.c.l.b16 %v2697
      %v2826 = vunpack.c.l.b16 %v2698
      %v2827 = vunpack.c.l.b16 %v2699
      %v2828 = vunpack.c.l.b16 %v2700
      %v2829 = vunpack.c.l.b16 %v2701
      %v2830 = vunpack.c.l.b16 %v2702
      %v2831 = vunpack.c.l.b16 %v2703
      %v2832 = vunpack.c.l.b16 %v2704
      %v2833 = vunpack.c.l.b16 %v2705
      %v2834 = vunpack.c.l.b16 %v2706
      %v2835 = vunpack.c.l.b16 %v2707
      %v2836 = vunpack.c.l.b16 %v2708
      %v2837 = vunpack.c.l.b16 %v2709
      %v2838 = vunpack.c.l.b16 %v2710
      %v2839 = vunpack.c.l.b16 %v2711
      %v2840 = vunpack.c.l.b16 %v2712
      %v2841 = vunpack.c.l.b16 %v2713
      %v2842 = vunpack.c.l.b16 %v2714
      %v2843 = vunpack.c.l.b16 %v2715
      %v2844 = vunpack.c.l.b16 %v2716
      %v2845 = vunpack.c.l.b16 %v2717
      %v2846 = vunpack.c.l.b16 %v2718
      %v2847 = vunpack.c.l.b16 %v2719
      %v2848 = vunpack.c.l.b16 %v2720
      %v2849 = vunpack.c.l.b16 %v2721
      %v2850 = vunpack.c.l.b16 %v2722
      %v2851 = vunpack.c.l.b16 %v2723
      %v2852 = vunpack.c.l.b16 %v2724
      %v2853 = vunpack.c.l.b16 %v2725
      %v2854 = vunpack.c.l.b16 %v2726
      %v2855 = vunpack.c.l.b16 %v2727
      %v2856 = vpack.c.b16 %v2793, %v2792
      %v2857 = vpack.c.b16 %v2795, %v2794
      %v2858 = vpack.c.b16 %v2797, %v2796
      %v2859 = vpack.c.b16 %v2799, %v2798
      %v2860 = vpack.c.b16 %v2801, %v2800
      %v2861 = vpack.c.b16 %v2803, %v2802
      %v2862 = vpack.c.b16 %v2805, %v2804
      %v2863 = vpack.c.b16 %v2807, %v2806
      %v2864 = vpack.c.b16 %v2809, %v2808
      %v2865 = vpack.c.b16 %v2811, %v2810
      %v2866 = vpack.c.b16 %v2813, %v2812
      %v2867 = vpack.c.b16 %v2815, %v2814
      %v2868 = vpack.c.b16 %v2817, %v2816
      %v2869 = vpack.c.b16 %v2819, %v2818
      %v2870 = vpack.c.b16 %v2821, %v2820
      %v2871 = vpack.c.b16 %v2823, %v2822
      %v2872 = vpack.c.b16 %v2825, %v2824
      %v2873 = vpack.c.b16 %v2827, %v2826
      %v2874 = vpack.c.b16 %v2829, %v2828
      %v2875 = vpack.c.b16 %v2831, %v2830
      %v2876 = vpack.c.b16 %v2833, %v2832
      %v2877 = vpack.c.b16 %v2835, %v2834
      %v2878 = vpack.c.b16 %v2837, %v2836
      %v2879 = vpack.c.b16 %v2839, %v2838
      %v2880 = vpack.c.b16 %v2841, %v2840
      %v2881 = vpack.c.b16 %v2843, %v2842
      %v2882 = vpack.c.b16 %v2845, %v2844
      %v2883 = vpack.c.b16 %v2847, %v2846
      %v2884 = vpack.c.b16 %v2849, %v2848
      %v2885 = vpack.c.b16 %v2851, %v2850
      %v2886 = vpack.c.b16 %v2853, %v2852
      %v2887 = vpack.c.b16 %v2855, %v2854
      %2920 = vmatprep.subr.bf16.mxu0 0
      %2921 = vmatpush1.bf16.msra.mxu0 %v2856
      %2922 = vmatprep.subr.bf16.mxu0 0
      %2923 = vmatpush1.bf16.msra.mxu0 %v2857
      %2924 = vmatprep.subr.bf16.mxu0 0
      %2925 = vmatpush1.bf16.msra.mxu0 %v2858
      %2926 = vmatprep.subr.bf16.mxu0 0
      %2927 = vmatpush1.bf16.msra.mxu0 %v2859
      %2928 = vmatprep.subr.bf16.mxu0 0
      %2929 = vmatpush1.bf16.msra.mxu0 %v2860
      %2930 = vmatprep.subr.bf16.mxu0 0
      %2931 = vmatpush1.bf16.msra.mxu0 %v2861
      %2932 = vmatprep.subr.bf16.mxu0 0
      %2933 = vmatpush1.bf16.msra.mxu0 %v2862
      %2934 = vmatprep.subr.bf16.mxu0 0
      %2935 = vmatpush1.bf16.msra.mxu0 %v2863
      %2936 = vmatprep.subr.bf16.mxu0 0
      %2937 = vmatpush1.bf16.msra.mxu0 %v2864
      %2938 = vmatprep.subr.bf16.mxu0 0
      %2939 = vmatpush1.bf16.msra.mxu0 %v2865
      %2940 = vmatprep.subr.bf16.mxu0 0
      %2941 = vmatpush1.bf16.msra.mxu0 %v2866
      %2942 = vmatprep.subr.bf16.mxu0 0
      %2943 = vmatpush1.bf16.msra.mxu0 %v2867
      %2944 = vmatprep.subr.bf16.mxu0 0
      %2945 = vmatpush1.bf16.msra.mxu0 %v2868
      %2946 = vmatprep.subr.bf16.mxu0 0
      %2947 = vmatpush1.bf16.msra.mxu0 %v2869
      %2948 = vmatprep.subr.bf16.mxu0 0
      %2949 = vmatpush1.bf16.msra.mxu0 %v2870
      %2950 = vmatprep.subr.bf16.mxu0 0
      %2951 = vmatpush1.bf16.msra.mxu0 %v2871
      %2952 = vmatprep.mubr.bf16.mxu0 %v2601
      %2953 = vmatmul.mubr.bf16.gmra.mrb[0].mxu0 %v2600
      %v2954 = vpop.f32.mrb[0].mxu0
      %v2955 = vadd.f32 0.0, %v2954
      %v2956 = vpop.f32.mrb[0].mxu0
      %v2957 = vpop.f32.mrb[0].mxu0
      %v2958 = vadd.f32 0.0, %v2957
      %v2959 = vpop.f32.mrb[0].mxu0
      %2960 = vmatprep.mubr.bf16.mxu0 %v2605
      %2961 = vmatmul.mubr.bf16.gmra.mrb[0].mxu0 %v2604
      %v2962 = vpop.f32.mrb[0].mxu0
      %v2963 = vadd.f32 0.0, %v2962
      %v2964 = vpop.f32.mrb[0].mxu0
      %v2965 = vpop.f32.mrb[0].mxu0
      %v2966 = vadd.f32 0.0, %v2965
      %v2967 = vpop.f32.mrb[0].mxu0
      %2968 = vmatprep.mubr.bf16.mxu0 %v2609
      %2969 = vmatmul.mubr.bf16.gmra.mrb[0].mxu0 %v2608
      %v2970 = vpop.f32.mrb[0].mxu0
      %v2971 = vadd.f32 0.0, %v2970
      %v2972 = vpop.f32.mrb[0].mxu0
      %v2973 = vpop.f32.mrb[0].mxu0
      %v2974 = vadd.f32 0.0, %v2973
      %v2975 = vpop.f32.mrb[0].mxu0
      %2976 = vmatprep.mubr.bf16.mxu0 %v2613
      %2977 = vmatmul.mubr.bf16.gmra.mrb[0].mxu0 %v2612
      %v2978 = vpop.f32.mrb[0].mxu0
      %v2979 = vadd.f32 0.0, %v2978
      %v2980 = vpop.f32.mrb[0].mxu0
      %v2981 = vpop.f32.mrb[0].mxu0
      %v2982 = vadd.f32 0.0, %v2981
      %v2983 = vpop.f32.mrb[0].mxu0
      %2984 = vmatprep.mubr.bf16.mxu0 %v2617
      %2985 = vmatmul.mubr.bf16.gmra.mrb[0].mxu0 %v2616
      %v2986 = vpop.f32.mrb[0].mxu0
      %v2987 = vadd.f32 0.0, %v2986
      %v2988 = vpop.f32.mrb[0].mxu0
      %v2989 = vpop.f32.mrb[0].mxu0
      %v2990 = vadd.f32 0.0, %v2989
      %v2991 = vpop.f32.mrb[0].mxu0
      %2992 = vmatprep.mubr.bf16.mxu0 %v2621
      %2993 = vmatmul.mubr.bf16.gmra.mrb[0].mxu0 %v2620
      %v2994 = vpop.f32.mrb[0].mxu0
      %v2995 = vadd.f32 0.0, %v2994
      %v2996 = vpop.f32.mrb[0].mxu0
      %v2997 = vpop.f32.mrb[0].mxu0
      %v2998 = vadd.f32 0.0, %v2997
      %v2999 = vpop.f32.mrb[0].mxu0
      %3000 = vmatprep.mubr.bf16.mxu0 %v2625
      %3001 = vmatmul.mubr.bf16.gmra.mrb[0].mxu0 %v2624
      %v3002 = vpop.f32.mrb[0].mxu0
      %v3003 = vadd.f32 0.0, %v3002
      %v3004 = vpop.f32.mrb[0].mxu0
      %v3005 = vpop.f32.mrb[0].mxu0
      %v3006 = vadd.f32 0.0, %v3005
      %v3007 = vpop.f32.mrb[0].mxu0
      %3008 = vmatprep.mubr.bf16.mxu0 %v2629
      %3009 = vmatmul.mubr.bf16.gmra.mrb[0].mxu0 %v2628
      %v3010 = vpop.f32.mrb[0].mxu0
      %v3011 = vadd.f32 0.0, %v3010
      %v3012 = vpop.f32.mrb[0].mxu0
      %v3013 = vpop.f32.mrb[0].mxu0
      %v3014 = vadd.f32 0.0, %v3013
      %v3015 = vpop.f32.mrb[0].mxu0
      %3016 = vmatprep.mubr.bf16.mxu0 %v2633
      %3017 = vmatmul.mubr.bf16.gmra.mrb[0].mxu0 %v2632
      %v3018 = vpop.f32.mrb[0].mxu0
      %v3019 = vadd.f32 0.0, %v3018
      %v3020 = vpop.f32.mrb[0].mxu0
      %v3021 = vpop.f32.mrb[0].mxu0
      %v3022 = vadd.f32 0.0, %v3021
      %v3023 = vpop.f32.mrb[0].mxu0
      %3024 = vmatprep.mubr.bf16.mxu0 %v2637
      %3025 = vmatmul.mubr.bf16.gmra.mrb[0].mxu0 %v2636
      %v3026 = vpop.f32.mrb[0].mxu0
      %v3027 = vadd.f32 0.0, %v3026
      %v3028 = vpop.f32.mrb[0].mxu0
      %v3029 = vpop.f32.mrb[0].mxu0
      %v3030 = vadd.f32 0.0, %v3029
      %v3031 = vpop.f32.mrb[0].mxu0
      %3032 = vmatprep.mubr.bf16.mxu0 %v2641
      %3033 = vmatmul.mubr.bf16.gmra.mrb[0].mxu0 %v2640
      %v3034 = vpop.f32.mrb[0].mxu0
      %v3035 = vadd.f32 0.0, %v3034
      %v3036 = vpop.f32.mrb[0].mxu0
      %v3037 = vpop.f32.mrb[0].mxu0
      %v3038 = vadd.f32 0.0, %v3037
      %v3039 = vpop.f32.mrb[0].mxu0
      %3040 = vmatprep.mubr.bf16.mxu0 %v2645
      %3041 = vmatmul.mubr.bf16.gmra.mrb[0].mxu0 %v2644
      %v3042 = vpop.f32.mrb[0].mxu0
      %v3043 = vadd.f32 0.0, %v3042
      %v3044 = vpop.f32.mrb[0].mxu0
      %v3045 = vpop.f32.mrb[0].mxu0
      %v3046 = vadd.f32 0.0, %v3045
      %v3047 = vpop.f32.mrb[0].mxu0
      %3048 = vmatprep.mubr.bf16.mxu0 %v2649
      %3049 = vmatmul.mubr.bf16.gmra.mrb[0].mxu0 %v2648
      %v3050 = vpop.f32.mrb[0].mxu0
      %v3051 = vadd.f32 0.0, %v3050
      %v3052 = vpop.f32.mrb[0].mxu0
      %v3053 = vpop.f32.mrb[0].mxu0
      %v3054 = vadd.f32 0.0, %v3053
      %v3055 = vpop.f32.mrb[0].mxu0
      %3056 = vmatprep.mubr.bf16.mxu0 %v2653
      %3057 = vmatmul.mubr.bf16.gmra.mrb[0].mxu0 %v2652
      %v3058 = vpop.f32.mrb[0].mxu0
      %v3059 = vadd.f32 0.0, %v3058
      %v3060 = vpop.f32.mrb[0].mxu0
      %v3061 = vpop.f32.mrb[0].mxu0
      %v3062 = vadd.f32 0.0, %v3061
      %v3063 = vpop.f32.mrb[0].mxu0
      %3064 = vmatprep.mubr.bf16.mxu0 %v2657
      %3065 = vmatmul.mubr.bf16.gmra.mrb[0].mxu0 %v2656
      %v3066 = vpop.f32.mrb[0].mxu0
      %v3067 = vadd.f32 0.0, %v3066
      %v3068 = vpop.f32.mrb[0].mxu0
      %v3069 = vpop.f32.mrb[0].mxu0
      %v3070 = vadd.f32 0.0, %v3069
      %v3071 = vpop.f32.mrb[0].mxu0
      %3072 = vmatprep.mubr.bf16.mxu0 %v2661
      %3073 = vmatmul.mubr.bf16.gmra.mrb[0].mxu0 %v2660
      %v3074 = vpop.f32.mrb[0].mxu0
      %v3075 = vadd.f32 0.0, %v3074
      %v3076 = vpop.f32.mrb[0].mxu0
      %v3077 = vpop.f32.mrb[0].mxu0
      %v3078 = vadd.f32 0.0, %v3077
      %v3079 = vpop.f32.mrb[0].mxu0
      %3080 = vdwg.mxu0
      %3081 = vmatprep.subr.bf16.mxu0 0
      %3082 = vmatpush1.bf16.msra.mxu0 %v2872
      %3083 = vmatprep.subr.bf16.mxu0 0
      %3084 = vmatpush1.bf16.msra.mxu0 %v2873
      %3085 = vmatprep.subr.bf16.mxu0 0
      %3086 = vmatpush1.bf16.msra.mxu0 %v2874
      %3087 = vmatprep.subr.bf16.mxu0 0
      %3088 = vmatpush1.bf16.msra.mxu0 %v2875
      %3089 = vmatprep.subr.bf16.mxu0 0
      %3090 = vmatpush1.bf16.msra.mxu0 %v2876
      %3091 = vmatprep.subr.bf16.mxu0 0
      %3092 = vmatpush1.bf16.msra.mxu0 %v2877
      %3093 = vmatprep.subr.bf16.mxu0 0
      %3094 = vmatpush1.bf16.msra.mxu0 %v2878
      %3095 = vmatprep.subr.bf16.mxu0 0
      %3096 = vmatpush1.bf16.msra.mxu0 %v2879
      %3097 = vmatprep.subr.bf16.mxu0 0
      %3098 = vmatpush1.bf16.msra.mxu0 %v2880
      %3099 = vmatprep.subr.bf16.mxu0 0
      %3100 = vmatpush1.bf16.msra.mxu0 %v2881
      %3101 = vmatprep.subr.bf16.mxu0 0
      %3102 = vmatpush1.bf16.msra.mxu0 %v2882
      %3103 = vmatprep.subr.bf16.mxu0 0
      %3104 = vmatpush1.bf16.msra.mxu0 %v2883
      %3105 = vmatprep.subr.bf16.mxu0 0
      %3106 = vmatpush1.bf16.msra.mxu0 %v2884
      %3107 = vmatprep.subr.bf16.mxu0 0
      %3108 = vmatpush1.bf16.msra.mxu0 %v2885
      %3109 = vmatprep.subr.bf16.mxu0 0
      %3110 = vmatpush1.bf16.msra.mxu0 %v2886
      %3111 = vmatprep.subr.bf16.mxu0 0
      %3112 = vmatpush1.bf16.msra.mxu0 %v2887
      %3113 = vmatprep.mubr.bf16.mxu0 %v2603
      %3114 = vmatmul.mubr.bf16.gmra.mrb[0].mxu0 %v2602
      %v3115 = vpop.f32.mrb[0].mxu0
      %v3116 = vadd.f32 %v2955, %v3115
      %v3117 = vpop.f32.mrb[0].mxu0
      %v3118 = vpop.f32.mrb[0].mxu0
      %v3119 = vadd.f32 %v2958, %v3118
      %v3120 = vpop.f32.mrb[0].mxu0
      %3121 = vmatprep.mubr.bf16.mxu0 %v2607
      %3122 = vmatmul.mubr.bf16.gmra.mrb[0].mxu0 %v2606
      %v3123 = vpop.f32.mrb[0].mxu0
      %v3124 = vadd.f32 %v2963, %v3123
      %v3125 = vpop.f32.mrb[0].mxu0
      %v3126 = vpop.f32.mrb[0].mxu0
      %v3127 = vadd.f32 %v2966, %v3126
      %v3128 = vpop.f32.mrb[0].mxu0
      %3129 = vmatprep.mubr.bf16.mxu0 %v2611
      %3130 = vmatmul.mubr.bf16.gmra.mrb[0].mxu0 %v2610
      %v3131 = vpop.f32.mrb[0].mxu0
      %v3132 = vadd.f32 %v2971, %v3131
      %v3133 = vpop.f32.mrb[0].mxu0
      %v3134 = vpop.f32.mrb[0].mxu0
      %v3135 = vadd.f32 %v2974, %v3134
      %v3136 = vpop.f32.mrb[0].mxu0
      %3137 = vmatprep.mubr.bf16.mxu0 %v2615
      %3138 = vmatmul.mubr.bf16.gmra.mrb[0].mxu0 %v2614
      %v3139 = vpop.f32.mrb[0].mxu0
      %v3140 = vadd.f32 %v2979, %v3139
      %v3141 = vpop.f32.mrb[0].mxu0
      %v3142 = vpop.f32.mrb[0].mxu0
      %v3143 = vadd.f32 %v2982, %v3142
      %v3144 = vpop.f32.mrb[0].mxu0
      %3145 = vmatprep.mubr.bf16.mxu0 %v2619
      %3146 = vmatmul.mubr.bf16.gmra.mrb[0].mxu0 %v2618
      %v3147 = vpop.f32.mrb[0].mxu0
      %v3148 = vadd.f32 %v2987, %v3147
      %v3149 = vpop.f32.mrb[0].mxu0
      %v3150 = vpop.f32.mrb[0].mxu0
      %v3151 = vadd.f32 %v2990, %v3150
      %v3152 = vpop.f32.mrb[0].mxu0
      %3153 = vmatprep.mubr.bf16.mxu0 %v2623
      %3154 = vmatmul.mubr.bf16.gmra.mrb[0].mxu0 %v2622
      %v3155 = vpop.f32.mrb[0].mxu0
      %v3156 = vadd.f32 %v2995, %v3155
      %v3157 = vpop.f32.mrb[0].mxu0
      %v3158 = vpop.f32.mrb[0].mxu0
      %v3159 = vadd.f32 %v2998, %v3158
      %v3160 = vpop.f32.mrb[0].mxu0
      %3161 = vmatprep.mubr.bf16.mxu0 %v2627
      %3162 = vmatmul.mubr.bf16.gmra.mrb[0].mxu0 %v2626
      %v3163 = vpop.f32.mrb[0].mxu0
      %v3164 = vadd.f32 %v3003, %v3163
      %v3165 = vpop.f32.mrb[0].mxu0
      %v3166 = vpop.f32.mrb[0].mxu0
      %v3167 = vadd.f32 %v3006, %v3166
      %v3168 = vpop.f32.mrb[0].mxu0
      %3169 = vmatprep.mubr.bf16.mxu0 %v2631
      %3170 = vmatmul.mubr.bf16.gmra.mrb[0].mxu0 %v2630
      %v3171 = vpop.f32.mrb[0].mxu0
      %v3172 = vadd.f32 %v3011, %v3171
      %v3173 = vpop.f32.mrb[0].mxu0
      %v3174 = vpop.f32.mrb[0].mxu0
      %v3175 = vadd.f32 %v3014, %v3174
      %v3176 = vpop.f32.mrb[0].mxu0
      %3177 = vmatprep.mubr.bf16.mxu0 %v2635
      %3178 = vmatmul.mubr.bf16.gmra.mrb[0].mxu0 %v2634
      %v3179 = vpop.f32.mrb[0].mxu0
      %v3180 = vadd.f32 %v3019, %v3179
      %v3181 = vpop.f32.mrb[0].mxu0
      %v3182 = vpop.f32.mrb[0].mxu0
      %v3183 = vadd.f32 %v3022, %v3182
      %v3184 = vpop.f32.mrb[0].mxu0
      %3185 = vmatprep.mubr.bf16.mxu0 %v2639
      %3186 = vmatmul.mubr.bf16.gmra.mrb[0].mxu0 %v2638
      %v3187 = vpop.f32.mrb[0].mxu0
      %v3188 = vadd.f32 %v3027, %v3187
      %v3189 = vpop.f32.mrb[0].mxu0
      %v3190 = vpop.f32.mrb[0].mxu0
      %v3191 = vadd.f32 %v3030, %v3190
      %v3192 = vpop.f32.mrb[0].mxu0
      %3193 = vmatprep.mubr.bf16.mxu0 %v2643
      %3194 = vmatmul.mubr.bf16.gmra.mrb[0].mxu0 %v2642
      %v3195 = vpop.f32.mrb[0].mxu0
      %v3196 = vadd.f32 %v3035, %v3195
      %v3197 = vpop.f32.mrb[0].mxu0
      %v3198 = vpop.f32.mrb[0].mxu0
      %v3199 = vadd.f32 %v3038, %v3198
      %v3200 = vpop.f32.mrb[0].mxu0
      %3201 = vmatprep.mubr.bf16.mxu0 %v2647
      %3202 = vmatmul.mubr.bf16.gmra.mrb[0].mxu0 %v2646
      %v3203 = vpop.f32.mrb[0].mxu0
      %v3204 = vadd.f32 %v3043, %v3203
      %v3205 = vpop.f32.mrb[0].mxu0
      %v3206 = vpop.f32.mrb[0].mxu0
      %v3207 = vadd.f32 %v3046, %v3206
      %v3208 = vpop.f32.mrb[0].mxu0
      %3209 = vmatprep.mubr.bf16.mxu0 %v2651
      %3210 = vmatmul.mubr.bf16.gmra.mrb[0].mxu0 %v2650
      %v3211 = vpop.f32.mrb[0].mxu0
      %v3212 = vadd.f32 %v3051, %v3211
      %v3213 = vpop.f32.mrb[0].mxu0
      %v3214 = vpop.f32.mrb[0].mxu0
      %v3215 = vadd.f32 %v3054, %v3214
      %v3216 = vpop.f32.mrb[0].mxu0
      %3217 = vmatprep.mubr.bf16.mxu0 %v2655
      %3218 = vmatmul.mubr.bf16.gmra.mrb[0].mxu0 %v2654
      %v3219 = vpop.f32.mrb[0].mxu0
      %v3220 = vadd.f32 %v3059, %v3219
      %v3221 = vpop.f32.mrb[0].mxu0
      %v3222 = vpop.f32.mrb[0].mxu0
      %v3223 = vadd.f32 %v3062, %v3222
      %v3224 = vpop.f32.mrb[0].mxu0
      %3225 = vmatprep.mubr.bf16.mxu0 %v2659
      %3226 = vmatmul.mubr.bf16.gmra.mrb[0].mxu0 %v2658
      %v3227 = vpop.f32.mrb[0].mxu0
      %v3228 = vadd.f32 %v3067, %v3227
      %v3229 = vpop.f32.mrb[0].mxu0
      %v3230 = vpop.f32.mrb[0].mxu0
      %v3231 = vadd.f32 %v3070, %v3230
      %v3232 = vpop.f32.mrb[0].mxu0
      %3233 = vmatprep.mubr.bf16.mxu0 %v2663
      %3234 = vmatmul.mubr.bf16.gmra.mrb[0].mxu0 %v2662
      %v3235 = vpop.f32.mrb[0].mxu0
      %v3236 = vadd.f32 %v3075, %v3235
      %v3237 = vpop.f32.mrb[0].mxu0
      %v3238 = vpop.f32.mrb[0].mxu0
      %v3239 = vadd.f32 %v3078, %v3238
      %v3240 = vpop.f32.mrb[0].mxu0
      %3241 = vdwg.mxu0
      %v3242 = vmax.f32 %v3116, 0.0
      %v3243 = vmax.f32 %v3119, 0.0
      %v3244 = vmax.f32 %v3124, 0.0
      %v3245 = vmax.f32 %v3127, 0.0
      %v3246 = vmax.f32 %v3132, 0.0
      %v3247 = vmax.f32 %v3135, 0.0
      %v3248 = vmax.f32 %v3140, 0.0
      %v3249 = vmax.f32 %v3143, 0.0
      %v3250 = vmax.f32 %v3148, 0.0
      %v3251 = vmax.f32 %v3151, 0.0
      %v3252 = vmax.f32 %v3156, 0.0
      %v3253 = vmax.f32 %v3159, 0.0
      %v3254 = vmax.f32 %v3164, 0.0
      %v3255 = vmax.f32 %v3167, 0.0
      %v3256 = vmax.f32 %v3172, 0.0
      %v3257 = vmax.f32 %v3175, 0.0
      %v3258 = vmax.f32 %v3180, 0.0
      %v3259 = vmax.f32 %v3183, 0.0
      %v3260 = vmax.f32 %v3188, 0.0
      %v3261 = vmax.f32 %v3191, 0.0
      %v3262 = vmax.f32 %v3196, 0.0
      %v3263 = vmax.f32 %v3199, 0.0
      %v3264 = vmax.f32 %v3204, 0.0
      %v3265 = vmax.f32 %v3207, 0.0
      %v3266 = vmax.f32 %v3212, 0.0
      %v3267 = vmax.f32 %v3215, 0.0
      %v3268 = vmax.f32 %v3220, 0.0
      %v3269 = vmax.f32 %v3223, 0.0
      %v3270 = vmax.f32 %v3228, 0.0
      %v3271 = vmax.f32 %v3231, 0.0
      %v3272 = vmax.f32 %v3236, 0.0
      %v3273 = vmax.f32 %v3239, 0.0
      %v3274 = vpack.c.bf16 %v3243, %v3242
      %v3275 = vpack.c.bf16 %v3245, %v3244
      %v3276 = vpack.c.bf16 %v3247, %v3246
      %v3277 = vpack.c.bf16 %v3249, %v3248
      %v3278 = vpack.c.bf16 %v3251, %v3250
      %v3279 = vpack.c.bf16 %v3253, %v3252
      %v3280 = vpack.c.bf16 %v3255, %v3254
      %v3281 = vpack.c.bf16 %v3257, %v3256
      %v3282 = vpack.c.bf16 %v3259, %v3258
      %v3283 = vpack.c.bf16 %v3261, %v3260
      %v3284 = vpack.c.bf16 %v3263, %v3262
      %v3285 = vpack.c.bf16 %v3265, %v3264
      %v3286 = vpack.c.bf16 %v3267, %v3266
      %v3287 = vpack.c.bf16 %v3269, %v3268
      %v3288 = vpack.c.bf16 %v3271, %v3270
      %v3289 = vpack.c.bf16 %v3273, %v3272
      %v3290 = vld [vmem:[%s4] sm:$0xff]
      %v3291 = vld [vmem:[%s4 + $0x8] sm:$0xff]
      %v3292 = vld [vmem:[%s4 + $0x10] sm:$0xff]
      %v3293 = vld [vmem:[%s4 + $0x18] sm:$0xff]
      %v3294 = vld [vmem:[%s4 + $0x20] sm:$0xff]
      %v3295 = vld [vmem:[%s4 + $0x28] sm:$0xff]
      %v3296 = vld [vmem:[%s4 + $0x30] sm:$0xff]
      %v3297 = vld [vmem:[%s4 + $0x38] sm:$0xff]
      %v3298 = vld [vmem:[%s4 + $0x40] sm:$0xff]
      %v3299 = vld [vmem:[%s4 + $0x48] sm:$0xff]
      %v3300 = vld [vmem:[%s4 + $0x50] sm:$0xff]
      %v3301 = vld [vmem:[%s4 + $0x58] sm:$0xff]
      %v3302 = vld [vmem:[%s4 + $0x60] sm:$0xff]
      %v3303 = vld [vmem:[%s4 + $0x68] sm:$0xff]
      %v3304 = vld [vmem:[%s4 + $0x70] sm:$0xff]
      %v3305 = vld [vmem:[%s4 + $0x78] sm:$0xff]
      %v3322 = vunpack.c.l.b16 %v3290
      %v3323 = vunpack.c.h.b16 %v3290
      %v3324 = vunpack.c.l.b16 %v3291
      %v3325 = vunpack.c.h.b16 %v3291
      %v3326 = vunpack.c.l.b16 %v3292
      %v3327 = vunpack.c.h.b16 %v3292
      %v3328 = vunpack.c.l.b16 %v3293
      %v3329 = vunpack.c.h.b16 %v3293
      %v3330 = vunpack.c.l.b16 %v3294
      %v3331 = vunpack.c.h.b16 %v3294
      %v3332 = vunpack.c.l.b16 %v3295
      %v3333 = vunpack.c.h.b16 %v3295
      %v3334 = vunpack.c.l.b16 %v3296
      %v3335 = vunpack.c.h.b16 %v3296
      %v3336 = vunpack.c.l.b16 %v3297
      %v3337 = vunpack.c.h.b16 %v3297
      %v3338 = vunpack.c.l.b16 %v3298
      %v3339 = vunpack.c.h.b16 %v3298
      %v3340 = vunpack.c.l.b16 %v3299
      %v3341 = vunpack.c.h.b16 %v3299
      %v3342 = vunpack.c.l.b16 %v3300
      %v3343 = vunpack.c.h.b16 %v3300
      %v3344 = vunpack.c.l.b16 %v3301
      %v3345 = vunpack.c.h.b16 %v3301
      %v3346 = vunpack.c.l.b16 %v3302
      %v3347 = vunpack.c.h.b16 %v3302
      %v3348 = vunpack.c.l.b16 %v3303
      %v3349 = vunpack.c.h.b16 %v3303
      %v3350 = vunpack.c.l.b16 %v3304
      %v3351 = vunpack.c.h.b16 %v3304
      %v3352 = vunpack.c.l.b16 %v3305
      %v3353 = vunpack.c.h.b16 %v3305
      %v3354 = vpack.c.b16 %v3324, %v3322
      %v3355 = vpack.c.b16 %v3325, %v3323
      %v3356 = vpack.c.b16 %v3328, %v3326
      %v3357 = vpack.c.b16 %v3329, %v3327
      %v3358 = vpack.c.b16 %v3332, %v3330
      %v3359 = vpack.c.b16 %v3333, %v3331
      %v3360 = vpack.c.b16 %v3336, %v3334
      %v3361 = vpack.c.b16 %v3337, %v3335
      %v3362 = vpack.c.b16 %v3340, %v3338
      %v3363 = vpack.c.b16 %v3341, %v3339
      %v3364 = vpack.c.b16 %v3344, %v3342
      %v3365 = vpack.c.b16 %v3345, %v3343
      %v3366 = vpack.c.b16 %v3348, %v3346
      %v3367 = vpack.c.b16 %v3349, %v3347
      %v3368 = vpack.c.b16 %v3352, %v3350
      %v3369 = vpack.c.b16 %v3353, %v3351
      %3386 = vmatprep.subr.bf16.mxu0 %v3355
      %3387 = vmatpush1.bf16.msra.mxu0 %v3354
      %3388 = vmatprep.subr.bf16.mxu0 %v3357
      %3389 = vmatpush1.bf16.msra.mxu0 %v3356
      %3390 = vmatprep.subr.bf16.mxu0 %v3359
      %3391 = vmatpush1.bf16.msra.mxu0 %v3358
      %3392 = vmatprep.subr.bf16.mxu0 %v3361
      %3393 = vmatpush1.bf16.msra.mxu0 %v3360
      %3394 = vmatprep.subr.bf16.mxu0 %v3363
      %3395 = vmatpush1.bf16.msra.mxu0 %v3362
      %3396 = vmatprep.subr.bf16.mxu0 %v3365
      %3397 = vmatpush1.bf16.msra.mxu0 %v3364
      %3398 = vmatprep.subr.bf16.mxu0 %v3367
      %3399 = vmatpush1.bf16.msra.mxu0 %v3366
      %3400 = vmatprep.subr.bf16.mxu0 %v3369
      %3401 = vmatpush1.bf16.msra.mxu0 %v3368
      %3402 = vmatprep.subr.bf16.mxu0 0
      %3403 = vmatpush1.bf16.msra.mxu0 0
      %3404 = vmatprep.subr.bf16.mxu0 0
      %3405 = vmatpush1.bf16.msra.mxu0 0
      %3406 = vmatprep.subr.bf16.mxu0 0
      %3407 = vmatpush1.bf16.msra.mxu0 0
      %3408 = vmatprep.subr.bf16.mxu0 0
      %3409 = vmatpush1.bf16.msra.mxu0 0
      %3410 = vmatprep.subr.bf16.mxu0 0
      %3411 = vmatpush1.bf16.msra.mxu0 0
      %3412 = vmatprep.subr.bf16.mxu0 0
      %3413 = vmatpush1.bf16.msra.mxu0 0
      %3414 = vmatprep.subr.bf16.mxu0 0
      %3415 = vmatpush1.bf16.msra.mxu0 0
      %3416 = vmatprep.subr.bf16.mxu0 0
      %3417 = vmatpush1.bf16.msra.mxu0 0
      %3418 = vmatprep.mubr.bf16.mxu0 0
      %3419 = vmatmul.mubr.bf16.gmra.mrb[0].mxu0 %v3274
      %v3420 = vpop.f32.mrb[0].mxu0
      %v3421 = vadd.f32 0.0, %v3420
      %v3422 = vpop.f32.mrb[0].mxu0
      %v3423 = vadd.f32 0.0, %v3422
      %v3424 = vpop.f32.mrb[0].mxu0
      %v3425 = vadd.f32 0.0, %v3424
      %v3426 = vpop.f32.mrb[0].mxu0
      %v3427 = vadd.f32 0.0, %v3426
      %3428 = vmatprep.mubr.bf16.mxu0 0
      %3429 = vmatmul.mubr.bf16.gmra.mrb[0].mxu0 %v3275
      %v3430 = vpop.f32.mrb[0].mxu0
      %v3431 = vadd.f32 0.0, %v3430
      %v3432 = vpop.f32.mrb[0].mxu0
      %v3433 = vadd.f32 0.0, %v3432
      %v3434 = vpop.f32.mrb[0].mxu0
      %v3435 = vadd.f32 0.0, %v3434
      %v3436 = vpop.f32.mrb[0].mxu0
      %v3437 = vadd.f32 0.0, %v3436
      %3438 = vmatprep.mubr.bf16.mxu0 0
      %3439 = vmatmul.mubr.bf16.gmra.mrb[0].mxu0 %v3276
      %v3440 = vpop.f32.mrb[0].mxu0
      %v3441 = vadd.f32 0.0, %v3440
      %v3442 = vpop.f32.mrb[0].mxu0
      %v3443 = vadd.f32 0.0, %v3442
      %v3444 = vpop.f32.mrb[0].mxu0
      %v3445 = vadd.f32 0.0, %v3444
      %v3446 = vpop.f32.mrb[0].mxu0
      %v3447 = vadd.f32 0.0, %v3446
      %3448 = vmatprep.mubr.bf16.mxu0 0
      %3449 = vmatmul.mubr.bf16.gmra.mrb[0].mxu0 %v3277
      %v3450 = vpop.f32.mrb[0].mxu0
      %v3451 = vadd.f32 0.0, %v3450
      %v3452 = vpop.f32.mrb[0].mxu0
      %v3453 = vadd.f32 0.0, %v3452
      %v3454 = vpop.f32.mrb[0].mxu0
      %v3455 = vadd.f32 0.0, %v3454
      %v3456 = vpop.f32.mrb[0].mxu0
      %v3457 = vadd.f32 0.0, %v3456
      %3458 = vmatprep.mubr.bf16.mxu0 0
      %3459 = vmatmul.mubr.bf16.gmra.mrb[0].mxu0 %v3278
      %v3460 = vpop.f32.mrb[0].mxu0
      %v3461 = vadd.f32 0.0, %v3460
      %v3462 = vpop.f32.mrb[0].mxu0
      %v3463 = vadd.f32 0.0, %v3462
      %v3464 = vpop.f32.mrb[0].mxu0
      %v3465 = vadd.f32 0.0, %v3464
      %v3466 = vpop.f32.mrb[0].mxu0
      %v3467 = vadd.f32 0.0, %v3466
      %3468 = vmatprep.mubr.bf16.mxu0 0
      %3469 = vmatmul.mubr.bf16.gmra.mrb[0].mxu0 %v3279
      %v3470 = vpop.f32.mrb[0].mxu0
      %v3471 = vadd.f32 0.0, %v3470
      %v3472 = vpop.f32.mrb[0].mxu0
      %v3473 = vadd.f32 0.0, %v3472
      %v3474 = vpop.f32.mrb[0].mxu0
      %v3475 = vadd.f32 0.0, %v3474
      %v3476 = vpop.f32.mrb[0].mxu0
      %v3477 = vadd.f32 0.0, %v3476
      %3478 = vmatprep.mubr.bf16.mxu0 0
      %3479 = vmatmul.mubr.bf16.gmra.mrb[0].mxu0 %v3280
      %v3480 = vpop.f32.mrb[0].mxu0
      %v3481 = vadd.f32 0.0, %v3480
      %v3482 = vpop.f32.mrb[0].mxu0
      %v3483 = vadd.f32 0.0, %v3482
      %v3484 = vpop.f32.mrb[0].mxu0
      %v3485 = vadd.f32 0.0, %v3484
      %v3486 = vpop.f32.mrb[0].mxu0
      %v3487 = vadd.f32 0.0, %v3486
      %3488 = vmatprep.mubr.bf16.mxu0 0
      %3489 = vmatmul.mubr.bf16.gmra.mrb[0].mxu0 %v3281
      %v3490 = vpop.f32.mrb[0].mxu0
      %v3491 = vadd.f32 0.0, %v3490
      %v3492 = vpop.f32.mrb[0].mxu0
      %v3493 = vadd.f32 0.0, %v3492
      %v3494 = vpop.f32.mrb[0].mxu0
      %v3495 = vadd.f32 0.0, %v3494
      %v3496 = vpop.f32.mrb[0].mxu0
      %v3497 = vadd.f32 0.0, %v3496
      %3498 = vmatprep.mubr.bf16.mxu0 0
      %3499 = vmatmul.mubr.bf16.gmra.mrb[0].mxu0 %v3282
      %v3500 = vpop.f32.mrb[0].mxu0
      %v3501 = vadd.f32 0.0, %v3500
      %v3502 = vpop.f32.mrb[0].mxu0
      %v3503 = vadd.f32 0.0, %v3502
      %v3504 = vpop.f32.mrb[0].mxu0
      %v3505 = vadd.f32 0.0, %v3504
      %v3506 = vpop.f32.mrb[0].mxu0
      %v3507 = vadd.f32 0.0, %v3506
      %3508 = vmatprep.mubr.bf16.mxu0 0
      %3509 = vmatmul.mubr.bf16.gmra.mrb[0].mxu0 %v3283
      %v3510 = vpop.f32.mrb[0].mxu0
      %v3511 = vadd.f32 0.0, %v3510
      %v3512 = vpop.f32.mrb[0].mxu0
      %v3513 = vadd.f32 0.0, %v3512
      %v3514 = vpop.f32.mrb[0].mxu0
      %v3515 = vadd.f32 0.0, %v3514
      %v3516 = vpop.f32.mrb[0].mxu0
      %v3517 = vadd.f32 0.0, %v3516
      %3518 = vmatprep.mubr.bf16.mxu0 0
      %3519 = vmatmul.mubr.bf16.gmra.mrb[0].mxu0 %v3284
      %v3520 = vpop.f32.mrb[0].mxu0
      %v3521 = vadd.f32 0.0, %v3520
      %v3522 = vpop.f32.mrb[0].mxu0
      %v3523 = vadd.f32 0.0, %v3522
      %v3524 = vpop.f32.mrb[0].mxu0
      %v3525 = vadd.f32 0.0, %v3524
      %v3526 = vpop.f32.mrb[0].mxu0
      %v3527 = vadd.f32 0.0, %v3526
      %3528 = vmatprep.mubr.bf16.mxu0 0
      %3529 = vmatmul.mubr.bf16.gmra.mrb[0].mxu0 %v3285
      %v3530 = vpop.f32.mrb[0].mxu0
      %v3531 = vadd.f32 0.0, %v3530
      %v3532 = vpop.f32.mrb[0].mxu0
      %v3533 = vadd.f32 0.0, %v3532
      %v3534 = vpop.f32.mrb[0].mxu0
      %v3535 = vadd.f32 0.0, %v3534
      %v3536 = vpop.f32.mrb[0].mxu0
      %v3537 = vadd.f32 0.0, %v3536
      %3538 = vmatprep.mubr.bf16.mxu0 0
      %3539 = vmatmul.mubr.bf16.gmra.mrb[0].mxu0 %v3286
      %v3540 = vpop.f32.mrb[0].mxu0
      %v3541 = vadd.f32 0.0, %v3540
      %v3542 = vpop.f32.mrb[0].mxu0
      %v3543 = vadd.f32 0.0, %v3542
      %v3544 = vpop.f32.mrb[0].mxu0
      %v3545 = vadd.f32 0.0, %v3544
      %v3546 = vpop.f32.mrb[0].mxu0
      %v3547 = vadd.f32 0.0, %v3546
      %3548 = vmatprep.mubr.bf16.mxu0 0
      %3549 = vmatmul.mubr.bf16.gmra.mrb[0].mxu0 %v3287
      %v3550 = vpop.f32.mrb[0].mxu0
      %v3551 = vadd.f32 0.0, %v3550
      %v3552 = vpop.f32.mrb[0].mxu0
      %v3553 = vadd.f32 0.0, %v3552
      %v3554 = vpop.f32.mrb[0].mxu0
      %v3555 = vadd.f32 0.0, %v3554
      %v3556 = vpop.f32.mrb[0].mxu0
      %v3557 = vadd.f32 0.0, %v3556
      %3558 = vmatprep.mubr.bf16.mxu0 0
      %3559 = vmatmul.mubr.bf16.gmra.mrb[0].mxu0 %v3288
      %v3560 = vpop.f32.mrb[0].mxu0
      %v3561 = vadd.f32 0.0, %v3560
      %v3562 = vpop.f32.mrb[0].mxu0
      %v3563 = vadd.f32 0.0, %v3562
      %v3564 = vpop.f32.mrb[0].mxu0
      %v3565 = vadd.f32 0.0, %v3564
      %v3566 = vpop.f32.mrb[0].mxu0
      %v3567 = vadd.f32 0.0, %v3566
      %3568 = vmatprep.mubr.bf16.mxu0 0
      %3569 = vmatmul.mubr.bf16.gmra.mrb[0].mxu0 %v3289
      %v3570 = vpop.f32.mrb[0].mxu0
      %v3571 = vadd.f32 0.0, %v3570
      %v3572 = vpop.f32.mrb[0].mxu0
      %v3573 = vadd.f32 0.0, %v3572
      %v3574 = vpop.f32.mrb[0].mxu0
      %v3575 = vadd.f32 0.0, %v3574
      %v3576 = vpop.f32.mrb[0].mxu0
      %v3577 = vadd.f32 0.0, %v3576
      %3578 = vdwg.mxu0
      %v3579 = vxor.u32 %v3421, 2147483648
      %v3580 = vxor.u32 %v3423, 2147483648
      %v3581 = vxor.u32 %v3425, 2147483648
      %v3582 = vxor.u32 %v3427, 2147483648
      %v3583 = vxor.u32 %v3431, 2147483648
      %v3584 = vxor.u32 %v3433, 2147483648
      %v3585 = vxor.u32 %v3435, 2147483648
      %v3586 = vxor.u32 %v3437, 2147483648
      %v3587 = vxor.u32 %v3441, 2147483648
      %v3588 = vxor.u32 %v3443, 2147483648
      %v3589 = vxor.u32 %v3445, 2147483648
      %v3590 = vxor.u32 %v3447, 2147483648
      %v3591 = vxor.u32 %v3451, 2147483648
      %v3592 = vxor.u32 %v3453, 2147483648
      %v3593 = vxor.u32 %v3455, 2147483648
      %v3594 = vxor.u32 %v3457, 2147483648
      %v3595 = vxor.u32 %v3461, 2147483648
      %v3596 = vxor.u32 %v3463, 2147483648
      %v3597 = vxor.u32 %v3465, 2147483648
      %v3598 = vxor.u32 %v3467, 2147483648
      %v3599 = vxor.u32 %v3471, 2147483648
      %v3600 = vxor.u32 %v3473, 2147483648
      %v3601 = vxor.u32 %v3475, 2147483648
      %v3602 = vxor.u32 %v3477, 2147483648
      %v3603 = vxor.u32 %v3481, 2147483648
      %v3604 = vxor.u32 %v3483, 2147483648
      %v3605 = vxor.u32 %v3485, 2147483648
      %v3606 = vxor.u32 %v3487, 2147483648
      %v3607 = vxor.u32 %v3491, 2147483648
      %v3608 = vxor.u32 %v3493, 2147483648
      %v3609 = vxor.u32 %v3495, 2147483648
      %v3610 = vxor.u32 %v3497, 2147483648
      %v3611 = vxor.u32 %v3501, 2147483648
      %v3612 = vxor.u32 %v3503, 2147483648
      %v3613 = vxor.u32 %v3505, 2147483648
      %v3614 = vxor.u32 %v3507, 2147483648
      %v3615 = vxor.u32 %v3511, 2147483648
      %v3616 = vxor.u32 %v3513, 2147483648
      %v3617 = vxor.u32 %v3515, 2147483648
      %v3618 = vxor.u32 %v3517, 2147483648
      %v3619 = vxor.u32 %v3521, 2147483648
      %v3620 = vxor.u32 %v3523, 2147483648
      %v3621 = vxor.u32 %v3525, 2147483648
      %v3622 = vxor.u32 %v3527, 2147483648
      %v3623 = vxor.u32 %v3531, 2147483648
      %v3624 = vxor.u32 %v3533, 2147483648
      %v3625 = vxor.u32 %v3535, 2147483648
      %v3626 = vxor.u32 %v3537, 2147483648
      %v3627 = vxor.u32 %v3541, 2147483648
      %v3628 = vxor.u32 %v3543, 2147483648
      %v3629 = vxor.u32 %v3545, 2147483648
      %v3630 = vxor.u32 %v3547, 2147483648
      %v3631 = vxor.u32 %v3551, 2147483648
      %v3632 = vxor.u32 %v3553, 2147483648
      %v3633 = vxor.u32 %v3555, 2147483648
      %v3634 = vxor.u32 %v3557, 2147483648
      %v3635 = vxor.u32 %v3561, 2147483648
      %v3636 = vxor.u32 %v3563, 2147483648
      %v3637 = vxor.u32 %v3565, 2147483648
      %v3638 = vxor.u32 %v3567, 2147483648
      %v3639 = vxor.u32 %v3571, 2147483648
      %v3640 = vxor.u32 %v3573, 2147483648
      %v3641 = vxor.u32 %v3575, 2147483648
      %v3642 = vxor.u32 %v3577, 2147483648
      %v3643 = vmul.f32 %v3579, 1.442695
      %v3644 = vpow.pop %v3643
      %v3645 = vmul.f32 %v3580, 1.442695
      %v3646 = vpow.pop %v3645
      %v3647 = vmul.f32 %v3581, 1.442695
      %v3648 = vpow.pop %v3647
      %v3649 = vmul.f32 %v3582, 1.442695
      %v3650 = vpow.pop %v3649
      %v3651 = vmul.f32 %v3583, 1.442695
      %v3652 = vpow.pop %v3651
      %v3653 = vmul.f32 %v3584, 1.442695
      %v3654 = vpow.pop %v3653
      %v3655 = vmul.f32 %v3585, 1.442695
      %v3656 = vpow.pop %v3655
      %v3657 = vmul.f32 %v3586, 1.442695
      %v3658 = vpow.pop %v3657
      %v3659 = vmul.f32 %v3587, 1.442695
      %v3660 = vpow.pop %v3659
      %v3661 = vmul.f32 %v3588, 1.442695
      %v3662 = vpow.pop %v3661
      %v3663 = vmul.f32 %v3589, 1.442695
      %v3664 = vpow.pop %v3663
      %v3665 = vmul.f32 %v3590, 1.442695
      %v3666 = vpow.pop %v3665
      %v3667 = vmul.f32 %v3591, 1.442695
      %v3668 = vpow.pop %v3667
      %v3669 = vmul.f32 %v3592, 1.442695
      %v3670 = vpow.pop %v3669
      %v3671 = vmul.f32 %v3593, 1.442695
      %v3672 = vpow.pop %v3671
      %v3673 = vmul.f32 %v3594, 1.442695
      %v3674 = vpow.pop %v3673
      %v3675 = vmul.f32 %v3595, 1.442695
      %v3676 = vpow.pop %v3675
      %v3677 = vmul.f32 %v3596, 1.442695
      %v3678 = vpow.pop %v3677
      %v3679 = vmul.f32 %v3597, 1.442695
      %v3680 = vpow.pop %v3679
      %v3681 = vmul.f32 %v3598, 1.442695
      %v3682 = vpow.pop %v3681
      %v3683 = vmul.f32 %v3599, 1.442695
      %v3684 = vpow.pop %v3683
      %v3685 = vmul.f32 %v3600, 1.442695
      %v3686 = vpow.pop %v3685
      %v3687 = vmul.f32 %v3601, 1.442695
      %v3688 = vpow.pop %v3687
      %v3689 = vmul.f32 %v3602, 1.442695
      %v3690 = vpow.pop %v3689
      %v3691 = vmul.f32 %v3603, 1.442695
      %v3692 = vpow.pop %v3691
      %v3693 = vmul.f32 %v3604, 1.442695
      %v3694 = vpow.pop %v3693
      %v3695 = vmul.f32 %v3605, 1.442695
      %v3696 = vpow.pop %v3695
      %v3697 = vmul.f32 %v3606, 1.442695
      %v3698 = vpow.pop %v3697
      %v3699 = vmul.f32 %v3607, 1.442695
      %v3700 = vpow.pop %v3699
      %v3701 = vmul.f32 %v3608, 1.442695
      %v3702 = vpow.pop %v3701
      %v3703 = vmul.f32 %v3609, 1.442695
      %v3704 = vpow.pop %v3703
      %v3705 = vmul.f32 %v3610, 1.442695
      %v3706 = vpow.pop %v3705
      %v3707 = vmul.f32 %v3611, 1.442695
      %v3708 = vpow.pop %v3707
      %v3709 = vmul.f32 %v3612, 1.442695
      %v3710 = vpow.pop %v3709
      %v3711 = vmul.f32 %v3613, 1.442695
      %v3712 = vpow.pop %v3711
      %v3713 = vmul.f32 %v3614, 1.442695
      %v3714 = vpow.pop %v3713
      %v3715 = vmul.f32 %v3615, 1.442695
      %v3716 = vpow.pop %v3715
      %v3717 = vmul.f32 %v3616, 1.442695
      %v3718 = vpow.pop %v3717
      %v3719 = vmul.f32 %v3617, 1.442695
      %v3720 = vpow.pop %v3719
      %v3721 = vmul.f32 %v3618, 1.442695
      %v3722 = vpow.pop %v3721
      %v3723 = vmul.f32 %v3619, 1.442695
      %v3724 = vpow.pop %v3723
      %v3725 = vmul.f32 %v3620, 1.442695
      %v3726 = vpow.pop %v3725
      %v3727 = vmul.f32 %v3621, 1.442695
      %v3728 = vpow.pop %v3727
      %v3729 = vmul.f32 %v3622, 1.442695
      %v3730 = vpow.pop %v3729
      %v3731 = vmul.f32 %v3623, 1.442695
      %v3732 = vpow.pop %v3731
      %v3733 = vmul.f32 %v3624, 1.442695
      %v3734 = vpow.pop %v3733
      %v3735 = vmul.f32 %v3625, 1.442695
      %v3736 = vpow.pop %v3735
      %v3737 = vmul.f32 %v3626, 1.442695
      %v3738 = vpow.pop %v3737
      %v3739 = vmul.f32 %v3627, 1.442695
      %v3740 = vpow.pop %v3739
      %v3741 = vmul.f32 %v3628, 1.442695
      %v3742 = vpow.pop %v3741
      %v3743 = vmul.f32 %v3629, 1.442695
      %v3744 = vpow.pop %v3743
      %v3745 = vmul.f32 %v3630, 1.442695
      %v3746 = vpow.pop %v3745
      %v3747 = vmul.f32 %v3631, 1.442695
      %v3748 = vpow.pop %v3747
      %v3749 = vmul.f32 %v3632, 1.442695
      %v3750 = vpow.pop %v3749
      %v3751 = vmul.f32 %v3633, 1.442695
      %v3752 = vpow.pop %v3751
      %v3753 = vmul.f32 %v3634, 1.442695
      %v3754 = vpow.pop %v3753
      %v3755 = vmul.f32 %v3635, 1.442695
      %v3756 = vpow.pop %v3755
      %v3757 = vmul.f32 %v3636, 1.442695
      %v3758 = vpow.pop %v3757
      %v3759 = vmul.f32 %v3637, 1.442695
      %v3760 = vpow.pop %v3759
      %v3761 = vmul.f32 %v3638, 1.442695
      %v3762 = vpow.pop %v3761
      %v3763 = vmul.f32 %v3639, 1.442695
      %v3764 = vpow.pop %v3763
      %v3765 = vmul.f32 %v3640, 1.442695
      %v3766 = vpow.pop %v3765
      %v3767 = vmul.f32 %v3641, 1.442695
      %v3768 = vpow.pop %v3767
      %v3769 = vmul.f32 %v3642, 1.442695
      %v3770 = vpow.pop %v3769
      %v3771 = vadd.f32 %v3644, 1.0
      %v3772 = vadd.f32 %v3646, 1.0
      %v3773 = vadd.f32 %v3648, 1.0
      %v3774 = vadd.f32 %v3650, 1.0
      %v3775 = vadd.f32 %v3652, 1.0
      %v3776 = vadd.f32 %v3654, 1.0
      %v3777 = vadd.f32 %v3656, 1.0
      %v3778 = vadd.f32 %v3658, 1.0
      %v3779 = vadd.f32 %v3660, 1.0
      %v3780 = vadd.f32 %v3662, 1.0
      %v3781 = vadd.f32 %v3664, 1.0
      %v3782 = vadd.f32 %v3666, 1.0
      %v3783 = vadd.f32 %v3668, 1.0
      %v3784 = vadd.f32 %v3670, 1.0
      %v3785 = vadd.f32 %v3672, 1.0
      %v3786 = vadd.f32 %v3674, 1.0
      %v3787 = vadd.f32 %v3676, 1.0
      %v3788 = vadd.f32 %v3678, 1.0
      %v3789 = vadd.f32 %v3680, 1.0
      %v3790 = vadd.f32 %v3682, 1.0
      %v3791 = vadd.f32 %v3684, 1.0
      %v3792 = vadd.f32 %v3686, 1.0
      %v3793 = vadd.f32 %v3688, 1.0
      %v3794 = vadd.f32 %v3690, 1.0
      %v3795 = vadd.f32 %v3692, 1.0
      %v3796 = vadd.f32 %v3694, 1.0
      %v3797 = vadd.f32 %v3696, 1.0
      %v3798 = vadd.f32 %v3698, 1.0
      %v3799 = vadd.f32 %v3700, 1.0
      %v3800 = vadd.f32 %v3702, 1.0
      %v3801 = vadd.f32 %v3704, 1.0
      %v3802 = vadd.f32 %v3706, 1.0
      %v3803 = vadd.f32 %v3708, 1.0
      %v3804 = vadd.f32 %v3710, 1.0
      %v3805 = vadd.f32 %v3712, 1.0
      %v3806 = vadd.f32 %v3714, 1.0
      %v3807 = vadd.f32 %v3716, 1.0
      %v3808 = vadd.f32 %v3718, 1.0
      %v3809 = vadd.f32 %v3720, 1.0
      %v3810 = vadd.f32 %v3722, 1.0
      %v3811 = vadd.f32 %v3724, 1.0
      %v3812 = vadd.f32 %v3726, 1.0
      %v3813 = vadd.f32 %v3728, 1.0
      %v3814 = vadd.f32 %v3730, 1.0
      %v3815 = vadd.f32 %v3732, 1.0
      %v3816 = vadd.f32 %v3734, 1.0
      %v3817 = vadd.f32 %v3736, 1.0
      %v3818 = vadd.f32 %v3738, 1.0
      %v3819 = vadd.f32 %v3740, 1.0
      %v3820 = vadd.f32 %v3742, 1.0
      %v3821 = vadd.f32 %v3744, 1.0
      %v3822 = vadd.f32 %v3746, 1.0
      %v3823 = vadd.f32 %v3748, 1.0
      %v3824 = vadd.f32 %v3750, 1.0
      %v3825 = vadd.f32 %v3752, 1.0
      %v3826 = vadd.f32 %v3754, 1.0
      %v3827 = vadd.f32 %v3756, 1.0
      %v3828 = vadd.f32 %v3758, 1.0
      %v3829 = vadd.f32 %v3760, 1.0
      %v3830 = vadd.f32 %v3762, 1.0
      %v3831 = vadd.f32 %v3764, 1.0
      %v3832 = vadd.f32 %v3766, 1.0
      %v3833 = vadd.f32 %v3768, 1.0
      %v3834 = vadd.f32 %v3770, 1.0
      %v3835 = vrcp.pop %v3771
      %v3836 = vmul.f32 1.0, %v3835
      %v3837 = vrcp.pop %v3772
      %v3838 = vmul.f32 1.0, %v3837
      %v3839 = vrcp.pop %v3773
      %v3840 = vmul.f32 1.0, %v3839
      %v3841 = vrcp.pop %v3774
      %v3842 = vmul.f32 1.0, %v3841
      %v3843 = vrcp.pop %v3775
      %v3844 = vmul.f32 1.0, %v3843
      %v3845 = vrcp.pop %v3776
      %v3846 = vmul.f32 1.0, %v3845
      %v3847 = vrcp.pop %v3777
      %v3848 = vmul.f32 1.0, %v3847
      %v3849 = vrcp.pop %v3778
      %v3850 = vmul.f32 1.0, %v3849
      %v3851 = vrcp.pop %v3779
      %v3852 = vmul.f32 1.0, %v3851
      %v3853 = vrcp.pop %v3780
      %v3854 = vmul.f32 1.0, %v3853
      %v3855 = vrcp.pop %v3781
      %v3856 = vmul.f32 1.0, %v3855
      %v3857 = vrcp.pop %v3782
      %v3858 = vmul.f32 1.0, %v3857
      %v3859 = vrcp.pop %v3783
      %v3860 = vmul.f32 1.0, %v3859
      %v3861 = vrcp.pop %v3784
      %v3862 = vmul.f32 1.0, %v3861
      %v3863 = vrcp.pop %v3785
      %v3864 = vmul.f32 1.0, %v3863
      %v3865 = vrcp.pop %v3786
      %v3866 = vmul.f32 1.0, %v3865
      %v3867 = vrcp.pop %v3787
      %v3868 = vmul.f32 1.0, %v3867
      %v3869 = vrcp.pop %v3788
      %v3870 = vmul.f32 1.0, %v3869
      %v3871 = vrcp.pop %v3789
      %v3872 = vmul.f32 1.0, %v3871
      %v3873 = vrcp.pop %v3790
      %v3874 = vmul.f32 1.0, %v3873
      %v3875 = vrcp.pop %v3791
      %v3876 = vmul.f32 1.0, %v3875
      %v3877 = vrcp.pop %v3792
      %v3878 = vmul.f32 1.0, %v3877
      %v3879 = vrcp.pop %v3793
      %v3880 = vmul.f32 1.0, %v3879
      %v3881 = vrcp.pop %v3794
      %v3882 = vmul.f32 1.0, %v3881
      %v3883 = vrcp.pop %v3795
      %v3884 = vmul.f32 1.0, %v3883
      %v3885 = vrcp.pop %v3796
      %v3886 = vmul.f32 1.0, %v3885
      %v3887 = vrcp.pop %v3797
      %v3888 = vmul.f32 1.0, %v3887
      %v3889 = vrcp.pop %v3798
      %v3890 = vmul.f32 1.0, %v3889
      %v3891 = vrcp.pop %v3799
      %v3892 = vmul.f32 1.0, %v3891
      %v3893 = vrcp.pop %v3800
      %v3894 = vmul.f32 1.0, %v3893
      %v3895 = vrcp.pop %v3801
      %v3896 = vmul.f32 1.0, %v3895
      %v3897 = vrcp.pop %v3802
      %v3898 = vmul.f32 1.0, %v3897
      %v3899 = vrcp.pop %v3803
      %v3900 = vmul.f32 1.0, %v3899
      %v3901 = vrcp.pop %v3804
      %v3902 = vmul.f32 1.0, %v3901
      %v3903 = vrcp.pop %v3805
      %v3904 = vmul.f32 1.0, %v3903
      %v3905 = vrcp.pop %v3806
      %v3906 = vmul.f32 1.0, %v3905
      %v3907 = vrcp.pop %v3807
      %v3908 = vmul.f32 1.0, %v3907
      %v3909 = vrcp.pop %v3808
      %v3910 = vmul.f32 1.0, %v3909
      %v3911 = vrcp.pop %v3809
      %v3912 = vmul.f32 1.0, %v3911
      %v3913 = vrcp.pop %v3810
      %v3914 = vmul.f32 1.0, %v3913
      %v3915 = vrcp.pop %v3811
      %v3916 = vmul.f32 1.0, %v3915
      %v3917 = vrcp.pop %v3812
      %v3918 = vmul.f32 1.0, %v3917
      %v3919 = vrcp.pop %v3813
      %v3920 = vmul.f32 1.0, %v3919
      %v3921 = vrcp.pop %v3814
      %v3922 = vmul.f32 1.0, %v3921
      %v3923 = vrcp.pop %v3815
      %v3924 = vmul.f32 1.0, %v3923
      %v3925 = vrcp.pop %v3816
      %v3926 = vmul.f32 1.0, %v3925
      %v3927 = vrcp.pop %v3817
      %v3928 = vmul.f32 1.0, %v3927
      %v3929 = vrcp.pop %v3818
      %v3930 = vmul.f32 1.0, %v3929
      %v3931 = vrcp.pop %v3819
      %v3932 = vmul.f32 1.0, %v3931
      %v3933 = vrcp.pop %v3820
      %v3934 = vmul.f32 1.0, %v3933
      %v3935 = vrcp.pop %v3821
      %v3936 = vmul.f32 1.0, %v3935
      %v3937 = vrcp.pop %v3822
      %v3938 = vmul.f32 1.0, %v3937
      %v3939 = vrcp.pop %v3823
      %v3940 = vmul.f32 1.0, %v3939
      %v3941 = vrcp.pop %v3824
      %v3942 = vmul.f32 1.0, %v3941
      %v3943 = vrcp.pop %v3825
      %v3944 = vmul.f32 1.0, %v3943
      %v3945 = vrcp.pop %v3826
      %v3946 = vmul.f32 1.0, %v3945
      %v3947 = vrcp.pop %v3827
      %v3948 = vmul.f32 1.0, %v3947
      %v3949 = vrcp.pop %v3828
      %v3950 = vmul.f32 1.0, %v3949
      %v3951 = vrcp.pop %v3829
      %v3952 = vmul.f32 1.0, %v3951
      %v3953 = vrcp.pop %v3830
      %v3954 = vmul.f32 1.0, %v3953
      %v3955 = vrcp.pop %v3831
      %v3956 = vmul.f32 1.0, %v3955
      %v3957 = vrcp.pop %v3832
      %v3958 = vmul.f32 1.0, %v3957
      %v3959 = vrcp.pop %v3833
      %v3960 = vmul.f32 1.0, %v3959
      %v3961 = vrcp.pop %v3834
      %v3962 = vmul.f32 1.0, %v3961
      %v3963 = vsub.f32 %v3836, 0.1
      %v3964 = vsub.f32 %v3838, 0.1
      %v3965 = vsub.f32 %v3840, 0.1
      %v3966 = vsub.f32 %v3842, 0.1
      %v3967 = vsub.f32 %v3844, 0.1
      %v3968 = vsub.f32 %v3846, 0.1
      %v3969 = vsub.f32 %v3848, 0.1
      %v3970 = vsub.f32 %v3850, 0.1
      %v3971 = vsub.f32 %v3852, 0.1
      %v3972 = vsub.f32 %v3854, 0.1
      %v3973 = vsub.f32 %v3856, 0.1
      %v3974 = vsub.f32 %v3858, 0.1
      %v3975 = vsub.f32 %v3860, 0.1
      %v3976 = vsub.f32 %v3862, 0.1
      %v3977 = vsub.f32 %v3864, 0.1
      %v3978 = vsub.f32 %v3866, 0.1
      %v3979 = vsub.f32 %v3868, 0.1
      %v3980 = vsub.f32 %v3870, 0.1
      %v3981 = vsub.f32 %v3872, 0.1
      %v3982 = vsub.f32 %v3874, 0.1
      %v3983 = vsub.f32 %v3876, 0.1
      %v3984 = vsub.f32 %v3878, 0.1
      %v3985 = vsub.f32 %v3880, 0.1
      %v3986 = vsub.f32 %v3882, 0.1
      %v3987 = vsub.f32 %v3884, 0.1
      %v3988 = vsub.f32 %v3886, 0.1
      %v3989 = vsub.f32 %v3888, 0.1
      %v3990 = vsub.f32 %v3890, 0.1
      %v3991 = vsub.f32 %v3892, 0.1
      %v3992 = vsub.f32 %v3894, 0.1
      %v3993 = vsub.f32 %v3896, 0.1
      %v3994 = vsub.f32 %v3898, 0.1
      %v3995 = vsub.f32 %v3900, 0.1
      %v3996 = vsub.f32 %v3902, 0.1
      %v3997 = vsub.f32 %v3904, 0.1
      %v3998 = vsub.f32 %v3906, 0.1
      %v3999 = vsub.f32 %v3908, 0.1
      %v4000 = vsub.f32 %v3910, 0.1
      %v4001 = vsub.f32 %v3912, 0.1
      %v4002 = vsub.f32 %v3914, 0.1
      %v4003 = vsub.f32 %v3916, 0.1
      %v4004 = vsub.f32 %v3918, 0.1
      %v4005 = vsub.f32 %v3920, 0.1
      %v4006 = vsub.f32 %v3922, 0.1
      %v4007 = vsub.f32 %v3924, 0.1
      %v4008 = vsub.f32 %v3926, 0.1
      %v4009 = vsub.f32 %v3928, 0.1
      %v4010 = vsub.f32 %v3930, 0.1
      %v4011 = vsub.f32 %v3932, 0.1
      %v4012 = vsub.f32 %v3934, 0.1
      %v4013 = vsub.f32 %v3936, 0.1
      %v4014 = vsub.f32 %v3938, 0.1
      %v4015 = vsub.f32 %v3940, 0.1
      %v4016 = vsub.f32 %v3942, 0.1
      %v4017 = vsub.f32 %v3944, 0.1
      %v4018 = vsub.f32 %v3946, 0.1
      %v4019 = vsub.f32 %v3948, 0.1
      %v4020 = vsub.f32 %v3950, 0.1
      %v4021 = vsub.f32 %v3952, 0.1
      %v4022 = vsub.f32 %v3954, 0.1
      %v4023 = vsub.f32 %v3956, 0.1
      %v4024 = vsub.f32 %v3958, 0.1
      %v4025 = vsub.f32 %v3960, 0.1
      %v4026 = vsub.f32 %v3962, 0.1
      %v4027 = vrcp.pop 0.8
      %v4028 = vmul.f32 %v3963, %v4027
      %v4029 = vmul.f32 %v3964, %v4027
      %v4030 = vmul.f32 %v3965, %v4027
      %v4031 = vmul.f32 %v3966, %v4027
      %v4032 = vmul.f32 %v3967, %v4027
      %v4033 = vmul.f32 %v3968, %v4027
      %v4034 = vmul.f32 %v3969, %v4027
      %v4035 = vmul.f32 %v3970, %v4027
      %v4036 = vmul.f32 %v3971, %v4027
      %v4037 = vmul.f32 %v3972, %v4027
      %v4038 = vmul.f32 %v3973, %v4027
      %v4039 = vmul.f32 %v3974, %v4027
      %v4040 = vmul.f32 %v3975, %v4027
      %v4041 = vmul.f32 %v3976, %v4027
      %v4042 = vmul.f32 %v3977, %v4027
      %v4043 = vmul.f32 %v3978, %v4027
      %v4044 = vmul.f32 %v3979, %v4027
      %v4045 = vmul.f32 %v3980, %v4027
      %v4046 = vmul.f32 %v3981, %v4027
      %v4047 = vmul.f32 %v3982, %v4027
      %v4048 = vmul.f32 %v3983, %v4027
      %v4049 = vmul.f32 %v3984, %v4027
      %v4050 = vmul.f32 %v3985, %v4027
      %v4051 = vmul.f32 %v3986, %v4027
      %v4052 = vmul.f32 %v3987, %v4027
      %v4053 = vmul.f32 %v3988, %v4027
      %v4054 = vmul.f32 %v3989, %v4027
      %v4055 = vmul.f32 %v3990, %v4027
      %v4056 = vmul.f32 %v3991, %v4027
      %v4057 = vmul.f32 %v3992, %v4027
      %v4058 = vmul.f32 %v3993, %v4027
      %v4059 = vmul.f32 %v3994, %v4027
      %v4060 = vmul.f32 %v3995, %v4027
      %v4061 = vmul.f32 %v3996, %v4027
      %v4062 = vmul.f32 %v3997, %v4027
      %v4063 = vmul.f32 %v3998, %v4027
      %v4064 = vmul.f32 %v3999, %v4027
      %v4065 = vmul.f32 %v4000, %v4027
      %v4066 = vmul.f32 %v4001, %v4027
      %v4067 = vmul.f32 %v4002, %v4027
      %v4068 = vmul.f32 %v4003, %v4027
      %v4069 = vmul.f32 %v4004, %v4027
      %v4070 = vmul.f32 %v4005, %v4027
      %v4071 = vmul.f32 %v4006, %v4027
      %v4072 = vmul.f32 %v4007, %v4027
      %v4073 = vmul.f32 %v4008, %v4027
      %v4074 = vmul.f32 %v4009, %v4027
      %v4075 = vmul.f32 %v4010, %v4027
      %v4076 = vmul.f32 %v4011, %v4027
      %v4077 = vmul.f32 %v4012, %v4027
      %v4078 = vmul.f32 %v4013, %v4027
      %v4079 = vmul.f32 %v4014, %v4027
      %v4080 = vmul.f32 %v4015, %v4027
      %v4081 = vmul.f32 %v4016, %v4027
      %v4082 = vmul.f32 %v4017, %v4027
      %v4083 = vmul.f32 %v4018, %v4027
      %v4084 = vmul.f32 %v4019, %v4027
      %v4085 = vmul.f32 %v4020, %v4027
      %v4086 = vmul.f32 %v4021, %v4027
      %v4087 = vmul.f32 %v4022, %v4027
      %v4088 = vmul.f32 %v4023, %v4027
      %v4089 = vmul.f32 %v4024, %v4027
      %v4090 = vmul.f32 %v4025, %v4027
      %v4091 = vmul.f32 %v4026, %v4027
      %v4092 = vmax.f32 %v4028, 0.0
      %v4093 = vmax.f32 %v4029, 0.0
      %v4094 = vmax.f32 %v4030, 0.0
      %v4095 = vmax.f32 %v4031, 0.0
      %v4096 = vmax.f32 %v4032, 0.0
      %v4097 = vmax.f32 %v4033, 0.0
      %v4098 = vmax.f32 %v4034, 0.0
      %v4099 = vmax.f32 %v4035, 0.0
      %v4100 = vmax.f32 %v4036, 0.0
      %v4101 = vmax.f32 %v4037, 0.0
      %v4102 = vmax.f32 %v4038, 0.0
      %v4103 = vmax.f32 %v4039, 0.0
      %v4104 = vmax.f32 %v4040, 0.0
      %v4105 = vmax.f32 %v4041, 0.0
      %v4106 = vmax.f32 %v4042, 0.0
      %v4107 = vmax.f32 %v4043, 0.0
      %v4108 = vmax.f32 %v4044, 0.0
      %v4109 = vmax.f32 %v4045, 0.0
      %v4110 = vmax.f32 %v4046, 0.0
      %v4111 = vmax.f32 %v4047, 0.0
      %v4112 = vmax.f32 %v4048, 0.0
      %v4113 = vmax.f32 %v4049, 0.0
      %v4114 = vmax.f32 %v4050, 0.0
      %v4115 = vmax.f32 %v4051, 0.0
      %v4116 = vmax.f32 %v4052, 0.0
      %v4117 = vmax.f32 %v4053, 0.0
      %v4118 = vmax.f32 %v4054, 0.0
      %v4119 = vmax.f32 %v4055, 0.0
      %v4120 = vmax.f32 %v4056, 0.0
      %v4121 = vmax.f32 %v4057, 0.0
      %v4122 = vmax.f32 %v4058, 0.0
      %v4123 = vmax.f32 %v4059, 0.0
      %v4124 = vmax.f32 %v4060, 0.0
      %v4125 = vmax.f32 %v4061, 0.0
      %v4126 = vmax.f32 %v4062, 0.0
      %v4127 = vmax.f32 %v4063, 0.0
      %v4128 = vmax.f32 %v4064, 0.0
      %v4129 = vmax.f32 %v4065, 0.0
      %v4130 = vmax.f32 %v4066, 0.0
      %v4131 = vmax.f32 %v4067, 0.0
      %v4132 = vmax.f32 %v4068, 0.0
      %v4133 = vmax.f32 %v4069, 0.0
      %v4134 = vmax.f32 %v4070, 0.0
      %v4135 = vmax.f32 %v4071, 0.0
      %v4136 = vmax.f32 %v4072, 0.0
      %v4137 = vmax.f32 %v4073, 0.0
      %v4138 = vmax.f32 %v4074, 0.0
      %v4139 = vmax.f32 %v4075, 0.0
      %v4140 = vmax.f32 %v4076, 0.0
      %v4141 = vmax.f32 %v4077, 0.0
      %v4142 = vmax.f32 %v4078, 0.0
      %v4143 = vmax.f32 %v4079, 0.0
      %v4144 = vmax.f32 %v4080, 0.0
      %v4145 = vmax.f32 %v4081, 0.0
      %v4146 = vmax.f32 %v4082, 0.0
      %v4147 = vmax.f32 %v4083, 0.0
      %v4148 = vmax.f32 %v4084, 0.0
      %v4149 = vmax.f32 %v4085, 0.0
      %v4150 = vmax.f32 %v4086, 0.0
      %v4151 = vmax.f32 %v4087, 0.0
      %v4152 = vmax.f32 %v4088, 0.0
      %v4153 = vmax.f32 %v4089, 0.0
      %v4154 = vmax.f32 %v4090, 0.0
      %v4155 = vmax.f32 %v4091, 0.0
      %v4156 = vmin.f32 %v4092, 1.0
      %v4157 = vmin.f32 %v4093, 1.0
      %v4158 = vmin.f32 %v4094, 1.0
      %v4159 = vmin.f32 %v4095, 1.0
      %v4160 = vmin.f32 %v4096, 1.0
      %v4161 = vmin.f32 %v4097, 1.0
      %v4162 = vmin.f32 %v4098, 1.0
      %v4163 = vmin.f32 %v4099, 1.0
      %v4164 = vmin.f32 %v4100, 1.0
      %v4165 = vmin.f32 %v4101, 1.0
      %v4166 = vmin.f32 %v4102, 1.0
      %v4167 = vmin.f32 %v4103, 1.0
      %v4168 = vmin.f32 %v4104, 1.0
      %v4169 = vmin.f32 %v4105, 1.0
      %v4170 = vmin.f32 %v4106, 1.0
      %v4171 = vmin.f32 %v4107, 1.0
      %v4172 = vmin.f32 %v4108, 1.0
      %v4173 = vmin.f32 %v4109, 1.0
      %v4174 = vmin.f32 %v4110, 1.0
      %v4175 = vmin.f32 %v4111, 1.0
      %v4176 = vmin.f32 %v4112, 1.0
      %v4177 = vmin.f32 %v4113, 1.0
      %v4178 = vmin.f32 %v4114, 1.0
      %v4179 = vmin.f32 %v4115, 1.0
      %v4180 = vmin.f32 %v4116, 1.0
      %v4181 = vmin.f32 %v4117, 1.0
      %v4182 = vmin.f32 %v4118, 1.0
      %v4183 = vmin.f32 %v4119, 1.0
      %v4184 = vmin.f32 %v4120, 1.0
      %v4185 = vmin.f32 %v4121, 1.0
      %v4186 = vmin.f32 %v4122, 1.0
      %v4187 = vmin.f32 %v4123, 1.0
      %v4188 = vmin.f32 %v4124, 1.0
      %v4189 = vmin.f32 %v4125, 1.0
      %v4190 = vmin.f32 %v4126, 1.0
      %v4191 = vmin.f32 %v4127, 1.0
      %v4192 = vmin.f32 %v4128, 1.0
      %v4193 = vmin.f32 %v4129, 1.0
      %v4194 = vmin.f32 %v4130, 1.0
      %v4195 = vmin.f32 %v4131, 1.0
      %v4196 = vmin.f32 %v4132, 1.0
      %v4197 = vmin.f32 %v4133, 1.0
      %v4198 = vmin.f32 %v4134, 1.0
      %v4199 = vmin.f32 %v4135, 1.0
      %v4200 = vmin.f32 %v4136, 1.0
      %v4201 = vmin.f32 %v4137, 1.0
      %v4202 = vmin.f32 %v4138, 1.0
      %v4203 = vmin.f32 %v4139, 1.0
      %v4204 = vmin.f32 %v4140, 1.0
      %v4205 = vmin.f32 %v4141, 1.0
      %v4206 = vmin.f32 %v4142, 1.0
      %v4207 = vmin.f32 %v4143, 1.0
      %v4208 = vmin.f32 %v4144, 1.0
      %v4209 = vmin.f32 %v4145, 1.0
      %v4210 = vmin.f32 %v4146, 1.0
      %v4211 = vmin.f32 %v4147, 1.0
      %v4212 = vmin.f32 %v4148, 1.0
      %v4213 = vmin.f32 %v4149, 1.0
      %v4214 = vmin.f32 %v4150, 1.0
      %v4215 = vmin.f32 %v4151, 1.0
      %v4216 = vmin.f32 %v4152, 1.0
      %v4217 = vmin.f32 %v4153, 1.0
      %v4218 = vmin.f32 %v4154, 1.0
      %v4219 = vmin.f32 %v4155, 1.0
      %4220 = vst [vmem:[%s231] sm:$0xff] %v4156
      %4221 = vst.msk [vmem:[%s231 + $0x8] sm:$0xff] %vm720, %v4157
      %4222 = vst [vmem:[%s231 + $0x10] sm:$0xff] %v4158
      %4223 = vst.msk [vmem:[%s231 + $0x18] sm:$0xff] %vm720, %v4159
      %4224 = vst [vmem:[%s231 + $0x20] sm:$0xff] %v4160
      %4225 = vst.msk [vmem:[%s231 + $0x28] sm:$0xff] %vm720, %v4161
      %4226 = vst [vmem:[%s231 + $0x30] sm:$0xff] %v4162
      %4227 = vst.msk [vmem:[%s231 + $0x38] sm:$0xff] %vm720, %v4163
      %4228 = vst [vmem:[%s231 + $0x40] sm:$0xff] %v4164
      %4229 = vst.msk [vmem:[%s231 + $0x48] sm:$0xff] %vm720, %v4165
      %4230 = vst [vmem:[%s231 + $0x50] sm:$0xff] %v4166
      %4231 = vst.msk [vmem:[%s231 + $0x58] sm:$0xff] %vm720, %v4167
      %4232 = vst [vmem:[%s231 + $0x60] sm:$0xff] %v4168
      %4233 = vst.msk [vmem:[%s231 + $0x68] sm:$0xff] %vm720, %v4169
      %4234 = vst [vmem:[%s231 + $0x70] sm:$0xff] %v4170
      %4235 = vst.msk [vmem:[%s231 + $0x78] sm:$0xff] %vm720, %v4171
      %4236 = vst [vmem:[%s231 + $0x80] sm:$0xff] %v4172
      %4237 = vst.msk [vmem:[%s231 + $0x88] sm:$0xff] %vm720, %v4173
      %4238 = vst [vmem:[%s231 + $0x90] sm:$0xff] %v4174
      %4239 = vst.msk [vmem:[%s231 + $0x98] sm:$0xff] %vm720, %v4175
      %4240 = vst [vmem:[%s231 + $0xa0] sm:$0xff] %v4176
      %4241 = vst.msk [vmem:[%s231 + $0xa8] sm:$0xff] %vm720, %v4177
      %4242 = vst [vmem:[%s231 + $0xb0] sm:$0xff] %v4178
      %4243 = vst.msk [vmem:[%s231 + $0xb8] sm:$0xff] %vm720, %v4179
      %4244 = vst [vmem:[%s231 + $0xc0] sm:$0xff] %v4180
      %4245 = vst.msk [vmem:[%s231 + $0xc8] sm:$0xff] %vm720, %v4181
      %4246 = vst [vmem:[%s231 + $0xd0] sm:$0xff] %v4182
      %4247 = vst.msk [vmem:[%s231 + $0xd8] sm:$0xff] %vm720, %v4183
      %4248 = vst [vmem:[%s231 + $0xe0] sm:$0xff] %v4184
      %4249 = vst.msk [vmem:[%s231 + $0xe8] sm:$0xff] %vm720, %v4185
      %4250 = vst [vmem:[%s231 + $0xf0] sm:$0xff] %v4186
      %4251 = vst.msk [vmem:[%s231 + $0xf8] sm:$0xff] %vm720, %v4187
      %4252 = vst [vmem:[%s231 + $0x100] sm:$0xff] %v4188
      %4253 = vst.msk [vmem:[%s231 + $0x108] sm:$0xff] %vm720, %v4189
      %4254 = vst [vmem:[%s231 + $0x110] sm:$0xff] %v4190
      %4255 = vst.msk [vmem:[%s231 + $0x118] sm:$0xff] %vm720, %v4191
      %4256 = vst [vmem:[%s231 + $0x120] sm:$0xff] %v4192
      %4257 = vst.msk [vmem:[%s231 + $0x128] sm:$0xff] %vm720, %v4193
      %4258 = vst [vmem:[%s231 + $0x130] sm:$0xff] %v4194
      %4259 = vst.msk [vmem:[%s231 + $0x138] sm:$0xff] %vm720, %v4195
      %4260 = vst [vmem:[%s231 + $0x140] sm:$0xff] %v4196
      %4261 = vst.msk [vmem:[%s231 + $0x148] sm:$0xff] %vm720, %v4197
      %4262 = vst [vmem:[%s231 + $0x150] sm:$0xff] %v4198
      %4263 = vst.msk [vmem:[%s231 + $0x158] sm:$0xff] %vm720, %v4199
      %4264 = vst [vmem:[%s231 + $0x160] sm:$0xff] %v4200
      %4265 = vst.msk [vmem:[%s231 + $0x168] sm:$0xff] %vm720, %v4201
      %4266 = vst [vmem:[%s231 + $0x170] sm:$0xff] %v4202
      %4267 = vst.msk [vmem:[%s231 + $0x178] sm:$0xff] %vm720, %v4203
      %4268 = vst [vmem:[%s231 + $0x180] sm:$0xff] %v4204
      %4269 = vst.msk [vmem:[%s231 + $0x188] sm:$0xff] %vm720, %v4205
      %4270 = vst [vmem:[%s231 + $0x190] sm:$0xff] %v4206
      %4271 = vst.msk [vmem:[%s231 + $0x198] sm:$0xff] %vm720, %v4207
      %4272 = vst [vmem:[%s231 + $0x1a0] sm:$0xff] %v4208
      %4273 = vst.msk [vmem:[%s231 + $0x1a8] sm:$0xff] %vm720, %v4209
      %4274 = vst [vmem:[%s231 + $0x1b0] sm:$0xff] %v4210
      %4275 = vst.msk [vmem:[%s231 + $0x1b8] sm:$0xff] %vm720, %v4211
      %4276 = vst [vmem:[%s231 + $0x1c0] sm:$0xff] %v4212
      %4277 = vst.msk [vmem:[%s231 + $0x1c8] sm:$0xff] %vm720, %v4213
      %4278 = vst [vmem:[%s231 + $0x1d0] sm:$0xff] %v4214
      %4279 = vst.msk [vmem:[%s231 + $0x1d8] sm:$0xff] %vm720, %v4215
      %4280 = vst [vmem:[%s231 + $0x1e0] sm:$0xff] %v4216
      %4281 = vst.msk [vmem:[%s231 + $0x1e8] sm:$0xff] %vm720, %v4217
      %4282 = vst [vmem:[%s231 + $0x1f0] sm:$0xff] %v4218
      %4283 = vst.msk [vmem:[%s231 + $0x1f8] sm:$0xff] %vm720, %v4219
      %s4284 = smul.u32 32, %s16
      %p4285 = scmp.lt.s32.totalorder %s4284, 63
      %s4286 = scalar_select %p4285, %s4284, 63
      %s4287 = smul.addr %s4286, 2
      %s4288 = smul.addr %s4287, 8
      %s4289 = scalar_lea.vmem %s5, %s4288
      // Predicated region
      $region41: #{openai_discrete_vae_forward.1} parent=39 // pred_check
        %p4290 = pneg %p144
      $region42: #{openai_discrete_vae_forward.1} parent=39 // pred_check_branch
        %4292 = sbr.rel (%p4290) target = $region44
      $region43: #{openai_discrete_vae_forward.1} parent=39 // pred_region
        %s4293 = smul.u32 32, %s16
      $region44: #{openai_discrete_vae_forward.1} parent=39 // pred_fallthru
        _
    $region40: #{openai_discrete_vae_forward.1} parent=5 // pred_fallthru
      _
    %p4294 = scmp.le.s32.totalorder 2, %s11
    // Predicated region
    $region45: #{openai_discrete_vae_forward.1} parent=5 // pred_check
      %p4295 = pneg %p4294
    $region46: #{openai_discrete_vae_forward.1} parent=5 // pred_check_branch
      %4297 = sbr.rel (%p4295) target = $region48
    $region47: #{openai_discrete_vae_forward.1} parent=5 // pred_region
      %s4298 = ssub.s32 %s11, 2
      // Predicated region
      $region49: #{openai_discrete_vae_forward.1} parent=47 // pred_check
        %p4299 = pneg %p150
      $region50: #{openai_discrete_vae_forward.1} parent=47 // pred_check_branch
        %4301 = sbr.rel (%p4299) target = $region52
      $region51: #{openai_discrete_vae_forward.1} parent=47 // pred_region
        %s4302 = smul.u32 32, %s17
        %p4303 = scmp.lt.s32.totalorder %s4302, 63
        %s4304 = scalar_select %p4303, %s4302, 63
        %s4305 = smul.addr %s4304, 2
        %s4306 = smul.addr %s4305, 8
        %s4307 = scalar_lea.vmem %s5, %s4306
      $region52: #{openai_discrete_vae_forward.1} parent=47 // pred_fallthru
        _
    $region48: #{openai_discrete_vae_forward.1} parent=5 // pred_fallthru
      _
  $region6: #{openai_discrete_vae_forward.1} parent=0 // loop_footer
    %s15 = sadd.s32 1, %s11
  $region7: #{openai_discrete_vae_forward.1} parent=0 // loop_footer_branch
    %10 = sbr.rel target = $region3
  $region8: #{openai_discrete_vae_forward.1} parent=0 // loop_exit
    _

</llo_original>
